<compile_context>
chip_gen: v6e
topology: v6e:2x2x1
jax: 0.10.0
libtpu: 0.0.40
codegen_flags: <defaults>
</compile_context>

<pallas_src>
import functools

import jax
import jax.numpy as jnp
from jax.experimental import pallas as pl
from jax.experimental.pallas import tpu as pltpu


# ----------------------------------------------------------------------------
# Kernel
# ----------------------------------------------------------------------------
def _layernorm(x, gamma, beta, eps=1e-5):
    # PyTorch nn.LayerNorm: biased variance, eps inside sqrt.
    mean = jnp.mean(x, axis=-1, keepdims=True)
    var = jnp.mean((x - mean) ** 2, axis=-1, keepdims=True)
    return (x - mean) * jax.lax.rsqrt(var + eps) * gamma + beta


def part_att_kernel(x_ref, in_w_ref, in_b_ref,
                    wqkv_ref, bqkv_ref, wc_ref,
                    w1_ref, b1_ref, w2_ref, vec_ref,
                    o_ref, *, heads, dim, reduce, n_att_layers):
    dim_head = dim // heads                 # 32
    qk_head = dim_head // reduce            # 16
    qk_total = dim // reduce                # 64  (lane width of the Q / K blocks)

    # in_layer projection: bf16 x bf16 -> f32 accumulate on the MXU.
    x = (jnp.dot(x_ref[...].astype(jnp.bfloat16), in_w_ref[...],
                 preferred_element_type=jnp.float32) + in_b_ref[...])   # (L, dim) f32

    for layer in range(n_att_layers):       # static unroll (2 layers)
        bqkv = bqkv_ref[layer]               # (1, 2*qk_total + dim) f32
        b1 = b1_ref[layer]                   # (1, ffn) f32
        vec = vec_ref[layer]                 # (6, dim) f32: bc,g1,be1,b2,g2,be2
        bc, g1, be1, b2, g2, be2 = (vec[i:i + 1, :] for i in range(6))

        # Fused QKV projection: one lane-dense 2D matmul, bf16 weights direct
        # to the MXU.  Pack order is [all Q heads | all K heads | all V heads];
        # the attention scale is already folded into the Q weights/bias.
        qkv = (jnp.dot(x.astype(jnp.bfloat16), wqkv_ref[layer],
                       preferred_element_type=jnp.float32) + bqkv)       # (L, 256) f32

        # Per-head attention (tiny 16x16 tiles; f32 for accuracy).
        heads_out = []
        for h in range(heads):
            q_h = qkv[:, h * qk_head:(h + 1) * qk_head]                          # (L, qk)
            k_h = qkv[:, qk_total + h * qk_head: qk_total + (h + 1) * qk_head]   # (L, qk)
            v_h = qkv[:, 2 * qk_total + h * dim_head:
                         2 * qk_total + (h + 1) * dim_head]                      # (L, dh)

            logits = jnp.einsum('qd,kd->qk', q_h, k_h,
                                preferred_element_type=jnp.float32)              # (L, L)
            logits = logits - jnp.max(logits, axis=-1, keepdims=True)
            p = jnp.exp(logits)
            # approx reciprocal: rows sum to 1 only to ~1e-3 rel. error (EUP slot).
            p = p * pl.reciprocal(jnp.sum(p, axis=-1, keepdims=True), approx=True)
            heads_out.append(jnp.dot(p, v_h, preferred_element_type=jnp.float32))

        # Reconstruct the PyTorch concat layout in lanes (head-major) and apply
        # concat_lin as one full-K=dim matmul; + residual, LayerNorm.
        concat = jnp.concatenate(heads_out, axis=-1)                      # (L, dim)
        x = x + jnp.dot(concat.astype(jnp.bfloat16), wc_ref[layer],
                        preferred_element_type=jnp.float32) + bc
        x = _layernorm(x, g1, be1)

        # FFN (Linear -> ReLU -> Linear) + residual (dropout p=0.0 -> identity).
        h1 = jnp.maximum(jnp.dot(x.astype(jnp.bfloat16), w1_ref[layer],
                                 preferred_element_type=jnp.float32) + b1, 0.0)
        x = x + jnp.dot(h1.astype(jnp.bfloat16), w2_ref[layer],
                        preferred_element_type=jnp.float32) + b2
        x = _layernorm(x, g2, be2)

    o_ref[...] = x


# ----------------------------------------------------------------------------
# Wrapper
# ----------------------------------------------------------------------------
_VMEM = pl.BlockSpec(memory_space=pltpu.MemorySpace.VMEM)


def part_att_forward(x, packed, *, heads=4, reduce=2):
    L = x.shape[0]
    dim = packed["in_w"].shape[1]
    n_att = packed["wqkv"].shape[0]
    kern = functools.partial(part_att_kernel, heads=heads, dim=dim,
                             reduce=reduce, n_att_layers=n_att)
    args = (x, packed["in_w"], packed["in_b"],
            packed["wqkv"], packed["bqkv"], packed["wc"],
            packed["w1"], packed["b1"], packed["w2"], packed["vec"])
    return pl.pallas_call(
        kern,
        out_shape=jax.ShapeDtypeStruct((L, dim), jnp.float32),
        in_specs=[_VMEM] * len(args),
        out_specs=_VMEM,
    )(*args)


# ----------------------------------------------------------------------------
# Parameter construction / packing
# ----------------------------------------------------------------------------
def init_params(key, in_dim, out_dim, n_layers, heads=4, reduce=2, ffn_mul=2):
    def lin(k, fan_in, fan_out):
        kw, kb = jax.random.split(k)
        s = 1.0 / jnp.sqrt(jnp.float32(fan_in))
        w = jax.random.uniform(kw, (fan_in, fan_out), jnp.float32, -s, s)
        b = jax.random.uniform(kb, (fan_out,), jnp.float32, -s, s)
        return w, b

    keys = jax.random.split(key, 1 + (n_layers - 1))
    in_w, in_b = lin(keys[0], in_dim, out_dim)
    layers = []
    ffn_dim = ffn_mul * out_dim
    for i in range(n_layers - 1):
        ks = jax.random.split(keys[1 + i], 6)
        wq, bq = lin(ks[0], out_dim, out_dim // reduce)
        wk, bk = lin(ks[1], out_dim, out_dim // reduce)
        wv, bv = lin(ks[2], out_dim, out_dim)
        wc, bc = lin(ks[3], out_dim, out_dim)
        w1, b1 = lin(ks[4], out_dim, ffn_dim)
        w2, b2 = lin(ks[5], ffn_dim, out_dim)
        layers.append(dict(
            wq=wq, bq=bq, wk=wk, bk=bk, wv=wv, bv=bv, wc=wc, bc=bc,
            w1=w1, b1=b1, w2=w2, b2=b2,
            g1=jnp.ones((out_dim,), jnp.float32), be1=jnp.zeros((out_dim,), jnp.float32),
            g2=jnp.ones((out_dim,), jnp.float32), be2=jnp.zeros((out_dim,), jnp.float32),
        ))
    return dict(in_w=in_w, in_b=in_b, layers=layers)


def pack_params(params, *, heads=4, reduce=2, weight_dtype=jnp.bfloat16):
    """Stack per-layer weights on a leading layer axis.

    - Q/K/V weights packed as [all Q heads | all K heads | all V heads] along
      the output (lane) axis so the kernel can do ONE 2D matmul per layer and
      take lane-aligned static slices per head.
    - The attention scale (dim_head**-0.5) is folded into the Q weights/bias.
    - Big matrices cast to bf16 (fed directly to the MXU); biases / LayerNorm
      vectors stay f32.
    """
    dim = params["in_w"].shape[1]
    dim_head = dim // heads
    scale = dim_head ** (-0.5)              # PyTorch uses dim_head**-0.5 (NOT qk_head)
    wqkv, bqkv, wc, w1, b1, w2, vec = [], [], [], [], [], [], []
    for p in params["layers"]:
        wqkv.append(jnp.concatenate([p["wq"] * scale, p["wk"], p["wv"]], axis=1))
        bqkv.append(jnp.concatenate([p["bq"] * scale, p["bk"], p["bv"]], axis=0)[None, :])
        wc.append(p["wc"])                  # concat layout is head-major -> use as-is
        w1.append(p["w1"])
        b1.append(p["b1"][None, :])
        w2.append(p["w2"])
        vec.append(jnp.stack([p["bc"], p["g1"], p["be1"],
                              p["b2"], p["g2"], p["be2"]], axis=0))
    return dict(
        in_w=params["in_w"].astype(weight_dtype),
        in_b=params["in_b"][None, :],
        wqkv=jnp.stack(wqkv).astype(weight_dtype),
        bqkv=jnp.stack(bqkv),
        wc=jnp.stack(wc).astype(weight_dtype),
        w1=jnp.stack(w1).astype(weight_dtype),
        b1=jnp.stack(b1),
        w2=jnp.stack(w2).astype(weight_dtype),
        vec=jnp.stack(vec),
    )


# ----------------------------------------------------------------------------
# Pure-JAX reference (mirrors the PyTorch forward, f32 weights)
# ----------------------------------------------------------------------------
def part_att_reference(x, params, *, heads=4, reduce=2):
    dim = params["in_w"].shape[1]
    dim_head = dim // heads
    qk_head = dim_head // reduce
    scale = dim_head ** (-0.5)
    x = x @ params["in_w"] + params["in_b"]
    L = x.shape[0]
    for p in params["layers"]:
        q = (x @ p["wq"] + p["bq"]).reshape(L, heads, qk_head).transpose(1, 0, 2)
        k = (x @ p["wk"] + p["bk"]).reshape(L, heads, qk_head).transpose(1, 0, 2)
        v = (x @ p["wv"] + p["bv"]).reshape(L, heads, dim_head).transpose(1, 0, 2)
        att = jax.nn.softmax((q * scale) @ jnp.swapaxes(k, 1, 2), axis=-1)
        out = (att @ v).transpose(1, 0, 2).reshape(L, dim)
        x = x + out @ p["wc"] + p["bc"]
        x = _layernorm(x, p["g1"], p["be1"])
        h = jnp.maximum(x @ p["w1"] + p["b1"], 0.0)
        x = x + h @ p["w2"] + p["b2"]
        x = _layernorm(x, p["g2"], p["be2"])
    return x


# ----------------------------------------------------------------------------
if __name__ == "__main__":
    L, in_dim, out_dim, n_layers = 16, 32, 128, 3

    key = jax.random.PRNGKey(0)
    kx, kp = jax.random.split(key)
    x = jax.random.normal(kx, (L, in_dim), jnp.float32)
    params = init_params(kp, in_dim, out_dim, n_layers)
    packed = pack_params(params)

    out = jax.block_until_ready(part_att_forward(x, packed))
    assert out.shape == (L, out_dim) and out.dtype == jnp.float32
    assert bool(jnp.all(jnp.isfinite(out)))

    # loose tolerance: kernel uses bf16 weights/activations for the matmuls and
    # an approx softmax reciprocal; reference is full f32.
    ref = part_att_reference(x, params)
    max_diff = float(jnp.max(jnp.abs(out - ref)))
    assert max_diff < 0.25, f"kernel vs reference max diff too large: {max_diff}"

    print("KERNEL_OK")
</pallas_src>

<mosaic_0001>
module attributes {stable_mosaic.version = 11 : i64} {
  func.func @part_att_kernel(%arg0: memref<16x32xf32, #tpu.memory_space<vmem>>, %arg1: memref<32x128xbf16, #tpu.memory_space<vmem>>, %arg2: memref<1x128xf32, #tpu.memory_space<vmem>>, %arg3: memref<2x128x256xbf16, #tpu.memory_space<vmem>>, %arg4: memref<2x1x256xf32, #tpu.memory_space<vmem>>, %arg5: memref<2x128x128xbf16, #tpu.memory_space<vmem>>, %arg6: memref<2x128x256xbf16, #tpu.memory_space<vmem>>, %arg7: memref<2x1x256xf32, #tpu.memory_space<vmem>>, %arg8: memref<2x256x128xbf16, #tpu.memory_space<vmem>>, %arg9: memref<2x6x128xf32, #tpu.memory_space<vmem>>, %arg10: memref<16x128xf32, #tpu.memory_space<vmem>>) attributes {dimension_semantics = [], scalar_prefetch = 0 : i64, scratch_operands = 0 : i64, tpu.core_type = #tpu.core_type<tc>} {
    %c0 = arith.constant 0 : index
    %c0_0 = arith.constant 0 : index
    %0 = vector.load %arg0[%c0, %c0_0] : memref<16x32xf32, #tpu.memory_space<vmem>>, vector<16x32xf32>
    %1 = arith.truncf %0 : vector<16x32xf32> to vector<16x32xbf16>
    %c0_1 = arith.constant 0 : index
    %c0_2 = arith.constant 0 : index
    %2 = vector.load %arg1[%c0_1, %c0_2] : memref<32x128xbf16, #tpu.memory_space<vmem>>, vector<32x128xbf16>
    %cst = arith.constant dense<0.000000e+00> : vector<16x128xf32>
    %3 = tpu.matmul %1, %2, %cst {dimension_numbers = #tpu.dot_dimension_numbers<[1], [0], [0], [1], [0, 0, 1, 1], [], []>} : vector<16x32xbf16>, vector<32x128xbf16>, vector<16x128xf32> -> vector<16x128xf32>
    %c0_3 = arith.constant 0 : index
    %c0_4 = arith.constant 0 : index
    %4 = vector.load %arg2[%c0_3, %c0_4] : memref<1x128xf32, #tpu.memory_space<vmem>>, vector<1x128xf32>
    %5 = vector.broadcast %4 : vector<1x128xf32> to vector<16x128xf32>
    %6 = arith.addf %3, %5 : vector<16x128xf32>
    %c0_5 = arith.constant 0 : index
    %c0_6 = arith.constant 0 : index
    %c0_7 = arith.constant 0 : index
    %7 = vector.load %arg4[%c0_5, %c0_6, %c0_7] : memref<2x1x256xf32, #tpu.memory_space<vmem>>, vector<1x1x256xf32>
    %8 = vector.shape_cast %7 : vector<1x1x256xf32> to vector<1x256xf32>
    %c0_8 = arith.constant 0 : index
    %c0_9 = arith.constant 0 : index
    %c0_10 = arith.constant 0 : index
    %9 = vector.load %arg7[%c0_8, %c0_9, %c0_10] : memref<2x1x256xf32, #tpu.memory_space<vmem>>, vector<1x1x256xf32>
    %10 = vector.shape_cast %9 : vector<1x1x256xf32> to vector<1x256xf32>
    %c0_11 = arith.constant 0 : index
    %c0_12 = arith.constant 0 : index
    %c0_13 = arith.constant 0 : index
    %11 = vector.load %arg9[%c0_11, %c0_12, %c0_13] : memref<2x6x128xf32, #tpu.memory_space<vmem>>, vector<1x6x128xf32>
    %12 = vector.shape_cast %11 : vector<1x6x128xf32> to vector<6x128xf32>
    %13 = vector.extract_strided_slice %12 {offsets = [0, 0], sizes = [1, 128], strides = [1, 1]} : vector<6x128xf32> to vector<1x128xf32>
    %14 = vector.extract_strided_slice %12 {offsets = [1, 0], sizes = [1, 128], strides = [1, 1]} : vector<6x128xf32> to vector<1x128xf32>
    %15 = vector.extract_strided_slice %12 {offsets = [2, 0], sizes = [1, 128], strides = [1, 1]} : vector<6x128xf32> to vector<1x128xf32>
    %16 = vector.extract_strided_slice %12 {offsets = [3, 0], sizes = [1, 128], strides = [1, 1]} : vector<6x128xf32> to vector<1x128xf32>
    %17 = vector.extract_strided_slice %12 {offsets = [4, 0], sizes = [1, 128], strides = [1, 1]} : vector<6x128xf32> to vector<1x128xf32>
    %18 = vector.extract_strided_slice %12 {offsets = [5, 0], sizes = [1, 128], strides = [1, 1]} : vector<6x128xf32> to vector<1x128xf32>
    %19 = arith.truncf %6 : vector<16x128xf32> to vector<16x128xbf16>
    %c0_14 = arith.constant 0 : index
    %c0_15 = arith.constant 0 : index
    %c0_16 = arith.constant 0 : index
    %20 = vector.load %arg3[%c0_14, %c0_15, %c0_16] : memref<2x128x256xbf16, #tpu.memory_space<vmem>>, vector<1x128x256xbf16>
    %21 = vector.shape_cast %20 : vector<1x128x256xbf16> to vector<128x256xbf16>
    %cst_17 = arith.constant dense<0.000000e+00> : vector<16x256xf32>
    %22 = tpu.matmul %19, %21, %cst_17 {dimension_numbers = #tpu.dot_dimension_numbers<[1], [0], [0], [1], [0, 0, 1, 1], [], []>} : vector<16x128xbf16>, vector<128x256xbf16>, vector<16x256xf32> -> vector<16x256xf32>
    %23 = vector.broadcast %8 : vector<1x256xf32> to vector<16x256xf32>
    %24 = arith.addf %22, %23 : vector<16x256xf32>
    %25 = vector.extract_strided_slice %24 {offsets = [0, 0], sizes = [16, 16], strides = [1, 1]} : vector<16x256xf32> to vector<16x16xf32>
    %26 = vector.extract_strided_slice %24 {offsets = [0, 64], sizes = [16, 16], strides = [1, 1]} : vector<16x256xf32> to vector<16x16xf32>
    %27 = vector.extract_strided_slice %24 {offsets = [0, 128], sizes = [16, 32], strides = [1, 1]} : vector<16x256xf32> to vector<16x32xf32>
    "tpu.trace_start"() <{level = 10 : i32, message = "qd,kd->qk"}> : () -> ()
    %cst_18 = arith.constant dense<0.000000e+00> : vector<16x16xf32>
    %28 = tpu.matmul %25, %26, %cst_18 {dimension_numbers = #tpu.dot_dimension_numbers<[1], [1], [0], [0], [0, 0, 1, 0], [], []>} : vector<16x16xf32>, vector<16x16xf32>, vector<16x16xf32> -> vector<16x16xf32>
    "tpu.trace_stop"() : () -> ()
    %cst_19 = arith.constant dense<0xFF800000> : vector<16xf32>
    %29 = vector.multi_reduction <maximumf>, %28, %cst_19 [1] : vector<16x16xf32> to vector<16xf32>
    %30 = vector.shape_cast %29 : vector<16xf32> to vector<16x1xf32>
    %31 = vector.broadcast %30 : vector<16x1xf32> to vector<16x16xf32>
    %32 = arith.subf %28, %31 : vector<16x16xf32>
    %33 = math.exp %32 : vector<16x16xf32>
    %cst_20 = arith.constant dense<0.000000e+00> : vector<16xf32>
    %34 = vector.multi_reduction <add>, %33, %cst_20 [1] : vector<16x16xf32> to vector<16xf32>
    %35 = vector.shape_cast %34 : vector<16xf32> to vector<16x1xf32>
    %36 = tpu.reciprocal %35 {approx = true} : vector<16x1xf32> -> vector<16x1xf32>
    %37 = vector.broadcast %36 : vector<16x1xf32> to vector<16x16xf32>
    %38 = arith.mulf %33, %37 : vector<16x16xf32>
    %cst_21 = arith.constant dense<0.000000e+00> : vector<16x32xf32>
    %39 = tpu.matmul %38, %27, %cst_21 {dimension_numbers = #tpu.dot_dimension_numbers<[1], [0], [0], [1], [0, 0, 1, 1], [], []>} : vector<16x16xf32>, vector<16x32xf32>, vector<16x32xf32> -> vector<16x32xf32>
    %40 = vector.extract_strided_slice %24 {offsets = [0, 16], sizes = [16, 16], strides = [1, 1]} : vector<16x256xf32> to vector<16x16xf32>
    %41 = vector.extract_strided_slice %24 {offsets = [0, 80], sizes = [16, 16], strides = [1, 1]} : vector<16x256xf32> to vector<16x16xf32>
    %42 = vector.extract_strided_slice %24 {offsets = [0, 160], sizes = [16, 32], strides = [1, 1]} : vector<16x256xf32> to vector<16x32xf32>
    "tpu.trace_start"() <{level = 10 : i32, message = "qd,kd->qk"}> : () -> ()
    %cst_22 = arith.constant dense<0.000000e+00> : vector<16x16xf32>
    %43 = tpu.matmul %40, %41, %cst_22 {dimension_numbers = #tpu.dot_dimension_numbers<[1], [1], [0], [0], [0, 0, 1, 0], [], []>} : vector<16x16xf32>, vector<16x16xf32>, vector<16x16xf32> -> vector<16x16xf32>
    "tpu.trace_stop"() : () -> ()
    %cst_23 = arith.constant dense<0xFF800000> : vector<16xf32>
    %44 = vector.multi_reduction <maximumf>, %43, %cst_23 [1] : vector<16x16xf32> to vector<16xf32>
    %45 = vector.shape_cast %44 : vector<16xf32> to vector<16x1xf32>
    %46 = vector.broadcast %45 : vector<16x1xf32> to vector<16x16xf32>
    %47 = arith.subf %43, %46 : vector<16x16xf32>
    %48 = math.exp %47 : vector<16x16xf32>
    %cst_24 = arith.constant dense<0.000000e+00> : vector<16xf32>
    %49 = vector.multi_reduction <add>, %48, %cst_24 [1] : vector<16x16xf32> to vector<16xf32>
    %50 = vector.shape_cast %49 : vector<16xf32> to vector<16x1xf32>
    %51 = tpu.reciprocal %50 {approx = true} : vector<16x1xf32> -> vector<16x1xf32>
    %52 = vector.broadcast %51 : vector<16x1xf32> to vector<16x16xf32>
    %53 = arith.mulf %48, %52 : vector<16x16xf32>
    %cst_25 = arith.constant dense<0.000000e+00> : vector<16x32xf32>
    %54 = tpu.matmul %53, %42, %cst_25 {dimension_numbers = #tpu.dot_dimension_numbers<[1], [0], [0], [1], [0, 0, 1, 1], [], []>} : vector<16x16xf32>, vector<16x32xf32>, vector<16x32xf32> -> vector<16x32xf32>
    %55 = vector.extract_strided_slice %24 {offsets = [0, 32], sizes = [16, 16], strides = [1, 1]} : vector<16x256xf32> to vector<16x16xf32>
    %56 = vector.extract_strided_slice %24 {offsets = [0, 96], sizes = [16, 16], strides = [1, 1]} : vector<16x256xf32> to vector<16x16xf32>
    %57 = vector.extract_strided_slice %24 {offsets = [0, 192], sizes = [16, 32], strides = [1, 1]} : vector<16x256xf32> to vector<16x32xf32>
    "tpu.trace_start"() <{level = 10 : i32, message = "qd,kd->qk"}> : () -> ()
    %cst_26 = arith.constant dense<0.000000e+00> : vector<16x16xf32>
    %58 = tpu.matmul %55, %56, %cst_26 {dimension_numbers = #tpu.dot_dimension_numbers<[1], [1], [0], [0], [0, 0, 1, 0], [], []>} : vector<16x16xf32>, vector<16x16xf32>, vector<16x16xf32> -> vector<16x16xf32>
    "tpu.trace_stop"() : () -> ()
    %cst_27 = arith.constant dense<0xFF800000> : vector<16xf32>
    %59 = vector.multi_reduction <maximumf>, %58, %cst_27 [1] : vector<16x16xf32> to vector<16xf32>
    %60 = vector.shape_cast %59 : vector<16xf32> to vector<16x1xf32>
    %61 = vector.broadcast %60 : vector<16x1xf32> to vector<16x16xf32>
    %62 = arith.subf %58, %61 : vector<16x16xf32>
    %63 = math.exp %62 : vector<16x16xf32>
    %cst_28 = arith.constant dense<0.000000e+00> : vector<16xf32>
    %64 = vector.multi_reduction <add>, %63, %cst_28 [1] : vector<16x16xf32> to vector<16xf32>
    %65 = vector.shape_cast %64 : vector<16xf32> to vector<16x1xf32>
    %66 = tpu.reciprocal %65 {approx = true} : vector<16x1xf32> -> vector<16x1xf32>
    %67 = vector.broadcast %66 : vector<16x1xf32> to vector<16x16xf32>
    %68 = arith.mulf %63, %67 : vector<16x16xf32>
    %cst_29 = arith.constant dense<0.000000e+00> : vector<16x32xf32>
    %69 = tpu.matmul %68, %57, %cst_29 {dimension_numbers = #tpu.dot_dimension_numbers<[1], [0], [0], [1], [0, 0, 1, 1], [], []>} : vector<16x16xf32>, vector<16x32xf32>, vector<16x32xf32> -> vector<16x32xf32>
    %70 = vector.extract_strided_slice %24 {offsets = [0, 48], sizes = [16, 16], strides = [1, 1]} : vector<16x256xf32> to vector<16x16xf32>
    %71 = vector.extract_strided_slice %24 {offsets = [0, 112], sizes = [16, 16], strides = [1, 1]} : vector<16x256xf32> to vector<16x16xf32>
    %72 = vector.extract_strided_slice %24 {offsets = [0, 224], sizes = [16, 32], strides = [1, 1]} : vector<16x256xf32> to vector<16x32xf32>
    "tpu.trace_start"() <{level = 10 : i32, message = "qd,kd->qk"}> : () -> ()
    %cst_30 = arith.constant dense<0.000000e+00> : vector<16x16xf32>
    %73 = tpu.matmul %70, %71, %cst_30 {dimension_numbers = #tpu.dot_dimension_numbers<[1], [1], [0], [0], [0, 0, 1, 0], [], []>} : vector<16x16xf32>, vector<16x16xf32>, vector<16x16xf32> -> vector<16x16xf32>
    "tpu.trace_stop"() : () -> ()
    %cst_31 = arith.constant dense<0xFF800000> : vector<16xf32>
    %74 = vector.multi_reduction <maximumf>, %73, %cst_31 [1] : vector<16x16xf32> to vector<16xf32>
    %75 = vector.shape_cast %74 : vector<16xf32> to vector<16x1xf32>
    %76 = vector.broadcast %75 : vector<16x1xf32> to vector<16x16xf32>
    %77 = arith.subf %73, %76 : vector<16x16xf32>
    %78 = math.exp %77 : vector<16x16xf32>
    %cst_32 = arith.constant dense<0.000000e+00> : vector<16xf32>
    %79 = vector.multi_reduction <add>, %78, %cst_32 [1] : vector<16x16xf32> to vector<16xf32>
    %80 = vector.shape_cast %79 : vector<16xf32> to vector<16x1xf32>
    %81 = tpu.reciprocal %80 {approx = true} : vector<16x1xf32> -> vector<16x1xf32>
    %82 = vector.broadcast %81 : vector<16x1xf32> to vector<16x16xf32>
    %83 = arith.mulf %78, %82 : vector<16x16xf32>
    %cst_33 = arith.constant dense<0.000000e+00> : vector<16x32xf32>
    %84 = tpu.matmul %83, %72, %cst_33 {dimension_numbers = #tpu.dot_dimension_numbers<[1], [0], [0], [1], [0, 0, 1, 1], [], []>} : vector<16x16xf32>, vector<16x32xf32>, vector<16x32xf32> -> vector<16x32xf32>
    %85 = tpu.concatenate %39, %54, %69, %84 in 1 : vector<16x32xf32>, vector<16x32xf32>, vector<16x32xf32>, vector<16x32xf32> -> vector<16x128xf32>
    %86 = arith.truncf %85 : vector<16x128xf32> to vector<16x128xbf16>
    %c0_34 = arith.constant 0 : index
    %c0_35 = arith.constant 0 : index
    %c0_36 = arith.constant 0 : index
    %87 = vector.load %arg5[%c0_34, %c0_35, %c0_36] : memref<2x128x128xbf16, #tpu.memory_space<vmem>>, vector<1x128x128xbf16>
    %88 = vector.shape_cast %87 : vector<1x128x128xbf16> to vector<128x128xbf16>
    %cst_37 = arith.constant dense<0.000000e+00> : vector<16x128xf32>
    %89 = tpu.matmul %86, %88, %cst_37 {dimension_numbers = #tpu.dot_dimension_numbers<[1], [0], [0], [1], [0, 0, 1, 1], [], []>} : vector<16x128xbf16>, vector<128x128xbf16>, vector<16x128xf32> -> vector<16x128xf32>
    %90 = arith.addf %6, %89 : vector<16x128xf32>
    %91 = vector.broadcast %13 : vector<1x128xf32> to vector<16x128xf32>
    %92 = arith.addf %90, %91 : vector<16x128xf32>
    %cst_38 = arith.constant dense<0.000000e+00> : vector<16xf32>
    %93 = vector.multi_reduction <add>, %92, %cst_38 [1] : vector<16x128xf32> to vector<16xf32>
    %94 = vector.shape_cast %93 : vector<16xf32> to vector<16x1xf32>
    %cst_39 = arith.constant 1.280000e+02 : f32
    %95 = vector.broadcast %cst_39 : f32 to vector<16x1xf32>
    %96 = arith.divf %94, %95 : vector<16x1xf32>
    %97 = vector.broadcast %96 : vector<16x1xf32> to vector<16x128xf32>
    %98 = arith.subf %92, %97 : vector<16x128xf32>
    %99 = arith.mulf %98, %98 : vector<16x128xf32>
    %cst_40 = arith.constant dense<0.000000e+00> : vector<16xf32>
    %100 = vector.multi_reduction <add>, %99, %cst_40 [1] : vector<16x128xf32> to vector<16xf32>
    %101 = vector.shape_cast %100 : vector<16xf32> to vector<16x1xf32>
    %cst_41 = arith.constant 1.280000e+02 : f32
    %102 = vector.broadcast %cst_41 : f32 to vector<16x1xf32>
    %103 = arith.divf %101, %102 : vector<16x1xf32>
    %104 = vector.broadcast %96 : vector<16x1xf32> to vector<16x128xf32>
    %105 = arith.subf %92, %104 : vector<16x128xf32>
    %cst_42 = arith.constant 9.99999974E-6 : f32
    %106 = vector.broadcast %cst_42 : f32 to vector<16x1xf32>
    %107 = arith.addf %103, %106 : vector<16x1xf32>
    %108 = math.rsqrt %107 : vector<16x1xf32>
    %109 = vector.broadcast %108 : vector<16x1xf32> to vector<16x128xf32>
    %110 = arith.mulf %105, %109 : vector<16x128xf32>
    %111 = vector.broadcast %14 : vector<1x128xf32> to vector<16x128xf32>
    %112 = arith.mulf %110, %111 : vector<16x128xf32>
    %113 = vector.broadcast %15 : vector<1x128xf32> to vector<16x128xf32>
    %114 = arith.addf %112, %113 : vector<16x128xf32>
    %115 = arith.truncf %114 : vector<16x128xf32> to vector<16x128xbf16>
    %c0_43 = arith.constant 0 : index
    %c0_44 = arith.constant 0 : index
    %c0_45 = arith.constant 0 : index
    %116 = vector.load %arg6[%c0_43, %c0_44, %c0_45] : memref<2x128x256xbf16, #tpu.memory_space<vmem>>, vector<1x128x256xbf16>
    %117 = vector.shape_cast %116 : vector<1x128x256xbf16> to vector<128x256xbf16>
    %cst_46 = arith.constant dense<0.000000e+00> : vector<16x256xf32>
    %118 = tpu.matmul %115, %117, %cst_46 {dimension_numbers = #tpu.dot_dimension_numbers<[1], [0], [0], [1], [0, 0, 1, 1], [], []>} : vector<16x128xbf16>, vector<128x256xbf16>, vector<16x256xf32> -> vector<16x256xf32>
    %119 = vector.broadcast %10 : vector<1x256xf32> to vector<16x256xf32>
    %120 = arith.addf %118, %119 : vector<16x256xf32>
    %cst_47 = arith.constant 0.000000e+00 : f32
    %121 = vector.broadcast %cst_47 : f32 to vector<16x256xf32>
    %122 = arith.maximumf %120, %121 : vector<16x256xf32>
    %123 = arith.truncf %122 : vector<16x256xf32> to vector<16x256xbf16>
    %c0_48 = arith.constant 0 : index
    %c0_49 = arith.constant 0 : index
    %c0_50 = arith.constant 0 : index
    %124 = vector.load %arg8[%c0_48, %c0_49, %c0_50] : memref<2x256x128xbf16, #tpu.memory_space<vmem>>, vector<1x256x128xbf16>
    %125 = vector.shape_cast %124 : vector<1x256x128xbf16> to vector<256x128xbf16>
    %cst_51 = arith.constant dense<0.000000e+00> : vector<16x128xf32>
    %126 = tpu.matmul %123, %125, %cst_51 {dimension_numbers = #tpu.dot_dimension_numbers<[1], [0], [0], [1], [0, 0, 1, 1], [], []>} : vector<16x256xbf16>, vector<256x128xbf16>, vector<16x128xf32> -> vector<16x128xf32>
    %127 = arith.addf %114, %126 : vector<16x128xf32>
    %128 = vector.broadcast %16 : vector<1x128xf32> to vector<16x128xf32>
    %129 = arith.addf %127, %128 : vector<16x128xf32>
    %cst_52 = arith.constant dense<0.000000e+00> : vector<16xf32>
    %130 = vector.multi_reduction <add>, %129, %cst_52 [1] : vector<16x128xf32> to vector<16xf32>
    %131 = vector.shape_cast %130 : vector<16xf32> to vector<16x1xf32>
    %cst_53 = arith.constant 1.280000e+02 : f32
    %132 = vector.broadcast %cst_53 : f32 to vector<16x1xf32>
    %133 = arith.divf %131, %132 : vector<16x1xf32>
    %134 = vector.broadcast %133 : vector<16x1xf32> to vector<16x128xf32>
    %135 = arith.subf %129, %134 : vector<16x128xf32>
    %136 = arith.mulf %135, %135 : vector<16x128xf32>
    %cst_54 = arith.constant dense<0.000000e+00> : vector<16xf32>
    %137 = vector.multi_reduction <add>, %136, %cst_54 [1] : vector<16x128xf32> to vector<16xf32>
    %138 = vector.shape_cast %137 : vector<16xf32> to vector<16x1xf32>
    %cst_55 = arith.constant 1.280000e+02 : f32
    %139 = vector.broadcast %cst_55 : f32 to vector<16x1xf32>
    %140 = arith.divf %138, %139 : vector<16x1xf32>
    %141 = vector.broadcast %133 : vector<16x1xf32> to vector<16x128xf32>
    %142 = arith.subf %129, %141 : vector<16x128xf32>
    %cst_56 = arith.constant 9.99999974E-6 : f32
    %143 = vector.broadcast %cst_56 : f32 to vector<16x1xf32>
    %144 = arith.addf %140, %143 : vector<16x1xf32>
    %145 = math.rsqrt %144 : vector<16x1xf32>
    %146 = vector.broadcast %145 : vector<16x1xf32> to vector<16x128xf32>
    %147 = arith.mulf %142, %146 : vector<16x128xf32>
    %148 = vector.broadcast %17 : vector<1x128xf32> to vector<16x128xf32>
    %149 = arith.mulf %147, %148 : vector<16x128xf32>
    %150 = vector.broadcast %18 : vector<1x128xf32> to vector<16x128xf32>
    %151 = arith.addf %149, %150 : vector<16x128xf32>
    %c1 = arith.constant 1 : index
    %c0_57 = arith.constant 0 : index
    %c0_58 = arith.constant 0 : index
    %152 = vector.load %arg4[%c1, %c0_57, %c0_58] : memref<2x1x256xf32, #tpu.memory_space<vmem>>, vector<1x1x256xf32>
    %153 = vector.shape_cast %152 : vector<1x1x256xf32> to vector<1x256xf32>
    %c1_59 = arith.constant 1 : index
    %c0_60 = arith.constant 0 : index
    %c0_61 = arith.constant 0 : index
    %154 = vector.load %arg7[%c1_59, %c0_60, %c0_61] : memref<2x1x256xf32, #tpu.memory_space<vmem>>, vector<1x1x256xf32>
    %155 = vector.shape_cast %154 : vector<1x1x256xf32> to vector<1x256xf32>
    %c1_62 = arith.constant 1 : index
    %c0_63 = arith.constant 0 : index
    %c0_64 = arith.constant 0 : index
    %156 = vector.load %arg9[%c1_62, %c0_63, %c0_64] : memref<2x6x128xf32, #tpu.memory_space<vmem>>, vector<1x6x128xf32>
    %157 = vector.shape_cast %156 : vector<1x6x128xf32> to vector<6x128xf32>
    %158 = vector.extract_strided_slice %157 {offsets = [0, 0], sizes = [1, 128], strides = [1, 1]} : vector<6x128xf32> to vector<1x128xf32>
    %159 = vector.extract_strided_slice %157 {offsets = [1, 0], sizes = [1, 128], strides = [1, 1]} : vector<6x128xf32> to vector<1x128xf32>
    %160 = vector.extract_strided_slice %157 {offsets = [2, 0], sizes = [1, 128], strides = [1, 1]} : vector<6x128xf32> to vector<1x128xf32>
    %161 = vector.extract_strided_slice %157 {offsets = [3, 0], sizes = [1, 128], strides = [1, 1]} : vector<6x128xf32> to vector<1x128xf32>
    %162 = vector.extract_strided_slice %157 {offsets = [4, 0], sizes = [1, 128], strides = [1, 1]} : vector<6x128xf32> to vector<1x128xf32>
    %163 = vector.extract_strided_slice %157 {offsets = [5, 0], sizes = [1, 128], strides = [1, 1]} : vector<6x128xf32> to vector<1x128xf32>
    %164 = arith.truncf %151 : vector<16x128xf32> to vector<16x128xbf16>
    %c1_65 = arith.constant 1 : index
    %c0_66 = arith.constant 0 : index
    %c0_67 = arith.constant 0 : index
    %165 = vector.load %arg3[%c1_65, %c0_66, %c0_67] : memref<2x128x256xbf16, #tpu.memory_space<vmem>>, vector<1x128x256xbf16>
    %166 = vector.shape_cast %165 : vector<1x128x256xbf16> to vector<128x256xbf16>
    %cst_68 = arith.constant dense<0.000000e+00> : vector<16x256xf32>
    %167 = tpu.matmul %164, %166, %cst_68 {dimension_numbers = #tpu.dot_dimension_numbers<[1], [0], [0], [1], [0, 0, 1, 1], [], []>} : vector<16x128xbf16>, vector<128x256xbf16>, vector<16x256xf32> -> vector<16x256xf32>
    %168 = vector.broadcast %153 : vector<1x256xf32> to vector<16x256xf32>
    %169 = arith.addf %167, %168 : vector<16x256xf32>
    %170 = vector.extract_strided_slice %169 {offsets = [0, 0], sizes = [16, 16], strides = [1, 1]} : vector<16x256xf32> to vector<16x16xf32>
    %171 = vector.extract_strided_slice %169 {offsets = [0, 64], sizes = [16, 16], strides = [1, 1]} : vector<16x256xf32> to vector<16x16xf32>
    %172 = vector.extract_strided_slice %169 {offsets = [0, 128], sizes = [16, 32], strides = [1, 1]} : vector<16x256xf32> to vector<16x32xf32>
    "tpu.trace_start"() <{level = 10 : i32, message = "qd,kd->qk"}> : () -> ()
    %cst_69 = arith.constant dense<0.000000e+00> : vector<16x16xf32>
    %173 = tpu.matmul %170, %171, %cst_69 {dimension_numbers = #tpu.dot_dimension_numbers<[1], [1], [0], [0], [0, 0, 1, 0], [], []>} : vector<16x16xf32>, vector<16x16xf32>, vector<16x16xf32> -> vector<16x16xf32>
    "tpu.trace_stop"() : () -> ()
    %cst_70 = arith.constant dense<0xFF800000> : vector<16xf32>
    %174 = vector.multi_reduction <maximumf>, %173, %cst_70 [1] : vector<16x16xf32> to vector<16xf32>
    %175 = vector.shape_cast %174 : vector<16xf32> to vector<16x1xf32>
    %176 = vector.broadcast %175 : vector<16x1xf32> to vector<16x16xf32>
    %177 = arith.subf %173, %176 : vector<16x16xf32>
    %178 = math.exp %177 : vector<16x16xf32>
    %cst_71 = arith.constant dense<0.000000e+00> : vector<16xf32>
    %179 = vector.multi_reduction <add>, %178, %cst_71 [1] : vector<16x16xf32> to vector<16xf32>
    %180 = vector.shape_cast %179 : vector<16xf32> to vector<16x1xf32>
    %181 = tpu.reciprocal %180 {approx = true} : vector<16x1xf32> -> vector<16x1xf32>
    %182 = vector.broadcast %181 : vector<16x1xf32> to vector<16x16xf32>
    %183 = arith.mulf %178, %182 : vector<16x16xf32>
    %cst_72 = arith.constant dense<0.000000e+00> : vector<16x32xf32>
    %184 = tpu.matmul %183, %172, %cst_72 {dimension_numbers = #tpu.dot_dimension_numbers<[1], [0], [0], [1], [0, 0, 1, 1], [], []>} : vector<16x16xf32>, vector<16x32xf32>, vector<16x32xf32> -> vector<16x32xf32>
    %185 = vector.extract_strided_slice %169 {offsets = [0, 16], sizes = [16, 16], strides = [1, 1]} : vector<16x256xf32> to vector<16x16xf32>
    %186 = vector.extract_strided_slice %169 {offsets = [0, 80], sizes = [16, 16], strides = [1, 1]} : vector<16x256xf32> to vector<16x16xf32>
    %187 = vector.extract_strided_slice %169 {offsets = [0, 160], sizes = [16, 32], strides = [1, 1]} : vector<16x256xf32> to vector<16x32xf32>
    "tpu.trace_start"() <{level = 10 : i32, message = "qd,kd->qk"}> : () -> ()
    %cst_73 = arith.constant dense<0.000000e+00> : vector<16x16xf32>
    %188 = tpu.matmul %185, %186, %cst_73 {dimension_numbers = #tpu.dot_dimension_numbers<[1], [1], [0], [0], [0, 0, 1, 0], [], []>} : vector<16x16xf32>, vector<16x16xf32>, vector<16x16xf32> -> vector<16x16xf32>
    "tpu.trace_stop"() : () -> ()
    %cst_74 = arith.constant dense<0xFF800000> : vector<16xf32>
    %189 = vector.multi_reduction <maximumf>, %188, %cst_74 [1] : vector<16x16xf32> to vector<16xf32>
    %190 = vector.shape_cast %189 : vector<16xf32> to vector<16x1xf32>
    %191 = vector.broadcast %190 : vector<16x1xf32> to vector<16x16xf32>
    %192 = arith.subf %188, %191 : vector<16x16xf32>
    %193 = math.exp %192 : vector<16x16xf32>
    %cst_75 = arith.constant dense<0.000000e+00> : vector<16xf32>
    %194 = vector.multi_reduction <add>, %193, %cst_75 [1] : vector<16x16xf32> to vector<16xf32>
    %195 = vector.shape_cast %194 : vector<16xf32> to vector<16x1xf32>
    %196 = tpu.reciprocal %195 {approx = true} : vector<16x1xf32> -> vector<16x1xf32>
    %197 = vector.broadcast %196 : vector<16x1xf32> to vector<16x16xf32>
    %198 = arith.mulf %193, %197 : vector<16x16xf32>
    %cst_76 = arith.constant dense<0.000000e+00> : vector<16x32xf32>
    %199 = tpu.matmul %198, %187, %cst_76 {dimension_numbers = #tpu.dot_dimension_numbers<[1], [0], [0], [1], [0, 0, 1, 1], [], []>} : vector<16x16xf32>, vector<16x32xf32>, vector<16x32xf32> -> vector<16x32xf32>
    %200 = vector.extract_strided_slice %169 {offsets = [0, 32], sizes = [16, 16], strides = [1, 1]} : vector<16x256xf32> to vector<16x16xf32>
    %201 = vector.extract_strided_slice %169 {offsets = [0, 96], sizes = [16, 16], strides = [1, 1]} : vector<16x256xf32> to vector<16x16xf32>
    %202 = vector.extract_strided_slice %169 {offsets = [0, 192], sizes = [16, 32], strides = [1, 1]} : vector<16x256xf32> to vector<16x32xf32>
    "tpu.trace_start"() <{level = 10 : i32, message = "qd,kd->qk"}> : () -> ()
    %cst_77 = arith.constant dense<0.000000e+00> : vector<16x16xf32>
    %203 = tpu.matmul %200, %201, %cst_77 {dimension_numbers = #tpu.dot_dimension_numbers<[1], [1], [0], [0], [0, 0, 1, 0], [], []>} : vector<16x16xf32>, vector<16x16xf32>, vector<16x16xf32> -> vector<16x16xf32>
    "tpu.trace_stop"() : () -> ()
    %cst_78 = arith.constant dense<0xFF800000> : vector<16xf32>
    %204 = vector.multi_reduction <maximumf>, %203, %cst_78 [1] : vector<16x16xf32> to vector<16xf32>
    %205 = vector.shape_cast %204 : vector<16xf32> to vector<16x1xf32>
    %206 = vector.broadcast %205 : vector<16x1xf32> to vector<16x16xf32>
    %207 = arith.subf %203, %206 : vector<16x16xf32>
    %208 = math.exp %207 : vector<16x16xf32>
    %cst_79 = arith.constant dense<0.000000e+00> : vector<16xf32>
    %209 = vector.multi_reduction <add>, %208, %cst_79 [1] : vector<16x16xf32> to vector<16xf32>
    %210 = vector.shape_cast %209 : vector<16xf32> to vector<16x1xf32>
    %211 = tpu.reciprocal %210 {approx = true} : vector<16x1xf32> -> vector<16x1xf32>
    %212 = vector.broadcast %211 : vector<16x1xf32> to vector<16x16xf32>
    %213 = arith.mulf %208, %212 : vector<16x16xf32>
    %cst_80 = arith.constant dense<0.000000e+00> : vector<16x32xf32>
    %214 = tpu.matmul %213, %202, %cst_80 {dimension_numbers = #tpu.dot_dimension_numbers<[1], [0], [0], [1], [0, 0, 1, 1], [], []>} : vector<16x16xf32>, vector<16x32xf32>, vector<16x32xf32> -> vector<16x32xf32>
    %215 = vector.extract_strided_slice %169 {offsets = [0, 48], sizes = [16, 16], strides = [1, 1]} : vector<16x256xf32> to vector<16x16xf32>
    %216 = vector.extract_strided_slice %169 {offsets = [0, 112], sizes = [16, 16], strides = [1, 1]} : vector<16x256xf32> to vector<16x16xf32>
    %217 = vector.extract_strided_slice %169 {offsets = [0, 224], sizes = [16, 32], strides = [1, 1]} : vector<16x256xf32> to vector<16x32xf32>
    "tpu.trace_start"() <{level = 10 : i32, message = "qd,kd->qk"}> : () -> ()
    %cst_81 = arith.constant dense<0.000000e+00> : vector<16x16xf32>
    %218 = tpu.matmul %215, %216, %cst_81 {dimension_numbers = #tpu.dot_dimension_numbers<[1], [1], [0], [0], [0, 0, 1, 0], [], []>} : vector<16x16xf32>, vector<16x16xf32>, vector<16x16xf32> -> vector<16x16xf32>
    "tpu.trace_stop"() : () -> ()
    %cst_82 = arith.constant dense<0xFF800000> : vector<16xf32>
    %219 = vector.multi_reduction <maximumf>, %218, %cst_82 [1] : vector<16x16xf32> to vector<16xf32>
    %220 = vector.shape_cast %219 : vector<16xf32> to vector<16x1xf32>
    %221 = vector.broadcast %220 : vector<16x1xf32> to vector<16x16xf32>
    %222 = arith.subf %218, %221 : vector<16x16xf32>
    %223 = math.exp %222 : vector<16x16xf32>
    %cst_83 = arith.constant dense<0.000000e+00> : vector<16xf32>
    %224 = vector.multi_reduction <add>, %223, %cst_83 [1] : vector<16x16xf32> to vector<16xf32>
    %225 = vector.shape_cast %224 : vector<16xf32> to vector<16x1xf32>
    %226 = tpu.reciprocal %225 {approx = true} : vector<16x1xf32> -> vector<16x1xf32>
    %227 = vector.broadcast %226 : vector<16x1xf32> to vector<16x16xf32>
    %228 = arith.mulf %223, %227 : vector<16x16xf32>
    %cst_84 = arith.constant dense<0.000000e+00> : vector<16x32xf32>
    %229 = tpu.matmul %228, %217, %cst_84 {dimension_numbers = #tpu.dot_dimension_numbers<[1], [0], [0], [1], [0, 0, 1, 1], [], []>} : vector<16x16xf32>, vector<16x32xf32>, vector<16x32xf32> -> vector<16x32xf32>
    %230 = tpu.concatenate %184, %199, %214, %229 in 1 : vector<16x32xf32>, vector<16x32xf32>, vector<16x32xf32>, vector<16x32xf32> -> vector<16x128xf32>
    %231 = arith.truncf %230 : vector<16x128xf32> to vector<16x128xbf16>
    %c1_85 = arith.constant 1 : index
    %c0_86 = arith.constant 0 : index
    %c0_87 = arith.constant 0 : index
    %232 = vector.load %arg5[%c1_85, %c0_86, %c0_87] : memref<2x128x128xbf16, #tpu.memory_space<vmem>>, vector<1x128x128xbf16>
    %233 = vector.shape_cast %232 : vector<1x128x128xbf16> to vector<128x128xbf16>
    %cst_88 = arith.constant dense<0.000000e+00> : vector<16x128xf32>
    %234 = tpu.matmul %231, %233, %cst_88 {dimension_numbers = #tpu.dot_dimension_numbers<[1], [0], [0], [1], [0, 0, 1, 1], [], []>} : vector<16x128xbf16>, vector<128x128xbf16>, vector<16x128xf32> -> vector<16x128xf32>
    %235 = arith.addf %151, %234 : vector<16x128xf32>
    %236 = vector.broadcast %158 : vector<1x128xf32> to vector<16x128xf32>
    %237 = arith.addf %235, %236 : vector<16x128xf32>
    %cst_89 = arith.constant dense<0.000000e+00> : vector<16xf32>
    %238 = vector.multi_reduction <add>, %237, %cst_89 [1] : vector<16x128xf32> to vector<16xf32>
    %239 = vector.shape_cast %238 : vector<16xf32> to vector<16x1xf32>
    %cst_90 = arith.constant 1.280000e+02 : f32
    %240 = vector.broadcast %cst_90 : f32 to vector<16x1xf32>
    %241 = arith.divf %239, %240 : vector<16x1xf32>
    %242 = vector.broadcast %241 : vector<16x1xf32> to vector<16x128xf32>
    %243 = arith.subf %237, %242 : vector<16x128xf32>
    %244 = arith.mulf %243, %243 : vector<16x128xf32>
    %cst_91 = arith.constant dense<0.000000e+00> : vector<16xf32>
    %245 = vector.multi_reduction <add>, %244, %cst_91 [1] : vector<16x128xf32> to vector<16xf32>
    %246 = vector.shape_cast %245 : vector<16xf32> to vector<16x1xf32>
    %cst_92 = arith.constant 1.280000e+02 : f32
    %247 = vector.broadcast %cst_92 : f32 to vector<16x1xf32>
    %248 = arith.divf %246, %247 : vector<16x1xf32>
    %249 = vector.broadcast %241 : vector<16x1xf32> to vector<16x128xf32>
    %250 = arith.subf %237, %249 : vector<16x128xf32>
    %cst_93 = arith.constant 9.99999974E-6 : f32
    %251 = vector.broadcast %cst_93 : f32 to vector<16x1xf32>
    %252 = arith.addf %248, %251 : vector<16x1xf32>
    %253 = math.rsqrt %252 : vector<16x1xf32>
    %254 = vector.broadcast %253 : vector<16x1xf32> to vector<16x128xf32>
    %255 = arith.mulf %250, %254 : vector<16x128xf32>
    %256 = vector.broadcast %159 : vector<1x128xf32> to vector<16x128xf32>
    %257 = arith.mulf %255, %256 : vector<16x128xf32>
    %258 = vector.broadcast %160 : vector<1x128xf32> to vector<16x128xf32>
    %259 = arith.addf %257, %258 : vector<16x128xf32>
    %260 = arith.truncf %259 : vector<16x128xf32> to vector<16x128xbf16>
    %c1_94 = arith.constant 1 : index
    %c0_95 = arith.constant 0 : index
    %c0_96 = arith.constant 0 : index
    %261 = vector.load %arg6[%c1_94, %c0_95, %c0_96] : memref<2x128x256xbf16, #tpu.memory_space<vmem>>, vector<1x128x256xbf16>
    %262 = vector.shape_cast %261 : vector<1x128x256xbf16> to vector<128x256xbf16>
    %cst_97 = arith.constant dense<0.000000e+00> : vector<16x256xf32>
    %263 = tpu.matmul %260, %262, %cst_97 {dimension_numbers = #tpu.dot_dimension_numbers<[1], [0], [0], [1], [0, 0, 1, 1], [], []>} : vector<16x128xbf16>, vector<128x256xbf16>, vector<16x256xf32> -> vector<16x256xf32>
    %264 = vector.broadcast %155 : vector<1x256xf32> to vector<16x256xf32>
    %265 = arith.addf %263, %264 : vector<16x256xf32>
    %cst_98 = arith.constant 0.000000e+00 : f32
    %266 = vector.broadcast %cst_98 : f32 to vector<16x256xf32>
    %267 = arith.maximumf %265, %266 : vector<16x256xf32>
    %268 = arith.truncf %267 : vector<16x256xf32> to vector<16x256xbf16>
    %c1_99 = arith.constant 1 : index
    %c0_100 = arith.constant 0 : index
    %c0_101 = arith.constant 0 : index
    %269 = vector.load %arg8[%c1_99, %c0_100, %c0_101] : memref<2x256x128xbf16, #tpu.memory_space<vmem>>, vector<1x256x128xbf16>
    %270 = vector.shape_cast %269 : vector<1x256x128xbf16> to vector<256x128xbf16>
    %cst_102 = arith.constant dense<0.000000e+00> : vector<16x128xf32>
    %271 = tpu.matmul %268, %270, %cst_102 {dimension_numbers = #tpu.dot_dimension_numbers<[1], [0], [0], [1], [0, 0, 1, 1], [], []>} : vector<16x256xbf16>, vector<256x128xbf16>, vector<16x128xf32> -> vector<16x128xf32>
    %272 = arith.addf %259, %271 : vector<16x128xf32>
    %273 = vector.broadcast %161 : vector<1x128xf32> to vector<16x128xf32>
    %274 = arith.addf %272, %273 : vector<16x128xf32>
    %cst_103 = arith.constant dense<0.000000e+00> : vector<16xf32>
    %275 = vector.multi_reduction <add>, %274, %cst_103 [1] : vector<16x128xf32> to vector<16xf32>
    %276 = vector.shape_cast %275 : vector<16xf32> to vector<16x1xf32>
    %cst_104 = arith.constant 1.280000e+02 : f32
    %277 = vector.broadcast %cst_104 : f32 to vector<16x1xf32>
    %278 = arith.divf %276, %277 : vector<16x1xf32>
    %279 = vector.broadcast %278 : vector<16x1xf32> to vector<16x128xf32>
    %280 = arith.subf %274, %279 : vector<16x128xf32>
    %281 = arith.mulf %280, %280 : vector<16x128xf32>
    %cst_105 = arith.constant dense<0.000000e+00> : vector<16xf32>
    %282 = vector.multi_reduction <add>, %281, %cst_105 [1] : vector<16x128xf32> to vector<16xf32>
    %283 = vector.shape_cast %282 : vector<16xf32> to vector<16x1xf32>
    %cst_106 = arith.constant 1.280000e+02 : f32
    %284 = vector.broadcast %cst_106 : f32 to vector<16x1xf32>
    %285 = arith.divf %283, %284 : vector<16x1xf32>
    %286 = vector.broadcast %278 : vector<16x1xf32> to vector<16x128xf32>
    %287 = arith.subf %274, %286 : vector<16x128xf32>
    %cst_107 = arith.constant 9.99999974E-6 : f32
    %288 = vector.broadcast %cst_107 : f32 to vector<16x1xf32>
    %289 = arith.addf %285, %288 : vector<16x1xf32>
    %290 = math.rsqrt %289 : vector<16x1xf32>
    %291 = vector.broadcast %290 : vector<16x1xf32> to vector<16x128xf32>
    %292 = arith.mulf %287, %291 : vector<16x128xf32>
    %293 = vector.broadcast %162 : vector<1x128xf32> to vector<16x128xf32>
    %294 = arith.mulf %292, %293 : vector<16x128xf32>
    %295 = vector.broadcast %163 : vector<1x128xf32> to vector<16x128xf32>
    %296 = arith.addf %294, %295 : vector<16x128xf32>
    %c0_108 = arith.constant 0 : index
    %c0_109 = arith.constant 0 : index
    %297 = vector.load %arg10[%c0_108, %c0_109] : memref<16x128xf32, #tpu.memory_space<vmem>>, vector<16x128xf32>
    tpu.vector_store %arg10[%c0_108, %c0_109], %296 {strides = array<i32>} : memref<16x128xf32, #tpu.memory_space<vmem>>, vector<16x128xf32>,
    return
  }
}

</mosaic_0001>

<llo_original>
// kernel: tpu_custom_call.1
$region0: #{tpu_custom_call.1}
  #allocation0 [shape = 'u32[]', space=smem, size = 0x4, offset = 0x4, fixed_abs, tag = 'smem constant byte address 0x4 - core index']
  #allocation1 [shape = 'u32[144,128]{1,0:T(1,128)}', space=vmem, size = 0x12000, scoped, tag = 'internal scratch']
  %s0 = inlined_call_operand.vmem [shape: f32[16,32], index: 0, kind: input, shape index: {}]
  %s1 = inlined_call_operand.hbm [shape: bf16[32,128], index: 1, kind: input, shape index: {}]
  %s2 = inlined_call_operand.vmem [shape: f32[1,128], index: 2, kind: input, shape index: {}]
  %s3 = inlined_call_operand.hbm [shape: bf16[2,128,256], index: 3, kind: input, shape index: {}]
  %s4 = inlined_call_operand.vmem [shape: f32[2,1,256], index: 4, kind: input, shape index: {}]
  %s5 = inlined_call_operand.hbm [shape: bf16[2,128,128], index: 5, kind: input, shape index: {}]
  %s6 = inlined_call_operand.hbm [shape: bf16[2,128,256], index: 6, kind: input, shape index: {}]
  %s7 = inlined_call_operand.vmem [shape: f32[2,1,256], index: 7, kind: input, shape index: {}]
  %s8 = inlined_call_operand.hbm [shape: bf16[2,256,128], index: 8, kind: input, shape index: {}]
  %s9 = inlined_call_operand.vmem [shape: f32[2,6,128], index: 9, kind: input, shape index: {}]
  %s10 = inlined_call_operand.hbm [shape: f32[16,128], index: 10, kind: output, shape index: {}]
  %s11 = sld [smem:[#allocation0]]
  $region70: #{tpu_custom_call.1} parent=0
    _
  %s13 = ssub.s32 1, %s11
  %s14 = scalar_select 0, %s13, %s11
  $region1: #{tpu_custom_call.1} parent=0
    #allocation2 [shape = 'u8[8192]{0}', space=vmem, size = 0x2000, scoped, tag = 'input window, operand 1, single buffered']
    #allocation3 [shape = 's32[1]{0}', space=sflag, size = 0x4, scoped, tag = 'scoped memory for tpu_custom_call.1']
    #allocation4 [shape = 's32[1]{0}', space=sflag, size = 0x4, scoped, tag = 'scoped memory for tpu_custom_call.1']
    #allocation5 [shape = 'u8[131072]{0}', space=vmem, size = 0x20000, scoped, tag = 'input window, operand 3, single buffered']
    #allocation6 [shape = 's32[1]{0}', space=sflag, size = 0x4, scoped, tag = 'scoped memory for tpu_custom_call.1']
    #allocation7 [shape = 'u8[65536]{0}', space=vmem, size = 0x10000, scoped, tag = 'input window, operand 5, single buffered']
    #allocation8 [shape = 'u8[131072]{0}', space=vmem, size = 0x20000, scoped, tag = 'input window, operand 6, single buffered']
    #allocation9 [shape = 's32[1]{0}', space=sflag, size = 0x4, scoped, tag = 'scoped memory for tpu_custom_call.1']
    #allocation10 [shape = 'u8[131072]{0}', space=vmem, size = 0x20000, scoped, tag = 'input window, operand 8, single buffered']
    #allocation11 [shape = 'u8[8192]{0}', space=vmem, size = 0x2000, scoped, tag = 'output window, operand 0, single buffered']
    %15 = vsyncpa [#allocation3], 0
    %16 = vsyncpa [#allocation6], 0
    %17 = vsyncpa [#allocation9], 0
    %18 = vsyncpa [#allocation4], 0
    // Predicated region
    $region2: #{tpu_custom_call.1} parent=1 // pred_check
      _
    $region3: #{tpu_custom_call.1} parent=1 // pred_check_branch
      %20 = sbr.rel (0) target = $region5
    $region4: #{tpu_custom_call.1} parent=1 // pred_region
      _
    $region5: #{tpu_custom_call.1} parent=1 // pred_fallthru
      _
    // Predicated region
    $region6: #{tpu_custom_call.1} parent=1 // pred_check
      _
    $region7: #{tpu_custom_call.1} parent=1 // pred_check_branch
      %22 = sbr.rel (0) target = $region9
    $region8: #{tpu_custom_call.1} parent=1 // pred_region
      %s24 = ssub.s32 256, 256
      %25 = vsyncadd [#allocation3], %s24
      %s26 = sshll.u32 [#allocation2], 4
      %s27 = int_to_ptr.vmem [resolvable:$true] %s26
      %32 = dma.hbm_to_vmem [thread:$0]  %s1, 256, %s27, [#allocation3], 64, 64, 4
    $region9: #{tpu_custom_call.1} parent=1 // pred_fallthru
      _
    // Predicated region
    $region10: #{tpu_custom_call.1} parent=1 // pred_check
      _
    $region11: #{tpu_custom_call.1} parent=1 // pred_check_branch
      %34 = sbr.rel (0) target = $region13
    $region12: #{tpu_custom_call.1} parent=1 // pred_region
      _
    $region13: #{tpu_custom_call.1} parent=1 // pred_fallthru
      _
    // Predicated region
    $region14: #{tpu_custom_call.1} parent=1 // pred_check
      _
    $region15: #{tpu_custom_call.1} parent=1 // pred_check_branch
      %36 = sbr.rel (0) target = $region17
    $region16: #{tpu_custom_call.1} parent=1 // pred_region
      %s38 = ssub.s32 4096, 4096
      %39 = vsyncadd [#allocation6], %s38
      %s40 = sshll.u32 [#allocation5], 4
      %s41 = int_to_ptr.vmem [resolvable:$true] %s40
      %46 = dma.hbm_to_vmem [thread:$0]  %s3, 4096, %s41, [#allocation6], 128, 128, 8
    $region17: #{tpu_custom_call.1} parent=1 // pred_fallthru
      _
    // Predicated region
    $region18: #{tpu_custom_call.1} parent=1 // pred_check
      _
    $region19: #{tpu_custom_call.1} parent=1 // pred_check_branch
      %48 = sbr.rel (0) target = $region21
    $region20: #{tpu_custom_call.1} parent=1 // pred_region
      _
    $region21: #{tpu_custom_call.1} parent=1 // pred_fallthru
      _
    // Predicated region
    $region22: #{tpu_custom_call.1} parent=1 // pred_check
      _
    $region23: #{tpu_custom_call.1} parent=1 // pred_check_branch
      %50 = sbr.rel (0) target = $region25
    $region24: #{tpu_custom_call.1} parent=1 // pred_region
      %s52 = ssub.s32 2048, 2048
      %53 = vsyncadd [#allocation6], %s52
      %s54 = sshll.u32 [#allocation7], 4
      %s55 = int_to_ptr.vmem [resolvable:$true] %s54
      %60 = dma.hbm_to_vmem [thread:$0]  %s5, 2048, %s55, [#allocation6], 64, 64, 4
    $region25: #{tpu_custom_call.1} parent=1 // pred_fallthru
      _
    // Predicated region
    $region26: #{tpu_custom_call.1} parent=1 // pred_check
      _
    $region27: #{tpu_custom_call.1} parent=1 // pred_check_branch
      %62 = sbr.rel (0) target = $region29
    $region28: #{tpu_custom_call.1} parent=1 // pred_region
      %s64 = ssub.s32 4096, 4096
      %65 = vsyncadd [#allocation9], %s64
      %s66 = sshll.u32 [#allocation8], 4
      %s67 = int_to_ptr.vmem [resolvable:$true] %s66
      %72 = dma.hbm_to_vmem [thread:$0]  %s6, 4096, %s67, [#allocation9], 128, 128, 8
    $region29: #{tpu_custom_call.1} parent=1 // pred_fallthru
      _
    // Predicated region
    $region30: #{tpu_custom_call.1} parent=1 // pred_check
      _
    $region31: #{tpu_custom_call.1} parent=1 // pred_check_branch
      %74 = sbr.rel (0) target = $region33
    $region32: #{tpu_custom_call.1} parent=1 // pred_region
      _
    $region33: #{tpu_custom_call.1} parent=1 // pred_fallthru
      _
    // Predicated region
    $region34: #{tpu_custom_call.1} parent=1 // pred_check
      _
    $region35: #{tpu_custom_call.1} parent=1 // pred_check_branch
      %76 = sbr.rel (0) target = $region37
    $region36: #{tpu_custom_call.1} parent=1 // pred_region
      %s78 = ssub.s32 4096, 4096
      %79 = vsyncadd [#allocation9], %s78
      %s80 = sshll.u32 [#allocation10], 4
      %s81 = int_to_ptr.vmem [resolvable:$true] %s80
      %86 = dma.hbm_to_vmem [thread:$0]  %s8, 4096, %s81, [#allocation9], 64, 64, 4
    $region37: #{tpu_custom_call.1} parent=1 // pred_fallthru
      _
    // Predicated region
    $region38: #{tpu_custom_call.1} parent=1 // pred_check
      _
    $region39: #{tpu_custom_call.1} parent=1 // pred_check_branch
      %88 = sbr.rel (0) target = $region41
    $region40: #{tpu_custom_call.1} parent=1 // pred_region
      _
    $region41: #{tpu_custom_call.1} parent=1 // pred_fallthru
      _
    // Predicated region
    $region42: #{tpu_custom_call.1} parent=1 // pred_check
      _
    $region43: #{tpu_custom_call.1} parent=1 // pred_check_branch
      %90 = sbr.rel (0) target = $region45
    $region44: #{tpu_custom_call.1} parent=1 // pred_region
      %91 = dma.done [#allocation3], 256
    $region45: #{tpu_custom_call.1} parent=1 // pred_fallthru
      _
    // Predicated region
    $region46: #{tpu_custom_call.1} parent=1 // pred_check
      _
    $region47: #{tpu_custom_call.1} parent=1 // pred_check_branch
      %93 = sbr.rel (0) target = $region49
    $region48: #{tpu_custom_call.1} parent=1 // pred_region
      %94 = dma.done [#allocation6], 4096
    $region49: #{tpu_custom_call.1} parent=1 // pred_fallthru
      _
    // Predicated region
    $region50: #{tpu_custom_call.1} parent=1 // pred_check
      _
    $region51: #{tpu_custom_call.1} parent=1 // pred_check_branch
      %96 = sbr.rel (0) target = $region53
    $region52: #{tpu_custom_call.1} parent=1 // pred_region
      %97 = dma.done [#allocation6], 2048
    $region53: #{tpu_custom_call.1} parent=1 // pred_fallthru
      _
    // Predicated region
    $region54: #{tpu_custom_call.1} parent=1 // pred_check
      _
    $region55: #{tpu_custom_call.1} parent=1 // pred_check_branch
      %99 = sbr.rel (0) target = $region57
    $region56: #{tpu_custom_call.1} parent=1 // pred_region
      %100 = dma.done [#allocation9], 4096
    $region57: #{tpu_custom_call.1} parent=1 // pred_fallthru
      _
    // Predicated region
    $region58: #{tpu_custom_call.1} parent=1 // pred_check
      _
    $region59: #{tpu_custom_call.1} parent=1 // pred_check_branch
      %102 = sbr.rel (0) target = $region61
    $region60: #{tpu_custom_call.1} parent=1 // pred_region
      %103 = dma.done [#allocation9], 4096
    $region61: #{tpu_custom_call.1} parent=1 // pred_fallthru
      _
    %v105 = vld [vmem:[%s0] sm:$0xff]
    %v106 = vld [vmem:[%s0 + $0x8] sm:$0xff]
    %v107 = vpack.c.bf16 %v106, %v105
    %v108 = vld [vmem:[#allocation2] sm:$0xf]
    %v109 = vld [vmem:[#allocation2 + $0x4] sm:$0xf]
    %v110 = vld [vmem:[#allocation2 + $0x8] sm:$0xf]
    %v111 = vld [vmem:[#allocation2 + $0xc] sm:$0xf]
    %v112 = vld [vmem:[%s2] sm:$0x1]
    %v114 = vlaneseq
    %v115 = vshrl.u32 %v114, 7
    %v116 = vsub.s32 0, %v115
    %v117 = vrot.slane %v112, %v116
    %v123 = vunpack.c.l.b16 %v108
    %v124 = vunpack.c.l.b16 %v109
    %v125 = vunpack.c.l.b16 %v110
    %v126 = vunpack.c.l.b16 %v111
    %v127 = vpack.c.b16 %v124, %v123
    %v128 = vpack.c.b16 %v126, %v125
    %vm131 = vcmask 261120
    %v133 = vsel %vm131, %v107, 0
    %135 = vmatprep.subr.bf16.mxu0 0
    %136 = vmatpush1.bf16.msra.mxu0 0
    %137 = vmatprep.subr.bf16.mxu0 0
    %138 = vmatpush1.bf16.msra.mxu0 0
    %139 = vmatprep.subr.bf16.mxu0 0
    %140 = vmatpush1.bf16.msra.mxu0 0
    %141 = vmatprep.subr.bf16.mxu0 0
    %142 = vmatpush1.bf16.msra.mxu0 0
    %143 = vmatprep.subr.bf16.mxu0 0
    %144 = vmatpush1.bf16.msra.mxu0 0
    %145 = vmatprep.subr.bf16.mxu0 0
    %146 = vmatpush1.bf16.msra.mxu0 0
    %147 = vmatprep.subr.bf16.mxu0 0
    %148 = vmatpush1.bf16.msra.mxu0 %v128
    %149 = vmatprep.subr.bf16.mxu0 0
    %150 = vmatpush1.bf16.msra.mxu0 %v127
    %151 = vmatprep.subr.bf16.mxu0 0
    %152 = vmatpush2.bf16.msra.mxu0 0
    %153 = vmatprep.subr.bf16.mxu0 0
    %154 = vmatpush2.bf16.msra.mxu0 0
    %155 = vmatprep.subr.bf16.mxu0 0
    %156 = vmatpush2.bf16.msra.mxu0 0
    %157 = vmatprep.subr.bf16.mxu0 0
    %158 = vmatpush2.bf16.msra.mxu0 0
    %159 = vmatprep.subr.bf16.mxu0 0
    %160 = vmatpush2.bf16.msra.mxu0 0
    %161 = vmatprep.subr.bf16.mxu0 0
    %162 = vmatpush2.bf16.msra.mxu0 0
    %163 = vmatprep.subr.bf16.mxu0 0
    %164 = vmatpush2.bf16.msra.mxu0 0
    %165 = vmatprep.subr.bf16.mxu0 0
    %166 = vmatpush2.bf16.msra.mxu0 0
    %167 = vmatprep.mubr.bf16.mxu0 0
    %168 = vmatmul.mubr.bf16.gmra.mxu0 %v133
    %v169 = vpop.f32.mrf.mxu0
    %v170 = vadd.f32 %v117, %v169
    %v171 = vpop.f32.mrf.mxu0
    %v172 = vpop.f32.mrf.mxu0
    %v173 = vadd.f32 %v117, %v172
    %v174 = vpop.f32.mrf.mxu0
    %175 = vdwg.mxu0
    %v176 = vld [vmem:[%s4] sm:$0x3]
    %v177 = vld [vmem:[%s7] sm:$0x3]
    %v178 = vld [vmem:[%s9] sm:$0x3f]
    %v179 = vpack.c.bf16 %v173, %v170
    %v180 = vld [vmem:[#allocation5] sm:$0xff]
    %v181 = vld [vmem:[#allocation5 + $0x8] sm:$0xff]
    %v182 = vld [vmem:[#allocation5 + $0x10] sm:$0xff]
    %v183 = vld [vmem:[#allocation5 + $0x18] sm:$0xff]
    %v184 = vld [vmem:[#allocation5 + $0x20] sm:$0xff]
    %v185 = vld [vmem:[#allocation5 + $0x28] sm:$0xff]
    %v186 = vld [vmem:[#allocation5 + $0x30] sm:$0xff]
    %v187 = vld [vmem:[#allocation5 + $0x38] sm:$0xff]
    %v188 = vld [vmem:[#allocation5 + $0x40] sm:$0xff]
    %v189 = vld [vmem:[#allocation5 + $0x48] sm:$0xff]
    %v190 = vld [vmem:[#allocation5 + $0x50] sm:$0xff]
    %v191 = vld [vmem:[#allocation5 + $0x58] sm:$0xff]
    %v192 = vld [vmem:[#allocation5 + $0x60] sm:$0xff]
    %v193 = vld [vmem:[#allocation5 + $0x68] sm:$0xff]
    %v194 = vld [vmem:[#allocation5 + $0x70] sm:$0xff]
    %v195 = vld [vmem:[#allocation5 + $0x78] sm:$0xff]
    %v197 = vlaneseq
    %v198 = vshrl.u32 %v197, 7
    %v199 = vsub.s32 0, %v198
    %v200 = vrot.slane %v176, %v199
    %v201 = vlaneseq
    %v202 = vshrl.u32 %v201, 7
    %v203 = vsub.s32 1, %v202
    %v204 = vrot.slane %v176, %v203
    %v223 = vunpack.c.l.b16 %v180
    %v224 = vunpack.c.h.b16 %v180
    %v225 = vunpack.c.l.b16 %v181
    %v226 = vunpack.c.h.b16 %v181
    %v227 = vunpack.c.l.b16 %v182
    %v228 = vunpack.c.h.b16 %v182
    %v229 = vunpack.c.l.b16 %v183
    %v230 = vunpack.c.h.b16 %v183
    %v231 = vunpack.c.l.b16 %v184
    %v232 = vunpack.c.h.b16 %v184
    %v233 = vunpack.c.l.b16 %v185
    %v234 = vunpack.c.h.b16 %v185
    %v235 = vunpack.c.l.b16 %v186
    %v236 = vunpack.c.h.b16 %v186
    %v237 = vunpack.c.l.b16 %v187
    %v238 = vunpack.c.h.b16 %v187
    %v239 = vunpack.c.l.b16 %v188
    %v240 = vunpack.c.h.b16 %v188
    %v241 = vunpack.c.l.b16 %v189
    %v242 = vunpack.c.h.b16 %v189
    %v243 = vunpack.c.l.b16 %v190
    %v244 = vunpack.c.h.b16 %v190
    %v245 = vunpack.c.l.b16 %v191
    %v246 = vunpack.c.h.b16 %v191
    %v247 = vunpack.c.l.b16 %v192
    %v248 = vunpack.c.h.b16 %v192
    %v249 = vunpack.c.l.b16 %v193
    %v250 = vunpack.c.h.b16 %v193
    %v251 = vunpack.c.l.b16 %v194
    %v252 = vunpack.c.h.b16 %v194
    %v253 = vunpack.c.l.b16 %v195
    %v254 = vunpack.c.h.b16 %v195
    %v255 = vpack.c.b16 %v225, %v223
    %v256 = vpack.c.b16 %v226, %v224
    %v257 = vpack.c.b16 %v229, %v227
    %v258 = vpack.c.b16 %v230, %v228
    %v259 = vpack.c.b16 %v233, %v231
    %v260 = vpack.c.b16 %v234, %v232
    %v261 = vpack.c.b16 %v237, %v235
    %v262 = vpack.c.b16 %v238, %v236
    %v263 = vpack.c.b16 %v241, %v239
    %v264 = vpack.c.b16 %v242, %v240
    %v265 = vpack.c.b16 %v245, %v243
    %v266 = vpack.c.b16 %v246, %v244
    %v267 = vpack.c.b16 %v249, %v247
    %v268 = vpack.c.b16 %v250, %v248
    %v269 = vpack.c.b16 %v253, %v251
    %v270 = vpack.c.b16 %v254, %v252
    %287 = vmatprep.subr.bf16.mxu0 %v270
    %288 = vmatpush1.bf16.msra.mxu0 %v269
    %289 = vmatprep.subr.bf16.mxu0 %v268
    %290 = vmatpush1.bf16.msra.mxu0 %v267
    %291 = vmatprep.subr.bf16.mxu0 %v266
    %292 = vmatpush1.bf16.msra.mxu0 %v265
    %293 = vmatprep.subr.bf16.mxu0 %v264
    %294 = vmatpush1.bf16.msra.mxu0 %v263
    %295 = vmatprep.subr.bf16.mxu0 %v262
    %296 = vmatpush1.bf16.msra.mxu0 %v261
    %297 = vmatprep.subr.bf16.mxu0 %v260
    %298 = vmatpush1.bf16.msra.mxu0 %v259
    %299 = vmatprep.subr.bf16.mxu0 %v258
    %300 = vmatpush1.bf16.msra.mxu0 %v257
    %301 = vmatprep.subr.bf16.mxu0 %v256
    %302 = vmatpush1.bf16.msra.mxu0 %v255
    %303 = vmatprep.subr.bf16.mxu0 0
    %304 = vmatpush2.bf16.msra.mxu0 0
    %305 = vmatprep.subr.bf16.mxu0 0
    %306 = vmatpush2.bf16.msra.mxu0 0
    %307 = vmatprep.subr.bf16.mxu0 0
    %308 = vmatpush2.bf16.msra.mxu0 0
    %309 = vmatprep.subr.bf16.mxu0 0
    %310 = vmatpush2.bf16.msra.mxu0 0
    %311 = vmatprep.subr.bf16.mxu0 0
    %312 = vmatpush2.bf16.msra.mxu0 0
    %313 = vmatprep.subr.bf16.mxu0 0
    %314 = vmatpush2.bf16.msra.mxu0 0
    %315 = vmatprep.subr.bf16.mxu0 0
    %316 = vmatpush2.bf16.msra.mxu0 0
    %317 = vmatprep.subr.bf16.mxu0 0
    %318 = vmatpush2.bf16.msra.mxu0 0
    %319 = vmatprep.mubr.bf16.mxu0 0
    %320 = vmatmul.mubr.bf16.gmra.mxu0 %v179
    %v321 = vpop.f32.mrf.mxu0
    %v322 = vadd.f32 %v200, %v321
    %v323 = vpop.f32.mrf.mxu0
    %v324 = vadd.f32 %v204, %v323
    %v325 = vpop.f32.mrf.mxu0
    %v326 = vadd.f32 %v200, %v325
    %v327 = vpop.f32.mrf.mxu0
    %v328 = vadd.f32 %v204, %v327
    %329 = vdwg.mxu0
    %332 = vrot.lane.b32.xlu0 %v322, 64
    %v333 = vpop.permute.xlu0 %332
    %334 = vrot.lane.b32.xlu0 %v326, 64
    %v335 = vpop.permute.xlu0 %334
    %vm336 = vcmask 130048
    %v337 = vsel %vm336, %v322, 0
    %v339 = vsel %vm336, %v326, 0
    %v341 = vsel %vm336, %v333, 0
    %v343 = vsel %vm336, %v335, 0
    %345 = vmatprep.subr.mxu0 0.0
    %346 = vmatpush1.xpose.msra.mxu0 0.0
    %347 = vmatprep.subr.mxu0 0.0
    %348 = vmatpush1.xpose.msra.mxu0 0.0
    %349 = vmatprep.subr.mxu0 0.0
    %350 = vmatpush1.xpose.msra.mxu0 0.0
    %351 = vmatprep.subr.mxu0 0.0
    %352 = vmatpush1.xpose.msra.mxu0 0.0
    %353 = vmatprep.subr.mxu0 0.0
    %354 = vmatpush1.xpose.msra.mxu0 0.0
    %355 = vmatprep.subr.mxu0 0.0
    %356 = vmatpush1.xpose.msra.mxu0 0.0
    %357 = vmatprep.subr.mxu0 0.0
    %358 = vmatpush1.xpose.msra.mxu0 0.0
    %359 = vmatprep.subr.mxu0 0.0
    %360 = vmatpush1.xpose.msra.mxu0 0.0
    %361 = vmatprep.subr.mxu0 0.0
    %362 = vmatpush1.xpose.msra.mxu0 0.0
    %363 = vmatprep.subr.mxu0 0.0
    %364 = vmatpush1.xpose.msra.mxu0 0.0
    %365 = vmatprep.subr.mxu0 0.0
    %366 = vmatpush1.xpose.msra.mxu0 0.0
    %367 = vmatprep.subr.mxu0 0.0
    %368 = vmatpush1.xpose.msra.mxu0 0.0
    %369 = vmatprep.subr.mxu0 0.0
    %370 = vmatpush1.xpose.msra.mxu0 0.0
    %371 = vmatprep.subr.mxu0 0.0
    %372 = vmatpush1.xpose.msra.mxu0 0.0
    %373 = vmatprep.subr.mxu0 0.0
    %374 = vmatpush1.xpose.msra.mxu0 %v343
    %375 = vmatprep.subr.mxu0 0.0
    %376 = vmatpush1.xpose.msra.mxu0 %v341
    %377 = vmatprep.subr.mxu0 0.0
    %378 = vmatpush2.xpose.msra.mxu0 0.0
    %379 = vmatprep.subr.mxu0 0.0
    %380 = vmatpush2.xpose.msra.mxu0 0.0
    %381 = vmatprep.subr.mxu0 0.0
    %382 = vmatpush2.xpose.msra.mxu0 0.0
    %383 = vmatprep.subr.mxu0 0.0
    %384 = vmatpush2.xpose.msra.mxu0 0.0
    %385 = vmatprep.subr.mxu0 0.0
    %386 = vmatpush2.xpose.msra.mxu0 0.0
    %387 = vmatprep.subr.mxu0 0.0
    %388 = vmatpush2.xpose.msra.mxu0 0.0
    %389 = vmatprep.subr.mxu0 0.0
    %390 = vmatpush2.xpose.msra.mxu0 0.0
    %391 = vmatprep.subr.mxu0 0.0
    %392 = vmatpush2.xpose.msra.mxu0 0.0
    %393 = vmatprep.subr.mxu0 0.0
    %394 = vmatpush2.xpose.msra.mxu0 0.0
    %395 = vmatprep.subr.mxu0 0.0
    %396 = vmatpush2.xpose.msra.mxu0 0.0
    %397 = vmatprep.subr.mxu0 0.0
    %398 = vmatpush2.xpose.msra.mxu0 0.0
    %399 = vmatprep.subr.mxu0 0.0
    %400 = vmatpush2.xpose.msra.mxu0 0.0
    %401 = vmatprep.subr.mxu0 0.0
    %402 = vmatpush2.xpose.msra.mxu0 0.0
    %403 = vmatprep.subr.mxu0 0.0
    %404 = vmatpush2.xpose.msra.mxu0 0.0
    %405 = vmatprep.subr.mxu0 0.0
    %406 = vmatpush2.xpose.msra.mxu0 0.0
    %407 = vmatprep.subr.mxu0 0.0
    %408 = vmatpush2.xpose.msra.mxu0 0.0
    %409 = vmatprep.mubr.f32.mxu0 0.0
    %410 = vmatmul.mubr.f32.gmra.mxu0 %v337
    %v411 = vpop.f32.mrf.mxu0
    %v412 = vadd.f32 0.0, %v411
    %v413 = vpop.f32.mrf.mxu0
    %414 = vmatprep.mubr.f32.mxu0 0.0
    %415 = vmatmul.mubr.f32.gmra.mxu0 %v339
    %v416 = vpop.f32.mrf.mxu0
    %v417 = vadd.f32 0.0, %v416
    %v418 = vpop.f32.mrf.mxu0
    %419 = vdwg.mxu0
    %v420 = vsel %vm336, %v412, -inf
    %421 = vmax.xlane.f32.xlu0 %v420
    %v422 = vpop.xlane.xlu0 %421
    %v423 = vsel %vm336, %v417, -inf
    %424 = vmax.xlane.f32.xlu0 %v423
    %v425 = vpop.xlane.xlu0 %424
    %v426 = vsub.f32 %v412, %v422
    %v427 = vsub.f32 %v417, %v425
    %v428 = vmul.f32 %v426, 1.442695
    %v429 = vpow.pop %v428
    %v430 = vmul.f32 %v427, 1.442695
    %v431 = vpow.pop %v430
    %v432 = vsel %vm336, %v429, 0.0
    %433 = vadd.xlane.f32.xlu0 %v432
    %v434 = vpop.xlane.xlu0 %433
    %v435 = vsel %vm336, %v431, 0.0
    %436 = vadd.xlane.f32.xlu0 %v435
    %v437 = vpop.xlane.xlu0 %436
    %v438 = vrcp.pop %v434
    %v439 = vrcp.pop %v437
    %v440 = vmul.f32 %v429, %v438
    %v441 = vmul.f32 %v431, %v439
    %v443 = vsel %vm336, %v440, 0
    %v446 = vsel %vm336, %v441, 0
    %448 = vmatprep.subr.mxu0 0.0
    %449 = vmatpush1.msra.mxu0 0.0
    %450 = vmatprep.subr.mxu0 0.0
    %451 = vmatpush1.msra.mxu0 0.0
    %452 = vmatprep.subr.mxu0 0.0
    %453 = vmatpush1.msra.mxu0 0.0
    %454 = vmatprep.subr.mxu0 0.0
    %455 = vmatpush1.msra.mxu0 0.0
    %456 = vmatprep.subr.mxu0 0.0
    %457 = vmatpush1.msra.mxu0 0.0
    %458 = vmatprep.subr.mxu0 0.0
    %459 = vmatpush1.msra.mxu0 0.0
    %460 = vmatprep.subr.mxu0 0.0
    %461 = vmatpush1.msra.mxu0 0.0
    %462 = vmatprep.subr.mxu0 0.0
    %463 = vmatpush1.msra.mxu0 0.0
    %464 = vmatprep.subr.mxu0 0.0
    %465 = vmatpush1.msra.mxu0 0.0
    %466 = vmatprep.subr.mxu0 0.0
    %467 = vmatpush1.msra.mxu0 0.0
    %468 = vmatprep.subr.mxu0 0.0
    %469 = vmatpush1.msra.mxu0 0.0
    %470 = vmatprep.subr.mxu0 0.0
    %471 = vmatpush1.msra.mxu0 0.0
    %472 = vmatprep.subr.mxu0 0.0
    %473 = vmatpush1.msra.mxu0 0.0
    %474 = vmatprep.subr.mxu0 0.0
    %475 = vmatpush1.msra.mxu0 0.0
    %476 = vmatprep.subr.mxu0 0.0
    %477 = vmatpush1.msra.mxu0 %v328
    %478 = vmatprep.subr.mxu0 0.0
    %479 = vmatpush1.msra.mxu0 %v324
    %480 = vmatprep.subr.mxu0 0.0
    %481 = vmatpush2.msra.mxu0 0.0
    %482 = vmatprep.subr.mxu0 0.0
    %483 = vmatpush2.msra.mxu0 0.0
    %484 = vmatprep.subr.mxu0 0.0
    %485 = vmatpush2.msra.mxu0 0.0
    %486 = vmatprep.subr.mxu0 0.0
    %487 = vmatpush2.msra.mxu0 0.0
    %488 = vmatprep.subr.mxu0 0.0
    %489 = vmatpush2.msra.mxu0 0.0
    %490 = vmatprep.subr.mxu0 0.0
    %491 = vmatpush2.msra.mxu0 0.0
    %492 = vmatprep.subr.mxu0 0.0
    %493 = vmatpush2.msra.mxu0 0.0
    %494 = vmatprep.subr.mxu0 0.0
    %495 = vmatpush2.msra.mxu0 0.0
    %496 = vmatprep.subr.mxu0 0.0
    %497 = vmatpush2.msra.mxu0 0.0
    %498 = vmatprep.subr.mxu0 0.0
    %499 = vmatpush2.msra.mxu0 0.0
    %500 = vmatprep.subr.mxu0 0.0
    %501 = vmatpush2.msra.mxu0 0.0
    %502 = vmatprep.subr.mxu0 0.0
    %503 = vmatpush2.msra.mxu0 0.0
    %504 = vmatprep.subr.mxu0 0.0
    %505 = vmatpush2.msra.mxu0 0.0
    %506 = vmatprep.subr.mxu0 0.0
    %507 = vmatpush2.msra.mxu0 0.0
    %508 = vmatprep.subr.mxu0 0.0
    %509 = vmatpush2.msra.mxu0 0.0
    %510 = vmatprep.subr.mxu0 0.0
    %511 = vmatpush2.msra.mxu0 0.0
    %512 = vmatprep.mubr.f32.mxu0 0.0
    %513 = vmatmul.mubr.f32.gmra.mxu0 %v443
    %v514 = vpop.f32.mrf.mxu0
    %v515 = vadd.f32 0.0, %v514
    %v516 = vpop.f32.mrf.mxu0
    %517 = vmatprep.mubr.f32.mxu0 0.0
    %518 = vmatmul.mubr.f32.gmra.mxu0 %v446
    %v519 = vpop.f32.mrf.mxu0
    %v520 = vadd.f32 0.0, %v519
    %v521 = vpop.f32.mrf.mxu0
    %522 = vdwg.mxu0
    %523 = vrot.lane.b32.xlu0 %v322, 112
    %v524 = vpop.permute.xlu0 %523
    %525 = vrot.lane.b32.xlu0 %v326, 112
    %v526 = vpop.permute.xlu0 %525
    %527 = vrot.lane.b32.xlu0 %v322, 48
    %v528 = vpop.permute.xlu0 %527
    %529 = vrot.lane.b32.xlu0 %v326, 48
    %v530 = vpop.permute.xlu0 %529
    %v531 = vsel %vm336, %v524, 0
    %v533 = vsel %vm336, %v526, 0
    %v535 = vsel %vm336, %v528, 0
    %v537 = vsel %vm336, %v530, 0
    %539 = vmatprep.subr.mxu0 0.0
    %540 = vmatpush1.xpose.msra.mxu0 0.0
    %541 = vmatprep.subr.mxu0 0.0
    %542 = vmatpush1.xpose.msra.mxu0 0.0
    %543 = vmatprep.subr.mxu0 0.0
    %544 = vmatpush1.xpose.msra.mxu0 0.0
    %545 = vmatprep.subr.mxu0 0.0
    %546 = vmatpush1.xpose.msra.mxu0 0.0
    %547 = vmatprep.subr.mxu0 0.0
    %548 = vmatpush1.xpose.msra.mxu0 0.0
    %549 = vmatprep.subr.mxu0 0.0
    %550 = vmatpush1.xpose.msra.mxu0 0.0
    %551 = vmatprep.subr.mxu0 0.0
    %552 = vmatpush1.xpose.msra.mxu0 0.0
    %553 = vmatprep.subr.mxu0 0.0
    %554 = vmatpush1.xpose.msra.mxu0 0.0
    %555 = vmatprep.subr.mxu0 0.0
    %556 = vmatpush1.xpose.msra.mxu0 0.0
    %557 = vmatprep.subr.mxu0 0.0
    %558 = vmatpush1.xpose.msra.mxu0 0.0
    %559 = vmatprep.subr.mxu0 0.0
    %560 = vmatpush1.xpose.msra.mxu0 0.0
    %561 = vmatprep.subr.mxu0 0.0
    %562 = vmatpush1.xpose.msra.mxu0 0.0
    %563 = vmatprep.subr.mxu0 0.0
    %564 = vmatpush1.xpose.msra.mxu0 0.0
    %565 = vmatprep.subr.mxu0 0.0
    %566 = vmatpush1.xpose.msra.mxu0 0.0
    %567 = vmatprep.subr.mxu0 0.0
    %568 = vmatpush1.xpose.msra.mxu0 %v537
    %569 = vmatprep.subr.mxu0 0.0
    %570 = vmatpush1.xpose.msra.mxu0 %v535
    %571 = vmatprep.subr.mxu0 0.0
    %572 = vmatpush2.xpose.msra.mxu0 0.0
    %573 = vmatprep.subr.mxu0 0.0
    %574 = vmatpush2.xpose.msra.mxu0 0.0
    %575 = vmatprep.subr.mxu0 0.0
    %576 = vmatpush2.xpose.msra.mxu0 0.0
    %577 = vmatprep.subr.mxu0 0.0
    %578 = vmatpush2.xpose.msra.mxu0 0.0
    %579 = vmatprep.subr.mxu0 0.0
    %580 = vmatpush2.xpose.msra.mxu0 0.0
    %581 = vmatprep.subr.mxu0 0.0
    %582 = vmatpush2.xpose.msra.mxu0 0.0
    %583 = vmatprep.subr.mxu0 0.0
    %584 = vmatpush2.xpose.msra.mxu0 0.0
    %585 = vmatprep.subr.mxu0 0.0
    %586 = vmatpush2.xpose.msra.mxu0 0.0
    %587 = vmatprep.subr.mxu0 0.0
    %588 = vmatpush2.xpose.msra.mxu0 0.0
    %589 = vmatprep.subr.mxu0 0.0
    %590 = vmatpush2.xpose.msra.mxu0 0.0
    %591 = vmatprep.subr.mxu0 0.0
    %592 = vmatpush2.xpose.msra.mxu0 0.0
    %593 = vmatprep.subr.mxu0 0.0
    %594 = vmatpush2.xpose.msra.mxu0 0.0
    %595 = vmatprep.subr.mxu0 0.0
    %596 = vmatpush2.xpose.msra.mxu0 0.0
    %597 = vmatprep.subr.mxu0 0.0
    %598 = vmatpush2.xpose.msra.mxu0 0.0
    %599 = vmatprep.subr.mxu0 0.0
    %600 = vmatpush2.xpose.msra.mxu0 0.0
    %601 = vmatprep.subr.mxu0 0.0
    %602 = vmatpush2.xpose.msra.mxu0 0.0
    %603 = vmatprep.mubr.f32.mxu0 0.0
    %604 = vmatmul.mubr.f32.gmra.mxu0 %v531
    %v605 = vpop.f32.mrf.mxu0
    %v606 = vadd.f32 0.0, %v605
    %v607 = vpop.f32.mrf.mxu0
    %608 = vmatprep.mubr.f32.mxu0 0.0
    %609 = vmatmul.mubr.f32.gmra.mxu0 %v533
    %v610 = vpop.f32.mrf.mxu0
    %v611 = vadd.f32 0.0, %v610
    %v612 = vpop.f32.mrf.mxu0
    %613 = vdwg.mxu0
    %v614 = vsel %vm336, %v606, -inf
    %615 = vmax.xlane.f32.xlu0 %v614
    %v616 = vpop.xlane.xlu0 %615
    %v617 = vsel %vm336, %v611, -inf
    %618 = vmax.xlane.f32.xlu0 %v617
    %v619 = vpop.xlane.xlu0 %618
    %v620 = vsub.f32 %v606, %v616
    %v621 = vsub.f32 %v611, %v619
    %v622 = vmul.f32 %v620, 1.442695
    %v623 = vpow.pop %v622
    %v624 = vmul.f32 %v621, 1.442695
    %v625 = vpow.pop %v624
    %v626 = vsel %vm336, %v623, 0.0
    %627 = vadd.xlane.f32.xlu0 %v626
    %v628 = vpop.xlane.xlu0 %627
    %v629 = vsel %vm336, %v625, 0.0
    %630 = vadd.xlane.f32.xlu0 %v629
    %v631 = vpop.xlane.xlu0 %630
    %v632 = vrcp.pop %v628
    %v633 = vrcp.pop %v631
    %v634 = vmul.f32 %v623, %v632
    %v635 = vmul.f32 %v625, %v633
    %638 = vrot.lane.b32.xlu0 %v324, 96
    %v639 = vpop.permute.xlu0 %638
    %640 = vrot.lane.b32.xlu0 %v328, 96
    %v641 = vpop.permute.xlu0 %640
    %v645 = vsel %vm336, %v634, 0
    %v648 = vsel %vm336, %v635, 0
    %650 = vmatprep.subr.mxu0 0.0
    %651 = vmatpush1.msra.mxu0 0.0
    %652 = vmatprep.subr.mxu0 0.0
    %653 = vmatpush1.msra.mxu0 0.0
    %654 = vmatprep.subr.mxu0 0.0
    %655 = vmatpush1.msra.mxu0 0.0
    %656 = vmatprep.subr.mxu0 0.0
    %657 = vmatpush1.msra.mxu0 0.0
    %658 = vmatprep.subr.mxu0 0.0
    %659 = vmatpush1.msra.mxu0 0.0
    %660 = vmatprep.subr.mxu0 0.0
    %661 = vmatpush1.msra.mxu0 0.0
    %662 = vmatprep.subr.mxu0 0.0
    %663 = vmatpush1.msra.mxu0 0.0
    %664 = vmatprep.subr.mxu0 0.0
    %665 = vmatpush1.msra.mxu0 0.0
    %666 = vmatprep.subr.mxu0 0.0
    %667 = vmatpush1.msra.mxu0 0.0
    %668 = vmatprep.subr.mxu0 0.0
    %669 = vmatpush1.msra.mxu0 0.0
    %670 = vmatprep.subr.mxu0 0.0
    %671 = vmatpush1.msra.mxu0 0.0
    %672 = vmatprep.subr.mxu0 0.0
    %673 = vmatpush1.msra.mxu0 0.0
    %674 = vmatprep.subr.mxu0 0.0
    %675 = vmatpush1.msra.mxu0 0.0
    %676 = vmatprep.subr.mxu0 0.0
    %677 = vmatpush1.msra.mxu0 0.0
    %678 = vmatprep.subr.mxu0 0.0
    %679 = vmatpush1.msra.mxu0 %v641
    %680 = vmatprep.subr.mxu0 0.0
    %681 = vmatpush1.msra.mxu0 %v639
    %682 = vmatprep.subr.mxu0 0.0
    %683 = vmatpush2.msra.mxu0 0.0
    %684 = vmatprep.subr.mxu0 0.0
    %685 = vmatpush2.msra.mxu0 0.0
    %686 = vmatprep.subr.mxu0 0.0
    %687 = vmatpush2.msra.mxu0 0.0
    %688 = vmatprep.subr.mxu0 0.0
    %689 = vmatpush2.msra.mxu0 0.0
    %690 = vmatprep.subr.mxu0 0.0
    %691 = vmatpush2.msra.mxu0 0.0
    %692 = vmatprep.subr.mxu0 0.0
    %693 = vmatpush2.msra.mxu0 0.0
    %694 = vmatprep.subr.mxu0 0.0
    %695 = vmatpush2.msra.mxu0 0.0
    %696 = vmatprep.subr.mxu0 0.0
    %697 = vmatpush2.msra.mxu0 0.0
    %698 = vmatprep.subr.mxu0 0.0
    %699 = vmatpush2.msra.mxu0 0.0
    %700 = vmatprep.subr.mxu0 0.0
    %701 = vmatpush2.msra.mxu0 0.0
    %702 = vmatprep.subr.mxu0 0.0
    %703 = vmatpush2.msra.mxu0 0.0
    %704 = vmatprep.subr.mxu0 0.0
    %705 = vmatpush2.msra.mxu0 0.0
    %706 = vmatprep.subr.mxu0 0.0
    %707 = vmatpush2.msra.mxu0 0.0
    %708 = vmatprep.subr.mxu0 0.0
    %709 = vmatpush2.msra.mxu0 0.0
    %710 = vmatprep.subr.mxu0 0.0
    %711 = vmatpush2.msra.mxu0 0.0
    %712 = vmatprep.subr.mxu0 0.0
    %713 = vmatpush2.msra.mxu0 0.0
    %714 = vmatprep.mubr.f32.mxu0 0.0
    %715 = vmatmul.mubr.f32.gmra.mxu0 %v645
    %v716 = vpop.f32.mrf.mxu0
    %v717 = vadd.f32 0.0, %v716
    %v718 = vpop.f32.mrf.mxu0
    %719 = vmatprep.mubr.f32.mxu0 0.0
    %720 = vmatmul.mubr.f32.gmra.mxu0 %v648
    %v721 = vpop.f32.mrf.mxu0
    %v722 = vadd.f32 0.0, %v721
    %v723 = vpop.f32.mrf.mxu0
    %724 = vdwg.mxu0
    %725 = vrot.lane.b32.xlu0 %v322, 96
    %v726 = vpop.permute.xlu0 %725
    %727 = vrot.lane.b32.xlu0 %v326, 96
    %v728 = vpop.permute.xlu0 %727
    %729 = vrot.lane.b32.xlu0 %v322, 32
    %v730 = vpop.permute.xlu0 %729
    %731 = vrot.lane.b32.xlu0 %v326, 32
    %v732 = vpop.permute.xlu0 %731
    %v733 = vsel %vm336, %v726, 0
    %v735 = vsel %vm336, %v728, 0
    %v737 = vsel %vm336, %v730, 0
    %v739 = vsel %vm336, %v732, 0
    %741 = vmatprep.subr.mxu0 0.0
    %742 = vmatpush1.xpose.msra.mxu0 0.0
    %743 = vmatprep.subr.mxu0 0.0
    %744 = vmatpush1.xpose.msra.mxu0 0.0
    %745 = vmatprep.subr.mxu0 0.0
    %746 = vmatpush1.xpose.msra.mxu0 0.0
    %747 = vmatprep.subr.mxu0 0.0
    %748 = vmatpush1.xpose.msra.mxu0 0.0
    %749 = vmatprep.subr.mxu0 0.0
    %750 = vmatpush1.xpose.msra.mxu0 0.0
    %751 = vmatprep.subr.mxu0 0.0
    %752 = vmatpush1.xpose.msra.mxu0 0.0
    %753 = vmatprep.subr.mxu0 0.0
    %754 = vmatpush1.xpose.msra.mxu0 0.0
    %755 = vmatprep.subr.mxu0 0.0
    %756 = vmatpush1.xpose.msra.mxu0 0.0
    %757 = vmatprep.subr.mxu0 0.0
    %758 = vmatpush1.xpose.msra.mxu0 0.0
    %759 = vmatprep.subr.mxu0 0.0
    %760 = vmatpush1.xpose.msra.mxu0 0.0
    %761 = vmatprep.subr.mxu0 0.0
    %762 = vmatpush1.xpose.msra.mxu0 0.0
    %763 = vmatprep.subr.mxu0 0.0
    %764 = vmatpush1.xpose.msra.mxu0 0.0
    %765 = vmatprep.subr.mxu0 0.0
    %766 = vmatpush1.xpose.msra.mxu0 0.0
    %767 = vmatprep.subr.mxu0 0.0
    %768 = vmatpush1.xpose.msra.mxu0 0.0
    %769 = vmatprep.subr.mxu0 0.0
    %770 = vmatpush1.xpose.msra.mxu0 %v739
    %771 = vmatprep.subr.mxu0 0.0
    %772 = vmatpush1.xpose.msra.mxu0 %v737
    %773 = vmatprep.subr.mxu0 0.0
    %774 = vmatpush2.xpose.msra.mxu0 0.0
    %775 = vmatprep.subr.mxu0 0.0
    %776 = vmatpush2.xpose.msra.mxu0 0.0
    %777 = vmatprep.subr.mxu0 0.0
    %778 = vmatpush2.xpose.msra.mxu0 0.0
    %779 = vmatprep.subr.mxu0 0.0
    %780 = vmatpush2.xpose.msra.mxu0 0.0
    %781 = vmatprep.subr.mxu0 0.0
    %782 = vmatpush2.xpose.msra.mxu0 0.0
    %783 = vmatprep.subr.mxu0 0.0
    %784 = vmatpush2.xpose.msra.mxu0 0.0
    %785 = vmatprep.subr.mxu0 0.0
    %786 = vmatpush2.xpose.msra.mxu0 0.0
    %787 = vmatprep.subr.mxu0 0.0
    %788 = vmatpush2.xpose.msra.mxu0 0.0
    %789 = vmatprep.subr.mxu0 0.0
    %790 = vmatpush2.xpose.msra.mxu0 0.0
    %791 = vmatprep.subr.mxu0 0.0
    %792 = vmatpush2.xpose.msra.mxu0 0.0
    %793 = vmatprep.subr.mxu0 0.0
    %794 = vmatpush2.xpose.msra.mxu0 0.0
    %795 = vmatprep.subr.mxu0 0.0
    %796 = vmatpush2.xpose.msra.mxu0 0.0
    %797 = vmatprep.subr.mxu0 0.0
    %798 = vmatpush2.xpose.msra.mxu0 0.0
    %799 = vmatprep.subr.mxu0 0.0
    %800 = vmatpush2.xpose.msra.mxu0 0.0
    %801 = vmatprep.subr.mxu0 0.0
    %802 = vmatpush2.xpose.msra.mxu0 0.0
    %803 = vmatprep.subr.mxu0 0.0
    %804 = vmatpush2.xpose.msra.mxu0 0.0
    %805 = vmatprep.mubr.f32.mxu0 0.0
    %806 = vmatmul.mubr.f32.gmra.mxu0 %v733
    %v807 = vpop.f32.mrf.mxu0
    %v808 = vadd.f32 0.0, %v807
    %v809 = vpop.f32.mrf.mxu0
    %810 = vmatprep.mubr.f32.mxu0 0.0
    %811 = vmatmul.mubr.f32.gmra.mxu0 %v735
    %v812 = vpop.f32.mrf.mxu0
    %v813 = vadd.f32 0.0, %v812
    %v814 = vpop.f32.mrf.mxu0
    %815 = vdwg.mxu0
    %v816 = vsel %vm336, %v808, -inf
    %817 = vmax.xlane.f32.xlu0 %v816
    %v818 = vpop.xlane.xlu0 %817
    %v819 = vsel %vm336, %v813, -inf
    %820 = vmax.xlane.f32.xlu0 %v819
    %v821 = vpop.xlane.xlu0 %820
    %v822 = vsub.f32 %v808, %v818
    %v823 = vsub.f32 %v813, %v821
    %v824 = vmul.f32 %v822, 1.442695
    %v825 = vpow.pop %v824
    %v826 = vmul.f32 %v823, 1.442695
    %v827 = vpow.pop %v826
    %v828 = vsel %vm336, %v825, 0.0
    %829 = vadd.xlane.f32.xlu0 %v828
    %v830 = vpop.xlane.xlu0 %829
    %v831 = vsel %vm336, %v827, 0.0
    %832 = vadd.xlane.f32.xlu0 %v831
    %v833 = vpop.xlane.xlu0 %832
    %v834 = vrcp.pop %v830
    %v835 = vrcp.pop %v833
    %v836 = vmul.f32 %v825, %v834
    %v837 = vmul.f32 %v827, %v835
    %838 = vrot.lane.b32.xlu0 %v324, 64
    %v839 = vpop.permute.xlu0 %838
    %840 = vrot.lane.b32.xlu0 %v328, 64
    %v841 = vpop.permute.xlu0 %840
    %v845 = vsel %vm336, %v836, 0
    %v848 = vsel %vm336, %v837, 0
    %850 = vmatprep.subr.mxu0 0.0
    %851 = vmatpush1.msra.mxu0 0.0
    %852 = vmatprep.subr.mxu0 0.0
    %853 = vmatpush1.msra.mxu0 0.0
    %854 = vmatprep.subr.mxu0 0.0
    %855 = vmatpush1.msra.mxu0 0.0
    %856 = vmatprep.subr.mxu0 0.0
    %857 = vmatpush1.msra.mxu0 0.0
    %858 = vmatprep.subr.mxu0 0.0
    %859 = vmatpush1.msra.mxu0 0.0
    %860 = vmatprep.subr.mxu0 0.0
    %861 = vmatpush1.msra.mxu0 0.0
    %862 = vmatprep.subr.mxu0 0.0
    %863 = vmatpush1.msra.mxu0 0.0
    %864 = vmatprep.subr.mxu0 0.0
    %865 = vmatpush1.msra.mxu0 0.0
    %866 = vmatprep.subr.mxu0 0.0
    %867 = vmatpush1.msra.mxu0 0.0
    %868 = vmatprep.subr.mxu0 0.0
    %869 = vmatpush1.msra.mxu0 0.0
    %870 = vmatprep.subr.mxu0 0.0
    %871 = vmatpush1.msra.mxu0 0.0
    %872 = vmatprep.subr.mxu0 0.0
    %873 = vmatpush1.msra.mxu0 0.0
    %874 = vmatprep.subr.mxu0 0.0
    %875 = vmatpush1.msra.mxu0 0.0
    %876 = vmatprep.subr.mxu0 0.0
    %877 = vmatpush1.msra.mxu0 0.0
    %878 = vmatprep.subr.mxu0 0.0
    %879 = vmatpush1.msra.mxu0 %v841
    %880 = vmatprep.subr.mxu0 0.0
    %881 = vmatpush1.msra.mxu0 %v839
    %882 = vmatprep.subr.mxu0 0.0
    %883 = vmatpush2.msra.mxu0 0.0
    %884 = vmatprep.subr.mxu0 0.0
    %885 = vmatpush2.msra.mxu0 0.0
    %886 = vmatprep.subr.mxu0 0.0
    %887 = vmatpush2.msra.mxu0 0.0
    %888 = vmatprep.subr.mxu0 0.0
    %889 = vmatpush2.msra.mxu0 0.0
    %890 = vmatprep.subr.mxu0 0.0
    %891 = vmatpush2.msra.mxu0 0.0
    %892 = vmatprep.subr.mxu0 0.0
    %893 = vmatpush2.msra.mxu0 0.0
    %894 = vmatprep.subr.mxu0 0.0
    %895 = vmatpush2.msra.mxu0 0.0
    %896 = vmatprep.subr.mxu0 0.0
    %897 = vmatpush2.msra.mxu0 0.0
    %898 = vmatprep.subr.mxu0 0.0
    %899 = vmatpush2.msra.mxu0 0.0
    %900 = vmatprep.subr.mxu0 0.0
    %901 = vmatpush2.msra.mxu0 0.0
    %902 = vmatprep.subr.mxu0 0.0
    %903 = vmatpush2.msra.mxu0 0.0
    %904 = vmatprep.subr.mxu0 0.0
    %905 = vmatpush2.msra.mxu0 0.0
    %906 = vmatprep.subr.mxu0 0.0
    %907 = vmatpush2.msra.mxu0 0.0
    %908 = vmatprep.subr.mxu0 0.0
    %909 = vmatpush2.msra.mxu0 0.0
    %910 = vmatprep.subr.mxu0 0.0
    %911 = vmatpush2.msra.mxu0 0.0
    %912 = vmatprep.subr.mxu0 0.0
    %913 = vmatpush2.msra.mxu0 0.0
    %914 = vmatprep.mubr.f32.mxu0 0.0
    %915 = vmatmul.mubr.f32.gmra.mxu0 %v845
    %v916 = vpop.f32.mrf.mxu0
    %v917 = vadd.f32 0.0, %v916
    %v918 = vpop.f32.mrf.mxu0
    %919 = vmatprep.mubr.f32.mxu0 0.0
    %920 = vmatmul.mubr.f32.gmra.mxu0 %v848
    %v921 = vpop.f32.mrf.mxu0
    %v922 = vadd.f32 0.0, %v921
    %v923 = vpop.f32.mrf.mxu0
    %924 = vdwg.mxu0
    %925 = vrot.lane.b32.xlu0 %v322, 80
    %v926 = vpop.permute.xlu0 %925
    %927 = vrot.lane.b32.xlu0 %v326, 80
    %v928 = vpop.permute.xlu0 %927
    %929 = vrot.lane.b32.xlu0 %v322, 16
    %v930 = vpop.permute.xlu0 %929
    %931 = vrot.lane.b32.xlu0 %v326, 16
    %v932 = vpop.permute.xlu0 %931
    %v933 = vsel %vm336, %v926, 0
    %v935 = vsel %vm336, %v928, 0
    %v937 = vsel %vm336, %v930, 0
    %v939 = vsel %vm336, %v932, 0
    %941 = vmatprep.subr.mxu0 0.0
    %942 = vmatpush1.xpose.msra.mxu0 0.0
    %943 = vmatprep.subr.mxu0 0.0
    %944 = vmatpush1.xpose.msra.mxu0 0.0
    %945 = vmatprep.subr.mxu0 0.0
    %946 = vmatpush1.xpose.msra.mxu0 0.0
    %947 = vmatprep.subr.mxu0 0.0
    %948 = vmatpush1.xpose.msra.mxu0 0.0
    %949 = vmatprep.subr.mxu0 0.0
    %950 = vmatpush1.xpose.msra.mxu0 0.0
    %951 = vmatprep.subr.mxu0 0.0
    %952 = vmatpush1.xpose.msra.mxu0 0.0
    %953 = vmatprep.subr.mxu0 0.0
    %954 = vmatpush1.xpose.msra.mxu0 0.0
    %955 = vmatprep.subr.mxu0 0.0
    %956 = vmatpush1.xpose.msra.mxu0 0.0
    %957 = vmatprep.subr.mxu0 0.0
    %958 = vmatpush1.xpose.msra.mxu0 0.0
    %959 = vmatprep.subr.mxu0 0.0
    %960 = vmatpush1.xpose.msra.mxu0 0.0
    %961 = vmatprep.subr.mxu0 0.0
    %962 = vmatpush1.xpose.msra.mxu0 0.0
    %963 = vmatprep.subr.mxu0 0.0
    %964 = vmatpush1.xpose.msra.mxu0 0.0
    %965 = vmatprep.subr.mxu0 0.0
    %966 = vmatpush1.xpose.msra.mxu0 0.0
    %967 = vmatprep.subr.mxu0 0.0
    %968 = vmatpush1.xpose.msra.mxu0 0.0
    %969 = vmatprep.subr.mxu0 0.0
    %970 = vmatpush1.xpose.msra.mxu0 %v939
    %971 = vmatprep.subr.mxu0 0.0
    %972 = vmatpush1.xpose.msra.mxu0 %v937
    %973 = vmatprep.subr.mxu0 0.0
    %974 = vmatpush2.xpose.msra.mxu0 0.0
    %975 = vmatprep.subr.mxu0 0.0
    %976 = vmatpush2.xpose.msra.mxu0 0.0
    %977 = vmatprep.subr.mxu0 0.0
    %978 = vmatpush2.xpose.msra.mxu0 0.0
    %979 = vmatprep.subr.mxu0 0.0
    %980 = vmatpush2.xpose.msra.mxu0 0.0
    %981 = vmatprep.subr.mxu0 0.0
    %982 = vmatpush2.xpose.msra.mxu0 0.0
    %983 = vmatprep.subr.mxu0 0.0
    %984 = vmatpush2.xpose.msra.mxu0 0.0
    %985 = vmatprep.subr.mxu0 0.0
    %986 = vmatpush2.xpose.msra.mxu0 0.0
    %987 = vmatprep.subr.mxu0 0.0
    %988 = vmatpush2.xpose.msra.mxu0 0.0
    %989 = vmatprep.subr.mxu0 0.0
    %990 = vmatpush2.xpose.msra.mxu0 0.0
    %991 = vmatprep.subr.mxu0 0.0
    %992 = vmatpush2.xpose.msra.mxu0 0.0
    %993 = vmatprep.subr.mxu0 0.0
    %994 = vmatpush2.xpose.msra.mxu0 0.0
    %995 = vmatprep.subr.mxu0 0.0
    %996 = vmatpush2.xpose.msra.mxu0 0.0
    %997 = vmatprep.subr.mxu0 0.0
    %998 = vmatpush2.xpose.msra.mxu0 0.0
    %999 = vmatprep.subr.mxu0 0.0
    %1000 = vmatpush2.xpose.msra.mxu0 0.0
    %1001 = vmatprep.subr.mxu0 0.0
    %1002 = vmatpush2.xpose.msra.mxu0 0.0
    %1003 = vmatprep.subr.mxu0 0.0
    %1004 = vmatpush2.xpose.msra.mxu0 0.0
    %1005 = vmatprep.mubr.f32.mxu0 0.0
    %1006 = vmatmul.mubr.f32.gmra.mxu0 %v933
    %v1007 = vpop.f32.mrf.mxu0
    %v1008 = vadd.f32 0.0, %v1007
    %v1009 = vpop.f32.mrf.mxu0
    %1010 = vmatprep.mubr.f32.mxu0 0.0
    %1011 = vmatmul.mubr.f32.gmra.mxu0 %v935
    %v1012 = vpop.f32.mrf.mxu0
    %v1013 = vadd.f32 0.0, %v1012
    %v1014 = vpop.f32.mrf.mxu0
    %1015 = vdwg.mxu0
    %v1016 = vsel %vm336, %v1008, -inf
    %1017 = vmax.xlane.f32.xlu0 %v1016
    %v1018 = vpop.xlane.xlu0 %1017
    %v1019 = vsel %vm336, %v1013, -inf
    %1020 = vmax.xlane.f32.xlu0 %v1019
    %v1021 = vpop.xlane.xlu0 %1020
    %v1022 = vsub.f32 %v1008, %v1018
    %v1023 = vsub.f32 %v1013, %v1021
    %v1024 = vmul.f32 %v1022, 1.442695
    %v1025 = vpow.pop %v1024
    %v1026 = vmul.f32 %v1023, 1.442695
    %v1027 = vpow.pop %v1026
    %v1028 = vsel %vm336, %v1025, 0.0
    %1029 = vadd.xlane.f32.xlu0 %v1028
    %v1030 = vpop.xlane.xlu0 %1029
    %v1031 = vsel %vm336, %v1027, 0.0
    %1032 = vadd.xlane.f32.xlu0 %v1031
    %v1033 = vpop.xlane.xlu0 %1032
    %v1034 = vrcp.pop %v1030
    %v1035 = vrcp.pop %v1033
    %v1036 = vmul.f32 %v1025, %v1034
    %v1037 = vmul.f32 %v1027, %v1035
    %1038 = vrot.lane.b32.xlu0 %v324, 32
    %v1039 = vpop.permute.xlu0 %1038
    %1040 = vrot.lane.b32.xlu0 %v328, 32
    %v1041 = vpop.permute.xlu0 %1040
    %v1045 = vsel %vm336, %v1036, 0
    %v1048 = vsel %vm336, %v1037, 0
    %1050 = vmatprep.subr.mxu0 0.0
    %1051 = vmatpush1.msra.mxu0 0.0
    %1052 = vmatprep.subr.mxu0 0.0
    %1053 = vmatpush1.msra.mxu0 0.0
    %1054 = vmatprep.subr.mxu0 0.0
    %1055 = vmatpush1.msra.mxu0 0.0
    %1056 = vmatprep.subr.mxu0 0.0
    %1057 = vmatpush1.msra.mxu0 0.0
    %1058 = vmatprep.subr.mxu0 0.0
    %1059 = vmatpush1.msra.mxu0 0.0
    %1060 = vmatprep.subr.mxu0 0.0
    %1061 = vmatpush1.msra.mxu0 0.0
    %1062 = vmatprep.subr.mxu0 0.0
    %1063 = vmatpush1.msra.mxu0 0.0
    %1064 = vmatprep.subr.mxu0 0.0
    %1065 = vmatpush1.msra.mxu0 0.0
    %1066 = vmatprep.subr.mxu0 0.0
    %1067 = vmatpush1.msra.mxu0 0.0
    %1068 = vmatprep.subr.mxu0 0.0
    %1069 = vmatpush1.msra.mxu0 0.0
    %1070 = vmatprep.subr.mxu0 0.0
    %1071 = vmatpush1.msra.mxu0 0.0
    %1072 = vmatprep.subr.mxu0 0.0
    %1073 = vmatpush1.msra.mxu0 0.0
    %1074 = vmatprep.subr.mxu0 0.0
    %1075 = vmatpush1.msra.mxu0 0.0
    %1076 = vmatprep.subr.mxu0 0.0
    %1077 = vmatpush1.msra.mxu0 0.0
    %1078 = vmatprep.subr.mxu0 0.0
    %1079 = vmatpush1.msra.mxu0 %v1041
    %1080 = vmatprep.subr.mxu0 0.0
    %1081 = vmatpush1.msra.mxu0 %v1039
    %1082 = vmatprep.subr.mxu0 0.0
    %1083 = vmatpush2.msra.mxu0 0.0
    %1084 = vmatprep.subr.mxu0 0.0
    %1085 = vmatpush2.msra.mxu0 0.0
    %1086 = vmatprep.subr.mxu0 0.0
    %1087 = vmatpush2.msra.mxu0 0.0
    %1088 = vmatprep.subr.mxu0 0.0
    %1089 = vmatpush2.msra.mxu0 0.0
    %1090 = vmatprep.subr.mxu0 0.0
    %1091 = vmatpush2.msra.mxu0 0.0
    %1092 = vmatprep.subr.mxu0 0.0
    %1093 = vmatpush2.msra.mxu0 0.0
    %1094 = vmatprep.subr.mxu0 0.0
    %1095 = vmatpush2.msra.mxu0 0.0
    %1096 = vmatprep.subr.mxu0 0.0
    %1097 = vmatpush2.msra.mxu0 0.0
    %1098 = vmatprep.subr.mxu0 0.0
    %1099 = vmatpush2.msra.mxu0 0.0
    %1100 = vmatprep.subr.mxu0 0.0
    %1101 = vmatpush2.msra.mxu0 0.0
    %1102 = vmatprep.subr.mxu0 0.0
    %1103 = vmatpush2.msra.mxu0 0.0
    %1104 = vmatprep.subr.mxu0 0.0
    %1105 = vmatpush2.msra.mxu0 0.0
    %1106 = vmatprep.subr.mxu0 0.0
    %1107 = vmatpush2.msra.mxu0 0.0
    %1108 = vmatprep.subr.mxu0 0.0
    %1109 = vmatpush2.msra.mxu0 0.0
    %1110 = vmatprep.subr.mxu0 0.0
    %1111 = vmatpush2.msra.mxu0 0.0
    %1112 = vmatprep.subr.mxu0 0.0
    %1113 = vmatpush2.msra.mxu0 0.0
    %1114 = vmatprep.mubr.f32.mxu0 0.0
    %1115 = vmatmul.mubr.f32.gmra.mxu0 %v1045
    %v1116 = vpop.f32.mrf.mxu0
    %v1117 = vadd.f32 0.0, %v1116
    %v1118 = vpop.f32.mrf.mxu0
    %1119 = vmatprep.mubr.f32.mxu0 0.0
    %1120 = vmatmul.mubr.f32.gmra.mxu0 %v1048
    %v1121 = vpop.f32.mrf.mxu0
    %v1122 = vadd.f32 0.0, %v1121
    %v1123 = vpop.f32.mrf.mxu0
    %1124 = vdwg.mxu0
    %1127 = vrot.lane.b32.xlu0 %v717, 32
    %v1128 = vpop.permute.xlu0 %1127
    %1129 = vrot.lane.b32.xlu0 %v722, 32
    %v1130 = vpop.permute.xlu0 %1129
    %1135 = vrot.lane.b32.xlu0 %v917, 64
    %v1136 = vpop.permute.xlu0 %1135
    %1137 = vrot.lane.b32.xlu0 %v922, 64
    %v1138 = vpop.permute.xlu0 %1137
    %1143 = vrot.lane.b32.xlu0 %v1117, 96
    %v1144 = vpop.permute.xlu0 %1143
    %1145 = vrot.lane.b32.xlu0 %v1122, 96
    %v1146 = vpop.permute.xlu0 %1145
    %v1149 = vsel %vm131, %v515, %v1128
    %v1150 = vsel %vm131, %v520, %v1130
    %vm1151 = vcmask 523264
    %v1152 = vsel %vm1151, %v1149, %v1136
    %v1153 = vsel %vm1151, %v1150, %v1138
    %vm1154 = vcmask 785408
    %v1155 = vsel %vm1154, %v1152, %v1144
    %v1156 = vsel %vm1154, %v1153, %v1146
    %v1157 = vpack.c.bf16 %v1156, %v1155
    %v1158 = vld [vmem:[#allocation7] sm:$0xf]
    %v1159 = vld [vmem:[#allocation7 + $0x4] sm:$0xf]
    %v1160 = vld [vmem:[#allocation7 + $0x8] sm:$0xf]
    %v1161 = vld [vmem:[#allocation7 + $0xc] sm:$0xf]
    %v1162 = vld [vmem:[#allocation7 + $0x10] sm:$0xf]
    %v1163 = vld [vmem:[#allocation7 + $0x14] sm:$0xf]
    %v1164 = vld [vmem:[#allocation7 + $0x18] sm:$0xf]
    %v1165 = vld [vmem:[#allocation7 + $0x1c] sm:$0xf]
    %v1166 = vld [vmem:[#allocation7 + $0x20] sm:$0xf]
    %v1167 = vld [vmem:[#allocation7 + $0x24] sm:$0xf]
    %v1168 = vld [vmem:[#allocation7 + $0x28] sm:$0xf]
    %v1169 = vld [vmem:[#allocation7 + $0x2c] sm:$0xf]
    %v1170 = vld [vmem:[#allocation7 + $0x30] sm:$0xf]
    %v1171 = vld [vmem:[#allocation7 + $0x34] sm:$0xf]
    %v1172 = vld [vmem:[#allocation7 + $0x38] sm:$0xf]
    %v1173 = vld [vmem:[#allocation7 + $0x3c] sm:$0xf]
    %v1190 = vunpack.c.l.b16 %v1158
    %v1191 = vunpack.c.l.b16 %v1159
    %v1192 = vunpack.c.l.b16 %v1160
    %v1193 = vunpack.c.l.b16 %v1161
    %v1194 = vunpack.c.l.b16 %v1162
    %v1195 = vunpack.c.l.b16 %v1163
    %v1196 = vunpack.c.l.b16 %v1164
    %v1197 = vunpack.c.l.b16 %v1165
    %v1198 = vunpack.c.l.b16 %v1166
    %v1199 = vunpack.c.l.b16 %v1167
    %v1200 = vunpack.c.l.b16 %v1168
    %v1201 = vunpack.c.l.b16 %v1169
    %v1202 = vunpack.c.l.b16 %v1170
    %v1203 = vunpack.c.l.b16 %v1171
    %v1204 = vunpack.c.l.b16 %v1172
    %v1205 = vunpack.c.l.b16 %v1173
    %v1206 = vpack.c.b16 %v1191, %v1190
    %v1207 = vpack.c.b16 %v1193, %v1192
    %v1208 = vpack.c.b16 %v1195, %v1194
    %v1209 = vpack.c.b16 %v1197, %v1196
    %v1210 = vpack.c.b16 %v1199, %v1198
    %v1211 = vpack.c.b16 %v1201, %v1200
    %v1212 = vpack.c.b16 %v1203, %v1202
    %v1213 = vpack.c.b16 %v1205, %v1204
    %1222 = vmatprep.subr.bf16.mxu0 0
    %1223 = vmatpush1.bf16.msra.mxu0 %v1213
    %1224 = vmatprep.subr.bf16.mxu0 0
    %1225 = vmatpush1.bf16.msra.mxu0 %v1212
    %1226 = vmatprep.subr.bf16.mxu0 0
    %1227 = vmatpush1.bf16.msra.mxu0 %v1211
    %1228 = vmatprep.subr.bf16.mxu0 0
    %1229 = vmatpush1.bf16.msra.mxu0 %v1210
    %1230 = vmatprep.subr.bf16.mxu0 0
    %1231 = vmatpush1.bf16.msra.mxu0 %v1209
    %1232 = vmatprep.subr.bf16.mxu0 0
    %1233 = vmatpush1.bf16.msra.mxu0 %v1208
    %1234 = vmatprep.subr.bf16.mxu0 0
    %1235 = vmatpush1.bf16.msra.mxu0 %v1207
    %1236 = vmatprep.subr.bf16.mxu0 0
    %1237 = vmatpush1.bf16.msra.mxu0 %v1206
    %1238 = vmatprep.subr.bf16.mxu0 0
    %1239 = vmatpush2.bf16.msra.mxu0 0
    %1240 = vmatprep.subr.bf16.mxu0 0
    %1241 = vmatpush2.bf16.msra.mxu0 0
    %1242 = vmatprep.subr.bf16.mxu0 0
    %1243 = vmatpush2.bf16.msra.mxu0 0
    %1244 = vmatprep.subr.bf16.mxu0 0
    %1245 = vmatpush2.bf16.msra.mxu0 0
    %1246 = vmatprep.subr.bf16.mxu0 0
    %1247 = vmatpush2.bf16.msra.mxu0 0
    %1248 = vmatprep.subr.bf16.mxu0 0
    %1249 = vmatpush2.bf16.msra.mxu0 0
    %1250 = vmatprep.subr.bf16.mxu0 0
    %1251 = vmatpush2.bf16.msra.mxu0 0
    %1252 = vmatprep.subr.bf16.mxu0 0
    %1253 = vmatpush2.bf16.msra.mxu0 0
    %1254 = vmatprep.mubr.bf16.mxu0 0
    %1255 = vmatmul.mubr.bf16.gmra.mxu0 %v1157
    %v1256 = vpop.f32.mrf.mxu0
    %v1257 = vadd.f32 0.0, %v1256
    %v1258 = vpop.f32.mrf.mxu0
    %v1259 = vpop.f32.mrf.mxu0
    %v1260 = vadd.f32 0.0, %v1259
    %v1261 = vpop.f32.mrf.mxu0
    %1262 = vdwg.mxu0
    %v1263 = vadd.f32 %v170, %v1257
    %v1264 = vadd.f32 %v173, %v1260
    %v1265 = vlaneseq
    %v1266 = vshrl.u32 %v1265, 7
    %v1267 = vsub.s32 0, %v1266
    %v1268 = vrot.slane %v178, %v1267
    %v1269 = vadd.f32 %v1263, %v1268
    %v1270 = vadd.f32 %v1264, %v1268
    %1271 = vadd.xlane.f32.xlu0 %v1269
    %v1272 = vpop.xlane.xlu0 %1271
    %1273 = vadd.xlane.f32.xlu0 %v1270
    %v1274 = vpop.xlane.xlu0 %1273
    %v1275 = vrcp.pop 128.0
    %v1276 = vmul.f32 %v1272, %v1275
    %v1277 = vmul.f32 %v1274, %v1275
    %v1278 = vsub.f32 %v1269, %v1276
    %v1279 = vsub.f32 %v1270, %v1277
    %v1280 = vmul.f32 %v1278, %v1278
    %v1281 = vmul.f32 %v1279, %v1279
    %1282 = vadd.xlane.f32.xlu0 %v1280
    %v1283 = vpop.xlane.xlu0 %1282
    %1284 = vadd.xlane.f32.xlu0 %v1281
    %v1285 = vpop.xlane.xlu0 %1284
    %v1286 = vmul.f32 %v1283, %v1275
    %v1287 = vmul.f32 %v1285, %v1275
    %v1288 = vadd.f32 %v1286, 1e-05
    %v1289 = vadd.f32 %v1287, 1e-05
    %v1290 = vrsqrt.pop %v1288
    %v1291 = vrsqrt.pop %v1289
    %v1292 = vmul.f32 %v1278, %v1290
    %v1293 = vmul.f32 %v1279, %v1291
    %v1294 = vlaneseq
    %v1295 = vshrl.u32 %v1294, 7
    %v1296 = vsub.s32 1, %v1295
    %v1297 = vrot.slane %v178, %v1296
    %v1298 = vmul.f32 %v1292, %v1297
    %v1299 = vmul.f32 %v1293, %v1297
    %v1300 = vlaneseq
    %v1301 = vshrl.u32 %v1300, 7
    %v1302 = vsub.s32 2, %v1301
    %v1303 = vrot.slane %v178, %v1302
    %v1304 = vadd.f32 %v1298, %v1303
    %v1305 = vadd.f32 %v1299, %v1303
    %v1306 = vpack.c.bf16 %v1305, %v1304
    %v1307 = vld [vmem:[#allocation8] sm:$0xff]
    %v1308 = vld [vmem:[#allocation8 + $0x8] sm:$0xff]
    %v1309 = vld [vmem:[#allocation8 + $0x10] sm:$0xff]
    %v1310 = vld [vmem:[#allocation8 + $0x18] sm:$0xff]
    %v1311 = vld [vmem:[#allocation8 + $0x20] sm:$0xff]
    %v1312 = vld [vmem:[#allocation8 + $0x28] sm:$0xff]
    %v1313 = vld [vmem:[#allocation8 + $0x30] sm:$0xff]
    %v1314 = vld [vmem:[#allocation8 + $0x38] sm:$0xff]
    %v1315 = vld [vmem:[#allocation8 + $0x40] sm:$0xff]
    %v1316 = vld [vmem:[#allocation8 + $0x48] sm:$0xff]
    %v1317 = vld [vmem:[#allocation8 + $0x50] sm:$0xff]
    %v1318 = vld [vmem:[#allocation8 + $0x58] sm:$0xff]
    %v1319 = vld [vmem:[#allocation8 + $0x60] sm:$0xff]
    %v1320 = vld [vmem:[#allocation8 + $0x68] sm:$0xff]
    %v1321 = vld [vmem:[#allocation8 + $0x70] sm:$0xff]
    %v1322 = vld [vmem:[#allocation8 + $0x78] sm:$0xff]
    %v1324 = vlaneseq
    %v1325 = vshrl.u32 %v1324, 7
    %v1326 = vsub.s32 0, %v1325
    %v1327 = vrot.slane %v177, %v1326
    %v1328 = vlaneseq
    %v1329 = vshrl.u32 %v1328, 7
    %v1330 = vsub.s32 1, %v1329
    %v1331 = vrot.slane %v177, %v1330
    %v1350 = vunpack.c.l.b16 %v1307
    %v1351 = vunpack.c.h.b16 %v1307
    %v1352 = vunpack.c.l.b16 %v1308
    %v1353 = vunpack.c.h.b16 %v1308
    %v1354 = vunpack.c.l.b16 %v1309
    %v1355 = vunpack.c.h.b16 %v1309
    %v1356 = vunpack.c.l.b16 %v1310
    %v1357 = vunpack.c.h.b16 %v1310
    %v1358 = vunpack.c.l.b16 %v1311
    %v1359 = vunpack.c.h.b16 %v1311
    %v1360 = vunpack.c.l.b16 %v1312
    %v1361 = vunpack.c.h.b16 %v1312
    %v1362 = vunpack.c.l.b16 %v1313
    %v1363 = vunpack.c.h.b16 %v1313
    %v1364 = vunpack.c.l.b16 %v1314
    %v1365 = vunpack.c.h.b16 %v1314
    %v1366 = vunpack.c.l.b16 %v1315
    %v1367 = vunpack.c.h.b16 %v1315
    %v1368 = vunpack.c.l.b16 %v1316
    %v1369 = vunpack.c.h.b16 %v1316
    %v1370 = vunpack.c.l.b16 %v1317
    %v1371 = vunpack.c.h.b16 %v1317
    %v1372 = vunpack.c.l.b16 %v1318
    %v1373 = vunpack.c.h.b16 %v1318
    %v1374 = vunpack.c.l.b16 %v1319
    %v1375 = vunpack.c.h.b16 %v1319
    %v1376 = vunpack.c.l.b16 %v1320
    %v1377 = vunpack.c.h.b16 %v1320
    %v1378 = vunpack.c.l.b16 %v1321
    %v1379 = vunpack.c.h.b16 %v1321
    %v1380 = vunpack.c.l.b16 %v1322
    %v1381 = vunpack.c.h.b16 %v1322
    %v1382 = vpack.c.b16 %v1352, %v1350
    %v1383 = vpack.c.b16 %v1353, %v1351
    %v1384 = vpack.c.b16 %v1356, %v1354
    %v1385 = vpack.c.b16 %v1357, %v1355
    %v1386 = vpack.c.b16 %v1360, %v1358
    %v1387 = vpack.c.b16 %v1361, %v1359
    %v1388 = vpack.c.b16 %v1364, %v1362
    %v1389 = vpack.c.b16 %v1365, %v1363
    %v1390 = vpack.c.b16 %v1368, %v1366
    %v1391 = vpack.c.b16 %v1369, %v1367
    %v1392 = vpack.c.b16 %v1372, %v1370
    %v1393 = vpack.c.b16 %v1373, %v1371
    %v1394 = vpack.c.b16 %v1376, %v1374
    %v1395 = vpack.c.b16 %v1377, %v1375
    %v1396 = vpack.c.b16 %v1380, %v1378
    %v1397 = vpack.c.b16 %v1381, %v1379
    %1414 = vmatprep.subr.bf16.mxu0 %v1397
    %1415 = vmatpush1.bf16.msra.mxu0 %v1396
    %1416 = vmatprep.subr.bf16.mxu0 %v1395
    %1417 = vmatpush1.bf16.msra.mxu0 %v1394
    %1418 = vmatprep.subr.bf16.mxu0 %v1393
    %1419 = vmatpush1.bf16.msra.mxu0 %v1392
    %1420 = vmatprep.subr.bf16.mxu0 %v1391
    %1421 = vmatpush1.bf16.msra.mxu0 %v1390
    %1422 = vmatprep.subr.bf16.mxu0 %v1389
    %1423 = vmatpush1.bf16.msra.mxu0 %v1388
    %1424 = vmatprep.subr.bf16.mxu0 %v1387
    %1425 = vmatpush1.bf16.msra.mxu0 %v1386
    %1426 = vmatprep.subr.bf16.mxu0 %v1385
    %1427 = vmatpush1.bf16.msra.mxu0 %v1384
    %1428 = vmatprep.subr.bf16.mxu0 %v1383
    %1429 = vmatpush1.bf16.msra.mxu0 %v1382
    %1430 = vmatprep.subr.bf16.mxu0 0
    %1431 = vmatpush2.bf16.msra.mxu0 0
    %1432 = vmatprep.subr.bf16.mxu0 0
    %1433 = vmatpush2.bf16.msra.mxu0 0
    %1434 = vmatprep.subr.bf16.mxu0 0
    %1435 = vmatpush2.bf16.msra.mxu0 0
    %1436 = vmatprep.subr.bf16.mxu0 0
    %1437 = vmatpush2.bf16.msra.mxu0 0
    %1438 = vmatprep.subr.bf16.mxu0 0
    %1439 = vmatpush2.bf16.msra.mxu0 0
    %1440 = vmatprep.subr.bf16.mxu0 0
    %1441 = vmatpush2.bf16.msra.mxu0 0
    %1442 = vmatprep.subr.bf16.mxu0 0
    %1443 = vmatpush2.bf16.msra.mxu0 0
    %1444 = vmatprep.subr.bf16.mxu0 0
    %1445 = vmatpush2.bf16.msra.mxu0 0
    %1446 = vmatprep.mubr.bf16.mxu0 0
    %1447 = vmatmul.mubr.bf16.gmra.mxu0 %v1306
    %v1448 = vpop.f32.mrf.mxu0
    %v1449 = vadd.f32 %v1327, %v1448
    %v1450 = vpop.f32.mrf.mxu0
    %v1451 = vadd.f32 %v1331, %v1450
    %v1452 = vpop.f32.mrf.mxu0
    %v1453 = vadd.f32 %v1327, %v1452
    %v1454 = vpop.f32.mrf.mxu0
    %v1455 = vadd.f32 %v1331, %v1454
    %1456 = vdwg.mxu0
    %v1457 = vmax.f32 %v1449, 0.0
    %v1458 = vmax.f32 %v1451, 0.0
    %v1459 = vmax.f32 %v1453, 0.0
    %v1460 = vmax.f32 %v1455, 0.0
    %v1461 = vpack.c.bf16 %v1459, %v1457
    %v1462 = vpack.c.bf16 %v1460, %v1458
    %v1463 = vld [vmem:[#allocation10] sm:$0xf]
    %v1464 = vld [vmem:[#allocation10 + $0x4] sm:$0xf]
    %v1465 = vld [vmem:[#allocation10 + $0x8] sm:$0xf]
    %v1466 = vld [vmem:[#allocation10 + $0xc] sm:$0xf]
    %v1467 = vld [vmem:[#allocation10 + $0x10] sm:$0xf]
    %v1468 = vld [vmem:[#allocation10 + $0x14] sm:$0xf]
    %v1469 = vld [vmem:[#allocation10 + $0x18] sm:$0xf]
    %v1470 = vld [vmem:[#allocation10 + $0x1c] sm:$0xf]
    %v1471 = vld [vmem:[#allocation10 + $0x20] sm:$0xf]
    %v1472 = vld [vmem:[#allocation10 + $0x24] sm:$0xf]
    %v1473 = vld [vmem:[#allocation10 + $0x28] sm:$0xf]
    %v1474 = vld [vmem:[#allocation10 + $0x2c] sm:$0xf]
    %v1475 = vld [vmem:[#allocation10 + $0x30] sm:$0xf]
    %v1476 = vld [vmem:[#allocation10 + $0x34] sm:$0xf]
    %v1477 = vld [vmem:[#allocation10 + $0x38] sm:$0xf]
    %v1478 = vld [vmem:[#allocation10 + $0x3c] sm:$0xf]
    %v1479 = vld [vmem:[#allocation10 + $0x40] sm:$0xf]
    %v1480 = vld [vmem:[#allocation10 + $0x44] sm:$0xf]
    %v1481 = vld [vmem:[#allocation10 + $0x48] sm:$0xf]
    %v1482 = vld [vmem:[#allocation10 + $0x4c] sm:$0xf]
    %v1483 = vld [vmem:[#allocation10 + $0x50] sm:$0xf]
    %v1484 = vld [vmem:[#allocation10 + $0x54] sm:$0xf]
    %v1485 = vld [vmem:[#allocation10 + $0x58] sm:$0xf]
    %v1486 = vld [vmem:[#allocation10 + $0x5c] sm:$0xf]
    %v1487 = vld [vmem:[#allocation10 + $0x60] sm:$0xf]
    %v1488 = vld [vmem:[#allocation10 + $0x64] sm:$0xf]
    %v1489 = vld [vmem:[#allocation10 + $0x68] sm:$0xf]
    %v1490 = vld [vmem:[#allocation10 + $0x6c] sm:$0xf]
    %v1491 = vld [vmem:[#allocation10 + $0x70] sm:$0xf]
    %v1492 = vld [vmem:[#allocation10 + $0x74] sm:$0xf]
    %v1493 = vld [vmem:[#allocation10 + $0x78] sm:$0xf]
    %v1494 = vld [vmem:[#allocation10 + $0x7c] sm:$0xf]
    %v1527 = vunpack.c.l.b16 %v1463
    %v1528 = vunpack.c.l.b16 %v1464
    %v1529 = vunpack.c.l.b16 %v1465
    %v1530 = vunpack.c.l.b16 %v1466
    %v1531 = vunpack.c.l.b16 %v1467
    %v1532 = vunpack.c.l.b16 %v1468
    %v1533 = vunpack.c.l.b16 %v1469
    %v1534 = vunpack.c.l.b16 %v1470
    %v1535 = vunpack.c.l.b16 %v1471
    %v1536 = vunpack.c.l.b16 %v1472
    %v1537 = vunpack.c.l.b16 %v1473
    %v1538 = vunpack.c.l.b16 %v1474
    %v1539 = vunpack.c.l.b16 %v1475
    %v1540 = vunpack.c.l.b16 %v1476
    %v1541 = vunpack.c.l.b16 %v1477
    %v1542 = vunpack.c.l.b16 %v1478
    %v1543 = vunpack.c.l.b16 %v1479
    %v1544 = vunpack.c.l.b16 %v1480
    %v1545 = vunpack.c.l.b16 %v1481
    %v1546 = vunpack.c.l.b16 %v1482
    %v1547 = vunpack.c.l.b16 %v1483
    %v1548 = vunpack.c.l.b16 %v1484
    %v1549 = vunpack.c.l.b16 %v1485
    %v1550 = vunpack.c.l.b16 %v1486
    %v1551 = vunpack.c.l.b16 %v1487
    %v1552 = vunpack.c.l.b16 %v1488
    %v1553 = vunpack.c.l.b16 %v1489
    %v1554 = vunpack.c.l.b16 %v1490
    %v1555 = vunpack.c.l.b16 %v1491
    %v1556 = vunpack.c.l.b16 %v1492
    %v1557 = vunpack.c.l.b16 %v1493
    %v1558 = vunpack.c.l.b16 %v1494
    %v1559 = vpack.c.b16 %v1528, %v1527
    %v1560 = vpack.c.b16 %v1530, %v1529
    %v1561 = vpack.c.b16 %v1532, %v1531
    %v1562 = vpack.c.b16 %v1534, %v1533
    %v1563 = vpack.c.b16 %v1536, %v1535
    %v1564 = vpack.c.b16 %v1538, %v1537
    %v1565 = vpack.c.b16 %v1540, %v1539
    %v1566 = vpack.c.b16 %v1542, %v1541
    %v1567 = vpack.c.b16 %v1544, %v1543
    %v1568 = vpack.c.b16 %v1546, %v1545
    %v1569 = vpack.c.b16 %v1548, %v1547
    %v1570 = vpack.c.b16 %v1550, %v1549
    %v1571 = vpack.c.b16 %v1552, %v1551
    %v1572 = vpack.c.b16 %v1554, %v1553
    %v1573 = vpack.c.b16 %v1556, %v1555
    %v1574 = vpack.c.b16 %v1558, %v1557
    %1591 = vmatprep.subr.bf16.mxu0 0
    %1592 = vmatpush1.bf16.msra.mxu0 %v1566
    %1593 = vmatprep.subr.bf16.mxu0 0
    %1594 = vmatpush1.bf16.msra.mxu0 %v1565
    %1595 = vmatprep.subr.bf16.mxu0 0
    %1596 = vmatpush1.bf16.msra.mxu0 %v1564
    %1597 = vmatprep.subr.bf16.mxu0 0
    %1598 = vmatpush1.bf16.msra.mxu0 %v1563
    %1599 = vmatprep.subr.bf16.mxu0 0
    %1600 = vmatpush1.bf16.msra.mxu0 %v1562
    %1601 = vmatprep.subr.bf16.mxu0 0
    %1602 = vmatpush1.bf16.msra.mxu0 %v1561
    %1603 = vmatprep.subr.bf16.mxu0 0
    %1604 = vmatpush1.bf16.msra.mxu0 %v1560
    %1605 = vmatprep.subr.bf16.mxu0 0
    %1606 = vmatpush1.bf16.msra.mxu0 %v1559
    %1607 = vmatprep.subr.bf16.mxu0 0
    %1608 = vmatpush2.bf16.msra.mxu0 %v1574
    %1609 = vmatprep.subr.bf16.mxu0 0
    %1610 = vmatpush2.bf16.msra.mxu0 %v1573
    %1611 = vmatprep.subr.bf16.mxu0 0
    %1612 = vmatpush2.bf16.msra.mxu0 %v1572
    %1613 = vmatprep.subr.bf16.mxu0 0
    %1614 = vmatpush2.bf16.msra.mxu0 %v1571
    %1615 = vmatprep.subr.bf16.mxu0 0
    %1616 = vmatpush2.bf16.msra.mxu0 %v1570
    %1617 = vmatprep.subr.bf16.mxu0 0
    %1618 = vmatpush2.bf16.msra.mxu0 %v1569
    %1619 = vmatprep.subr.bf16.mxu0 0
    %1620 = vmatpush2.bf16.msra.mxu0 %v1568
    %1621 = vmatprep.subr.bf16.mxu0 0
    %1622 = vmatpush2.bf16.msra.mxu0 %v1567
    %1623 = vmatprep.mubr.bf16.mxu0 %v1462
    %1624 = vmatmul.mubr.bf16.gmra.mxu0 %v1461
    %v1625 = vpop.f32.mrf.mxu0
    %v1626 = vadd.f32 0.0, %v1625
    %v1627 = vpop.f32.mrf.mxu0
    %v1628 = vpop.f32.mrf.mxu0
    %v1629 = vadd.f32 0.0, %v1628
    %v1630 = vpop.f32.mrf.mxu0
    %1631 = vdwg.mxu0
    %v1632 = vadd.f32 %v1304, %v1626
    %v1633 = vadd.f32 %v1305, %v1629
    %v1634 = vlaneseq
    %v1635 = vshrl.u32 %v1634, 7
    %v1636 = vsub.s32 3, %v1635
    %v1637 = vrot.slane %v178, %v1636
    %v1638 = vadd.f32 %v1632, %v1637
    %v1639 = vadd.f32 %v1633, %v1637
    %1640 = vadd.xlane.f32.xlu0 %v1638
    %v1641 = vpop.xlane.xlu0 %1640
    %1642 = vadd.xlane.f32.xlu0 %v1639
    %v1643 = vpop.xlane.xlu0 %1642
    %v1644 = vmul.f32 %v1641, %v1275
    %v1645 = vmul.f32 %v1643, %v1275
    %v1646 = vsub.f32 %v1638, %v1644
    %v1647 = vsub.f32 %v1639, %v1645
    %v1648 = vmul.f32 %v1646, %v1646
    %v1649 = vmul.f32 %v1647, %v1647
    %1650 = vadd.xlane.f32.xlu0 %v1648
    %v1651 = vpop.xlane.xlu0 %1650
    %1652 = vadd.xlane.f32.xlu0 %v1649
    %v1653 = vpop.xlane.xlu0 %1652
    %v1654 = vmul.f32 %v1651, %v1275
    %v1655 = vmul.f32 %v1653, %v1275
    %v1656 = vadd.f32 %v1654, 1e-05
    %v1657 = vadd.f32 %v1655, 1e-05
    %v1658 = vrsqrt.pop %v1656
    %v1659 = vrsqrt.pop %v1657
    %v1660 = vmul.f32 %v1646, %v1658
    %v1661 = vmul.f32 %v1647, %v1659
    %v1662 = vlaneseq
    %v1663 = vshrl.u32 %v1662, 7
    %v1664 = vsub.s32 4, %v1663
    %v1665 = vrot.slane %v178, %v1664
    %v1666 = vmul.f32 %v1660, %v1665
    %v1667 = vmul.f32 %v1661, %v1665
    %v1668 = vlaneseq
    %v1669 = vshrl.u32 %v1668, 7
    %v1670 = vsub.s32 5, %v1669
    %v1671 = vrot.slane %v178, %v1670
    %v1672 = vadd.f32 %v1666, %v1671
    %v1673 = vadd.f32 %v1667, %v1671
    %s1674 = scalar_lea.vmem %s4, 2
    %v1675 = vld [vmem:[%s1674] sm:$0x3]
    %s1676 = scalar_lea.vmem %s7, 2
    %v1677 = vld [vmem:[%s1676] sm:$0x3]
    %s1678 = scalar_lea.vmem %s9, 8
    %v1679 = vld [vmem:[%s1678] sm:$0x3f]
    %v1680 = vpack.c.bf16 %v1673, %v1672
    %s1681 = scalar_lea.vmem [#allocation5], 128
    %v1682 = vld [vmem:[%s1681] sm:$0xff]
    %v1683 = vld [vmem:[%s1681 + $0x8] sm:$0xff]
    %v1684 = vld [vmem:[%s1681 + $0x10] sm:$0xff]
    %v1685 = vld [vmem:[%s1681 + $0x18] sm:$0xff]
    %v1686 = vld [vmem:[%s1681 + $0x20] sm:$0xff]
    %v1687 = vld [vmem:[%s1681 + $0x28] sm:$0xff]
    %v1688 = vld [vmem:[%s1681 + $0x30] sm:$0xff]
    %v1689 = vld [vmem:[%s1681 + $0x38] sm:$0xff]
    %v1690 = vld [vmem:[%s1681 + $0x40] sm:$0xff]
    %v1691 = vld [vmem:[%s1681 + $0x48] sm:$0xff]
    %v1692 = vld [vmem:[%s1681 + $0x50] sm:$0xff]
    %v1693 = vld [vmem:[%s1681 + $0x58] sm:$0xff]
    %v1694 = vld [vmem:[%s1681 + $0x60] sm:$0xff]
    %v1695 = vld [vmem:[%s1681 + $0x68] sm:$0xff]
    %v1696 = vld [vmem:[%s1681 + $0x70] sm:$0xff]
    %v1697 = vld [vmem:[%s1681 + $0x78] sm:$0xff]
    %v1699 = vlaneseq
    %v1700 = vshrl.u32 %v1699, 7
    %v1701 = vsub.s32 0, %v1700
    %v1702 = vrot.slane %v1675, %v1701
    %v1703 = vlaneseq
    %v1704 = vshrl.u32 %v1703, 7
    %v1705 = vsub.s32 1, %v1704
    %v1706 = vrot.slane %v1675, %v1705
    %v1725 = vunpack.c.l.b16 %v1682
    %v1726 = vunpack.c.h.b16 %v1682
    %v1727 = vunpack.c.l.b16 %v1683
    %v1728 = vunpack.c.h.b16 %v1683
    %v1729 = vunpack.c.l.b16 %v1684
    %v1730 = vunpack.c.h.b16 %v1684
    %v1731 = vunpack.c.l.b16 %v1685
    %v1732 = vunpack.c.h.b16 %v1685
    %v1733 = vunpack.c.l.b16 %v1686
    %v1734 = vunpack.c.h.b16 %v1686
    %v1735 = vunpack.c.l.b16 %v1687
    %v1736 = vunpack.c.h.b16 %v1687
    %v1737 = vunpack.c.l.b16 %v1688
    %v1738 = vunpack.c.h.b16 %v1688
    %v1739 = vunpack.c.l.b16 %v1689
    %v1740 = vunpack.c.h.b16 %v1689
    %v1741 = vunpack.c.l.b16 %v1690
    %v1742 = vunpack.c.h.b16 %v1690
    %v1743 = vunpack.c.l.b16 %v1691
    %v1744 = vunpack.c.h.b16 %v1691
    %v1745 = vunpack.c.l.b16 %v1692
    %v1746 = vunpack.c.h.b16 %v1692
    %v1747 = vunpack.c.l.b16 %v1693
    %v1748 = vunpack.c.h.b16 %v1693
    %v1749 = vunpack.c.l.b16 %v1694
    %v1750 = vunpack.c.h.b16 %v1694
    %v1751 = vunpack.c.l.b16 %v1695
    %v1752 = vunpack.c.h.b16 %v1695
    %v1753 = vunpack.c.l.b16 %v1696
    %v1754 = vunpack.c.h.b16 %v1696
    %v1755 = vunpack.c.l.b16 %v1697
    %v1756 = vunpack.c.h.b16 %v1697
    %v1757 = vpack.c.b16 %v1727, %v1725
    %v1758 = vpack.c.b16 %v1728, %v1726
    %v1759 = vpack.c.b16 %v1731, %v1729
    %v1760 = vpack.c.b16 %v1732, %v1730
    %v1761 = vpack.c.b16 %v1735, %v1733
    %v1762 = vpack.c.b16 %v1736, %v1734
    %v1763 = vpack.c.b16 %v1739, %v1737
    %v1764 = vpack.c.b16 %v1740, %v1738
    %v1765 = vpack.c.b16 %v1743, %v1741
    %v1766 = vpack.c.b16 %v1744, %v1742
    %v1767 = vpack.c.b16 %v1747, %v1745
    %v1768 = vpack.c.b16 %v1748, %v1746
    %v1769 = vpack.c.b16 %v1751, %v1749
    %v1770 = vpack.c.b16 %v1752, %v1750
    %v1771 = vpack.c.b16 %v1755, %v1753
    %v1772 = vpack.c.b16 %v1756, %v1754
    %1789 = vmatprep.subr.bf16.mxu0 %v1772
    %1790 = vmatpush1.bf16.msra.mxu0 %v1771
    %1791 = vmatprep.subr.bf16.mxu0 %v1770
    %1792 = vmatpush1.bf16.msra.mxu0 %v1769
    %1793 = vmatprep.subr.bf16.mxu0 %v1768
    %1794 = vmatpush1.bf16.msra.mxu0 %v1767
    %1795 = vmatprep.subr.bf16.mxu0 %v1766
    %1796 = vmatpush1.bf16.msra.mxu0 %v1765
    %1797 = vmatprep.subr.bf16.mxu0 %v1764
    %1798 = vmatpush1.bf16.msra.mxu0 %v1763
    %1799 = vmatprep.subr.bf16.mxu0 %v1762
    %1800 = vmatpush1.bf16.msra.mxu0 %v1761
    %1801 = vmatprep.subr.bf16.mxu0 %v1760
    %1802 = vmatpush1.bf16.msra.mxu0 %v1759
    %1803 = vmatprep.subr.bf16.mxu0 %v1758
    %1804 = vmatpush1.bf16.msra.mxu0 %v1757
    %1805 = vmatprep.subr.bf16.mxu0 0
    %1806 = vmatpush2.bf16.msra.mxu0 0
    %1807 = vmatprep.subr.bf16.mxu0 0
    %1808 = vmatpush2.bf16.msra.mxu0 0
    %1809 = vmatprep.subr.bf16.mxu0 0
    %1810 = vmatpush2.bf16.msra.mxu0 0
    %1811 = vmatprep.subr.bf16.mxu0 0
    %1812 = vmatpush2.bf16.msra.mxu0 0
    %1813 = vmatprep.subr.bf16.mxu0 0
    %1814 = vmatpush2.bf16.msra.mxu0 0
    %1815 = vmatprep.subr.bf16.mxu0 0
    %1816 = vmatpush2.bf16.msra.mxu0 0
    %1817 = vmatprep.subr.bf16.mxu0 0
    %1818 = vmatpush2.bf16.msra.mxu0 0
    %1819 = vmatprep.subr.bf16.mxu0 0
    %1820 = vmatpush2.bf16.msra.mxu0 0
    %1821 = vmatprep.mubr.bf16.mxu0 0
    %1822 = vmatmul.mubr.bf16.gmra.mxu0 %v1680
    %v1823 = vpop.f32.mrf.mxu0
    %v1824 = vadd.f32 %v1702, %v1823
    %v1825 = vpop.f32.mrf.mxu0
    %v1826 = vadd.f32 %v1706, %v1825
    %v1827 = vpop.f32.mrf.mxu0
    %v1828 = vadd.f32 %v1702, %v1827
    %v1829 = vpop.f32.mrf.mxu0
    %v1830 = vadd.f32 %v1706, %v1829
    %1831 = vdwg.mxu0
    %1834 = vrot.lane.b32.xlu0 %v1824, 64
    %v1835 = vpop.permute.xlu0 %1834
    %1836 = vrot.lane.b32.xlu0 %v1828, 64
    %v1837 = vpop.permute.xlu0 %1836
    %v1838 = vsel %vm336, %v1824, 0
    %v1840 = vsel %vm336, %v1828, 0
    %v1842 = vsel %vm336, %v1835, 0
    %v1844 = vsel %vm336, %v1837, 0
    %1846 = vmatprep.subr.mxu0 0.0
    %1847 = vmatpush1.xpose.msra.mxu0 0.0
    %1848 = vmatprep.subr.mxu0 0.0
    %1849 = vmatpush1.xpose.msra.mxu0 0.0
    %1850 = vmatprep.subr.mxu0 0.0
    %1851 = vmatpush1.xpose.msra.mxu0 0.0
    %1852 = vmatprep.subr.mxu0 0.0
    %1853 = vmatpush1.xpose.msra.mxu0 0.0
    %1854 = vmatprep.subr.mxu0 0.0
    %1855 = vmatpush1.xpose.msra.mxu0 0.0
    %1856 = vmatprep.subr.mxu0 0.0
    %1857 = vmatpush1.xpose.msra.mxu0 0.0
    %1858 = vmatprep.subr.mxu0 0.0
    %1859 = vmatpush1.xpose.msra.mxu0 0.0
    %1860 = vmatprep.subr.mxu0 0.0
    %1861 = vmatpush1.xpose.msra.mxu0 0.0
    %1862 = vmatprep.subr.mxu0 0.0
    %1863 = vmatpush1.xpose.msra.mxu0 0.0
    %1864 = vmatprep.subr.mxu0 0.0
    %1865 = vmatpush1.xpose.msra.mxu0 0.0
    %1866 = vmatprep.subr.mxu0 0.0
    %1867 = vmatpush1.xpose.msra.mxu0 0.0
    %1868 = vmatprep.subr.mxu0 0.0
    %1869 = vmatpush1.xpose.msra.mxu0 0.0
    %1870 = vmatprep.subr.mxu0 0.0
    %1871 = vmatpush1.xpose.msra.mxu0 0.0
    %1872 = vmatprep.subr.mxu0 0.0
    %1873 = vmatpush1.xpose.msra.mxu0 0.0
    %1874 = vmatprep.subr.mxu0 0.0
    %1875 = vmatpush1.xpose.msra.mxu0 %v1844
    %1876 = vmatprep.subr.mxu0 0.0
    %1877 = vmatpush1.xpose.msra.mxu0 %v1842
    %1878 = vmatprep.subr.mxu0 0.0
    %1879 = vmatpush2.xpose.msra.mxu0 0.0
    %1880 = vmatprep.subr.mxu0 0.0
    %1881 = vmatpush2.xpose.msra.mxu0 0.0
    %1882 = vmatprep.subr.mxu0 0.0
    %1883 = vmatpush2.xpose.msra.mxu0 0.0
    %1884 = vmatprep.subr.mxu0 0.0
    %1885 = vmatpush2.xpose.msra.mxu0 0.0
    %1886 = vmatprep.subr.mxu0 0.0
    %1887 = vmatpush2.xpose.msra.mxu0 0.0
    %1888 = vmatprep.subr.mxu0 0.0
    %1889 = vmatpush2.xpose.msra.mxu0 0.0
    %1890 = vmatprep.subr.mxu0 0.0
    %1891 = vmatpush2.xpose.msra.mxu0 0.0
    %1892 = vmatprep.subr.mxu0 0.0
    %1893 = vmatpush2.xpose.msra.mxu0 0.0
    %1894 = vmatprep.subr.mxu0 0.0
    %1895 = vmatpush2.xpose.msra.mxu0 0.0
    %1896 = vmatprep.subr.mxu0 0.0
    %1897 = vmatpush2.xpose.msra.mxu0 0.0
    %1898 = vmatprep.subr.mxu0 0.0
    %1899 = vmatpush2.xpose.msra.mxu0 0.0
    %1900 = vmatprep.subr.mxu0 0.0
    %1901 = vmatpush2.xpose.msra.mxu0 0.0
    %1902 = vmatprep.subr.mxu0 0.0
    %1903 = vmatpush2.xpose.msra.mxu0 0.0
    %1904 = vmatprep.subr.mxu0 0.0
    %1905 = vmatpush2.xpose.msra.mxu0 0.0
    %1906 = vmatprep.subr.mxu0 0.0
    %1907 = vmatpush2.xpose.msra.mxu0 0.0
    %1908 = vmatprep.subr.mxu0 0.0
    %1909 = vmatpush2.xpose.msra.mxu0 0.0
    %1910 = vmatprep.mubr.f32.mxu0 0.0
    %1911 = vmatmul.mubr.f32.gmra.mxu0 %v1838
    %v1912 = vpop.f32.mrf.mxu0
    %v1913 = vadd.f32 0.0, %v1912
    %v1914 = vpop.f32.mrf.mxu0
    %1915 = vmatprep.mubr.f32.mxu0 0.0
    %1916 = vmatmul.mubr.f32.gmra.mxu0 %v1840
    %v1917 = vpop.f32.mrf.mxu0
    %v1918 = vadd.f32 0.0, %v1917
    %v1919 = vpop.f32.mrf.mxu0
    %1920 = vdwg.mxu0
    %v1921 = vsel %vm336, %v1913, -inf
    %1922 = vmax.xlane.f32.xlu0 %v1921
    %v1923 = vpop.xlane.xlu0 %1922
    %v1924 = vsel %vm336, %v1918, -inf
    %1925 = vmax.xlane.f32.xlu0 %v1924
    %v1926 = vpop.xlane.xlu0 %1925
    %v1927 = vsub.f32 %v1913, %v1923
    %v1928 = vsub.f32 %v1918, %v1926
    %v1929 = vmul.f32 %v1927, 1.442695
    %v1930 = vpow.pop %v1929
    %v1931 = vmul.f32 %v1928, 1.442695
    %v1932 = vpow.pop %v1931
    %v1933 = vsel %vm336, %v1930, 0.0
    %1934 = vadd.xlane.f32.xlu0 %v1933
    %v1935 = vpop.xlane.xlu0 %1934
    %v1936 = vsel %vm336, %v1932, 0.0
    %1937 = vadd.xlane.f32.xlu0 %v1936
    %v1938 = vpop.xlane.xlu0 %1937
    %v1939 = vrcp.pop %v1935
    %v1940 = vrcp.pop %v1938
    %v1941 = vmul.f32 %v1930, %v1939
    %v1942 = vmul.f32 %v1932, %v1940
    %v1944 = vsel %vm336, %v1941, 0
    %v1947 = vsel %vm336, %v1942, 0
    %1949 = vmatprep.subr.mxu0 0.0
    %1950 = vmatpush1.msra.mxu0 0.0
    %1951 = vmatprep.subr.mxu0 0.0
    %1952 = vmatpush1.msra.mxu0 0.0
    %1953 = vmatprep.subr.mxu0 0.0
    %1954 = vmatpush1.msra.mxu0 0.0
    %1955 = vmatprep.subr.mxu0 0.0
    %1956 = vmatpush1.msra.mxu0 0.0
    %1957 = vmatprep.subr.mxu0 0.0
    %1958 = vmatpush1.msra.mxu0 0.0
    %1959 = vmatprep.subr.mxu0 0.0
    %1960 = vmatpush1.msra.mxu0 0.0
    %1961 = vmatprep.subr.mxu0 0.0
    %1962 = vmatpush1.msra.mxu0 0.0
    %1963 = vmatprep.subr.mxu0 0.0
    %1964 = vmatpush1.msra.mxu0 0.0
    %1965 = vmatprep.subr.mxu0 0.0
    %1966 = vmatpush1.msra.mxu0 0.0
    %1967 = vmatprep.subr.mxu0 0.0
    %1968 = vmatpush1.msra.mxu0 0.0
    %1969 = vmatprep.subr.mxu0 0.0
    %1970 = vmatpush1.msra.mxu0 0.0
    %1971 = vmatprep.subr.mxu0 0.0
    %1972 = vmatpush1.msra.mxu0 0.0
    %1973 = vmatprep.subr.mxu0 0.0
    %1974 = vmatpush1.msra.mxu0 0.0
    %1975 = vmatprep.subr.mxu0 0.0
    %1976 = vmatpush1.msra.mxu0 0.0
    %1977 = vmatprep.subr.mxu0 0.0
    %1978 = vmatpush1.msra.mxu0 %v1830
    %1979 = vmatprep.subr.mxu0 0.0
    %1980 = vmatpush1.msra.mxu0 %v1826
    %1981 = vmatprep.subr.mxu0 0.0
    %1982 = vmatpush2.msra.mxu0 0.0
    %1983 = vmatprep.subr.mxu0 0.0
    %1984 = vmatpush2.msra.mxu0 0.0
    %1985 = vmatprep.subr.mxu0 0.0
    %1986 = vmatpush2.msra.mxu0 0.0
    %1987 = vmatprep.subr.mxu0 0.0
    %1988 = vmatpush2.msra.mxu0 0.0
    %1989 = vmatprep.subr.mxu0 0.0
    %1990 = vmatpush2.msra.mxu0 0.0
    %1991 = vmatprep.subr.mxu0 0.0
    %1992 = vmatpush2.msra.mxu0 0.0
    %1993 = vmatprep.subr.mxu0 0.0
    %1994 = vmatpush2.msra.mxu0 0.0
    %1995 = vmatprep.subr.mxu0 0.0
    %1996 = vmatpush2.msra.mxu0 0.0
    %1997 = vmatprep.subr.mxu0 0.0
    %1998 = vmatpush2.msra.mxu0 0.0
    %1999 = vmatprep.subr.mxu0 0.0
    %2000 = vmatpush2.msra.mxu0 0.0
    %2001 = vmatprep.subr.mxu0 0.0
    %2002 = vmatpush2.msra.mxu0 0.0
    %2003 = vmatprep.subr.mxu0 0.0
    %2004 = vmatpush2.msra.mxu0 0.0
    %2005 = vmatprep.subr.mxu0 0.0
    %2006 = vmatpush2.msra.mxu0 0.0
    %2007 = vmatprep.subr.mxu0 0.0
    %2008 = vmatpush2.msra.mxu0 0.0
    %2009 = vmatprep.subr.mxu0 0.0
    %2010 = vmatpush2.msra.mxu0 0.0
    %2011 = vmatprep.subr.mxu0 0.0
    %2012 = vmatpush2.msra.mxu0 0.0
    %2013 = vmatprep.mubr.f32.mxu0 0.0
    %2014 = vmatmul.mubr.f32.gmra.mxu0 %v1944
    %v2015 = vpop.f32.mrf.mxu0
    %v2016 = vadd.f32 0.0, %v2015
    %v2017 = vpop.f32.mrf.mxu0
    %2018 = vmatprep.mubr.f32.mxu0 0.0
    %2019 = vmatmul.mubr.f32.gmra.mxu0 %v1947
    %v2020 = vpop.f32.mrf.mxu0
    %v2021 = vadd.f32 0.0, %v2020
    %v2022 = vpop.f32.mrf.mxu0
    %2023 = vdwg.mxu0
    %2024 = vrot.lane.b32.xlu0 %v1824, 112
    %v2025 = vpop.permute.xlu0 %2024
    %2026 = vrot.lane.b32.xlu0 %v1828, 112
    %v2027 = vpop.permute.xlu0 %2026
    %2028 = vrot.lane.b32.xlu0 %v1824, 48
    %v2029 = vpop.permute.xlu0 %2028
    %2030 = vrot.lane.b32.xlu0 %v1828, 48
    %v2031 = vpop.permute.xlu0 %2030
    %v2032 = vsel %vm336, %v2025, 0
    %v2034 = vsel %vm336, %v2027, 0
    %v2036 = vsel %vm336, %v2029, 0
    %v2038 = vsel %vm336, %v2031, 0
    %2040 = vmatprep.subr.mxu0 0.0
    %2041 = vmatpush1.xpose.msra.mxu0 0.0
    %2042 = vmatprep.subr.mxu0 0.0
    %2043 = vmatpush1.xpose.msra.mxu0 0.0
    %2044 = vmatprep.subr.mxu0 0.0
    %2045 = vmatpush1.xpose.msra.mxu0 0.0
    %2046 = vmatprep.subr.mxu0 0.0
    %2047 = vmatpush1.xpose.msra.mxu0 0.0
    %2048 = vmatprep.subr.mxu0 0.0
    %2049 = vmatpush1.xpose.msra.mxu0 0.0
    %2050 = vmatprep.subr.mxu0 0.0
    %2051 = vmatpush1.xpose.msra.mxu0 0.0
    %2052 = vmatprep.subr.mxu0 0.0
    %2053 = vmatpush1.xpose.msra.mxu0 0.0
    %2054 = vmatprep.subr.mxu0 0.0
    %2055 = vmatpush1.xpose.msra.mxu0 0.0
    %2056 = vmatprep.subr.mxu0 0.0
    %2057 = vmatpush1.xpose.msra.mxu0 0.0
    %2058 = vmatprep.subr.mxu0 0.0
    %2059 = vmatpush1.xpose.msra.mxu0 0.0
    %2060 = vmatprep.subr.mxu0 0.0
    %2061 = vmatpush1.xpose.msra.mxu0 0.0
    %2062 = vmatprep.subr.mxu0 0.0
    %2063 = vmatpush1.xpose.msra.mxu0 0.0
    %2064 = vmatprep.subr.mxu0 0.0
    %2065 = vmatpush1.xpose.msra.mxu0 0.0
    %2066 = vmatprep.subr.mxu0 0.0
    %2067 = vmatpush1.xpose.msra.mxu0 0.0
    %2068 = vmatprep.subr.mxu0 0.0
    %2069 = vmatpush1.xpose.msra.mxu0 %v2038
    %2070 = vmatprep.subr.mxu0 0.0
    %2071 = vmatpush1.xpose.msra.mxu0 %v2036
    %2072 = vmatprep.subr.mxu0 0.0
    %2073 = vmatpush2.xpose.msra.mxu0 0.0
    %2074 = vmatprep.subr.mxu0 0.0
    %2075 = vmatpush2.xpose.msra.mxu0 0.0
    %2076 = vmatprep.subr.mxu0 0.0
    %2077 = vmatpush2.xpose.msra.mxu0 0.0
    %2078 = vmatprep.subr.mxu0 0.0
    %2079 = vmatpush2.xpose.msra.mxu0 0.0
    %2080 = vmatprep.subr.mxu0 0.0
    %2081 = vmatpush2.xpose.msra.mxu0 0.0
    %2082 = vmatprep.subr.mxu0 0.0
    %2083 = vmatpush2.xpose.msra.mxu0 0.0
    %2084 = vmatprep.subr.mxu0 0.0
    %2085 = vmatpush2.xpose.msra.mxu0 0.0
    %2086 = vmatprep.subr.mxu0 0.0
    %2087 = vmatpush2.xpose.msra.mxu0 0.0
    %2088 = vmatprep.subr.mxu0 0.0
    %2089 = vmatpush2.xpose.msra.mxu0 0.0
    %2090 = vmatprep.subr.mxu0 0.0
    %2091 = vmatpush2.xpose.msra.mxu0 0.0
    %2092 = vmatprep.subr.mxu0 0.0
    %2093 = vmatpush2.xpose.msra.mxu0 0.0
    %2094 = vmatprep.subr.mxu0 0.0
    %2095 = vmatpush2.xpose.msra.mxu0 0.0
    %2096 = vmatprep.subr.mxu0 0.0
    %2097 = vmatpush2.xpose.msra.mxu0 0.0
    %2098 = vmatprep.subr.mxu0 0.0
    %2099 = vmatpush2.xpose.msra.mxu0 0.0
    %2100 = vmatprep.subr.mxu0 0.0
    %2101 = vmatpush2.xpose.msra.mxu0 0.0
    %2102 = vmatprep.subr.mxu0 0.0
    %2103 = vmatpush2.xpose.msra.mxu0 0.0
    %2104 = vmatprep.mubr.f32.mxu0 0.0
    %2105 = vmatmul.mubr.f32.gmra.mxu0 %v2032
    %v2106 = vpop.f32.mrf.mxu0
    %v2107 = vadd.f32 0.0, %v2106
    %v2108 = vpop.f32.mrf.mxu0
    %2109 = vmatprep.mubr.f32.mxu0 0.0
    %2110 = vmatmul.mubr.f32.gmra.mxu0 %v2034
    %v2111 = vpop.f32.mrf.mxu0
    %v2112 = vadd.f32 0.0, %v2111
    %v2113 = vpop.f32.mrf.mxu0
    %2114 = vdwg.mxu0
    %v2115 = vsel %vm336, %v2107, -inf
    %2116 = vmax.xlane.f32.xlu0 %v2115
    %v2117 = vpop.xlane.xlu0 %2116
    %v2118 = vsel %vm336, %v2112, -inf
    %2119 = vmax.xlane.f32.xlu0 %v2118
    %v2120 = vpop.xlane.xlu0 %2119
    %v2121 = vsub.f32 %v2107, %v2117
    %v2122 = vsub.f32 %v2112, %v2120
    %v2123 = vmul.f32 %v2121, 1.442695
    %v2124 = vpow.pop %v2123
    %v2125 = vmul.f32 %v2122, 1.442695
    %v2126 = vpow.pop %v2125
    %v2127 = vsel %vm336, %v2124, 0.0
    %2128 = vadd.xlane.f32.xlu0 %v2127
    %v2129 = vpop.xlane.xlu0 %2128
    %v2130 = vsel %vm336, %v2126, 0.0
    %2131 = vadd.xlane.f32.xlu0 %v2130
    %v2132 = vpop.xlane.xlu0 %2131
    %v2133 = vrcp.pop %v2129
    %v2134 = vrcp.pop %v2132
    %v2135 = vmul.f32 %v2124, %v2133
    %v2136 = vmul.f32 %v2126, %v2134
    %2139 = vrot.lane.b32.xlu0 %v1826, 96
    %v2140 = vpop.permute.xlu0 %2139
    %2141 = vrot.lane.b32.xlu0 %v1830, 96
    %v2142 = vpop.permute.xlu0 %2141
    %v2146 = vsel %vm336, %v2135, 0
    %v2149 = vsel %vm336, %v2136, 0
    %2151 = vmatprep.subr.mxu0 0.0
    %2152 = vmatpush1.msra.mxu0 0.0
    %2153 = vmatprep.subr.mxu0 0.0
    %2154 = vmatpush1.msra.mxu0 0.0
    %2155 = vmatprep.subr.mxu0 0.0
    %2156 = vmatpush1.msra.mxu0 0.0
    %2157 = vmatprep.subr.mxu0 0.0
    %2158 = vmatpush1.msra.mxu0 0.0
    %2159 = vmatprep.subr.mxu0 0.0
    %2160 = vmatpush1.msra.mxu0 0.0
    %2161 = vmatprep.subr.mxu0 0.0
    %2162 = vmatpush1.msra.mxu0 0.0
    %2163 = vmatprep.subr.mxu0 0.0
    %2164 = vmatpush1.msra.mxu0 0.0
    %2165 = vmatprep.subr.mxu0 0.0
    %2166 = vmatpush1.msra.mxu0 0.0
    %2167 = vmatprep.subr.mxu0 0.0
    %2168 = vmatpush1.msra.mxu0 0.0
    %2169 = vmatprep.subr.mxu0 0.0
    %2170 = vmatpush1.msra.mxu0 0.0
    %2171 = vmatprep.subr.mxu0 0.0
    %2172 = vmatpush1.msra.mxu0 0.0
    %2173 = vmatprep.subr.mxu0 0.0
    %2174 = vmatpush1.msra.mxu0 0.0
    %2175 = vmatprep.subr.mxu0 0.0
    %2176 = vmatpush1.msra.mxu0 0.0
    %2177 = vmatprep.subr.mxu0 0.0
    %2178 = vmatpush1.msra.mxu0 0.0
    %2179 = vmatprep.subr.mxu0 0.0
    %2180 = vmatpush1.msra.mxu0 %v2142
    %2181 = vmatprep.subr.mxu0 0.0
    %2182 = vmatpush1.msra.mxu0 %v2140
    %2183 = vmatprep.subr.mxu0 0.0
    %2184 = vmatpush2.msra.mxu0 0.0
    %2185 = vmatprep.subr.mxu0 0.0
    %2186 = vmatpush2.msra.mxu0 0.0
    %2187 = vmatprep.subr.mxu0 0.0
    %2188 = vmatpush2.msra.mxu0 0.0
    %2189 = vmatprep.subr.mxu0 0.0
    %2190 = vmatpush2.msra.mxu0 0.0
    %2191 = vmatprep.subr.mxu0 0.0
    %2192 = vmatpush2.msra.mxu0 0.0
    %2193 = vmatprep.subr.mxu0 0.0
    %2194 = vmatpush2.msra.mxu0 0.0
    %2195 = vmatprep.subr.mxu0 0.0
    %2196 = vmatpush2.msra.mxu0 0.0
    %2197 = vmatprep.subr.mxu0 0.0
    %2198 = vmatpush2.msra.mxu0 0.0
    %2199 = vmatprep.subr.mxu0 0.0
    %2200 = vmatpush2.msra.mxu0 0.0
    %2201 = vmatprep.subr.mxu0 0.0
    %2202 = vmatpush2.msra.mxu0 0.0
    %2203 = vmatprep.subr.mxu0 0.0
    %2204 = vmatpush2.msra.mxu0 0.0
    %2205 = vmatprep.subr.mxu0 0.0
    %2206 = vmatpush2.msra.mxu0 0.0
    %2207 = vmatprep.subr.mxu0 0.0
    %2208 = vmatpush2.msra.mxu0 0.0
    %2209 = vmatprep.subr.mxu0 0.0
    %2210 = vmatpush2.msra.mxu0 0.0
    %2211 = vmatprep.subr.mxu0 0.0
    %2212 = vmatpush2.msra.mxu0 0.0
    %2213 = vmatprep.subr.mxu0 0.0
    %2214 = vmatpush2.msra.mxu0 0.0
    %2215 = vmatprep.mubr.f32.mxu0 0.0
    %2216 = vmatmul.mubr.f32.gmra.mxu0 %v2146
    %v2217 = vpop.f32.mrf.mxu0
    %v2218 = vadd.f32 0.0, %v2217
    %v2219 = vpop.f32.mrf.mxu0
    %2220 = vmatprep.mubr.f32.mxu0 0.0
    %2221 = vmatmul.mubr.f32.gmra.mxu0 %v2149
    %v2222 = vpop.f32.mrf.mxu0
    %v2223 = vadd.f32 0.0, %v2222
    %v2224 = vpop.f32.mrf.mxu0
    %2225 = vdwg.mxu0
    %2226 = vrot.lane.b32.xlu0 %v1824, 96
    %v2227 = vpop.permute.xlu0 %2226
    %2228 = vrot.lane.b32.xlu0 %v1828, 96
    %v2229 = vpop.permute.xlu0 %2228
    %2230 = vrot.lane.b32.xlu0 %v1824, 32
    %v2231 = vpop.permute.xlu0 %2230
    %2232 = vrot.lane.b32.xlu0 %v1828, 32
    %v2233 = vpop.permute.xlu0 %2232
    %v2234 = vsel %vm336, %v2227, 0
    %v2236 = vsel %vm336, %v2229, 0
    %v2238 = vsel %vm336, %v2231, 0
    %v2240 = vsel %vm336, %v2233, 0
    %2242 = vmatprep.subr.mxu0 0.0
    %2243 = vmatpush1.xpose.msra.mxu0 0.0
    %2244 = vmatprep.subr.mxu0 0.0
    %2245 = vmatpush1.xpose.msra.mxu0 0.0
    %2246 = vmatprep.subr.mxu0 0.0
    %2247 = vmatpush1.xpose.msra.mxu0 0.0
    %2248 = vmatprep.subr.mxu0 0.0
    %2249 = vmatpush1.xpose.msra.mxu0 0.0
    %2250 = vmatprep.subr.mxu0 0.0
    %2251 = vmatpush1.xpose.msra.mxu0 0.0
    %2252 = vmatprep.subr.mxu0 0.0
    %2253 = vmatpush1.xpose.msra.mxu0 0.0
    %2254 = vmatprep.subr.mxu0 0.0
    %2255 = vmatpush1.xpose.msra.mxu0 0.0
    %2256 = vmatprep.subr.mxu0 0.0
    %2257 = vmatpush1.xpose.msra.mxu0 0.0
    %2258 = vmatprep.subr.mxu0 0.0
    %2259 = vmatpush1.xpose.msra.mxu0 0.0
    %2260 = vmatprep.subr.mxu0 0.0
    %2261 = vmatpush1.xpose.msra.mxu0 0.0
    %2262 = vmatprep.subr.mxu0 0.0
    %2263 = vmatpush1.xpose.msra.mxu0 0.0
    %2264 = vmatprep.subr.mxu0 0.0
    %2265 = vmatpush1.xpose.msra.mxu0 0.0
    %2266 = vmatprep.subr.mxu0 0.0
    %2267 = vmatpush1.xpose.msra.mxu0 0.0
    %2268 = vmatprep.subr.mxu0 0.0
    %2269 = vmatpush1.xpose.msra.mxu0 0.0
    %2270 = vmatprep.subr.mxu0 0.0
    %2271 = vmatpush1.xpose.msra.mxu0 %v2240
    %2272 = vmatprep.subr.mxu0 0.0
    %2273 = vmatpush1.xpose.msra.mxu0 %v2238
    %2274 = vmatprep.subr.mxu0 0.0
    %2275 = vmatpush2.xpose.msra.mxu0 0.0
    %2276 = vmatprep.subr.mxu0 0.0
    %2277 = vmatpush2.xpose.msra.mxu0 0.0
    %2278 = vmatprep.subr.mxu0 0.0
    %2279 = vmatpush2.xpose.msra.mxu0 0.0
    %2280 = vmatprep.subr.mxu0 0.0
    %2281 = vmatpush2.xpose.msra.mxu0 0.0
    %2282 = vmatprep.subr.mxu0 0.0
    %2283 = vmatpush2.xpose.msra.mxu0 0.0
    %2284 = vmatprep.subr.mxu0 0.0
    %2285 = vmatpush2.xpose.msra.mxu0 0.0
    %2286 = vmatprep.subr.mxu0 0.0
    %2287 = vmatpush2.xpose.msra.mxu0 0.0
    %2288 = vmatprep.subr.mxu0 0.0
    %2289 = vmatpush2.xpose.msra.mxu0 0.0
    %2290 = vmatprep.subr.mxu0 0.0
    %2291 = vmatpush2.xpose.msra.mxu0 0.0
    %2292 = vmatprep.subr.mxu0 0.0
    %2293 = vmatpush2.xpose.msra.mxu0 0.0
    %2294 = vmatprep.subr.mxu0 0.0
    %2295 = vmatpush2.xpose.msra.mxu0 0.0
    %2296 = vmatprep.subr.mxu0 0.0
    %2297 = vmatpush2.xpose.msra.mxu0 0.0
    %2298 = vmatprep.subr.mxu0 0.0
    %2299 = vmatpush2.xpose.msra.mxu0 0.0
    %2300 = vmatprep.subr.mxu0 0.0
    %2301 = vmatpush2.xpose.msra.mxu0 0.0
    %2302 = vmatprep.subr.mxu0 0.0
    %2303 = vmatpush2.xpose.msra.mxu0 0.0
    %2304 = vmatprep.subr.mxu0 0.0
    %2305 = vmatpush2.xpose.msra.mxu0 0.0
    %2306 = vmatprep.mubr.f32.mxu0 0.0
    %2307 = vmatmul.mubr.f32.gmra.mxu0 %v2234
    %v2308 = vpop.f32.mrf.mxu0
    %v2309 = vadd.f32 0.0, %v2308
    %v2310 = vpop.f32.mrf.mxu0
    %2311 = vmatprep.mubr.f32.mxu0 0.0
    %2312 = vmatmul.mubr.f32.gmra.mxu0 %v2236
    %v2313 = vpop.f32.mrf.mxu0
    %v2314 = vadd.f32 0.0, %v2313
    %v2315 = vpop.f32.mrf.mxu0
    %2316 = vdwg.mxu0
    %v2317 = vsel %vm336, %v2309, -inf
    %2318 = vmax.xlane.f32.xlu0 %v2317
    %v2319 = vpop.xlane.xlu0 %2318
    %v2320 = vsel %vm336, %v2314, -inf
    %2321 = vmax.xlane.f32.xlu0 %v2320
    %v2322 = vpop.xlane.xlu0 %2321
    %v2323 = vsub.f32 %v2309, %v2319
    %v2324 = vsub.f32 %v2314, %v2322
    %v2325 = vmul.f32 %v2323, 1.442695
    %v2326 = vpow.pop %v2325
    %v2327 = vmul.f32 %v2324, 1.442695
    %v2328 = vpow.pop %v2327
    %v2329 = vsel %vm336, %v2326, 0.0
    %2330 = vadd.xlane.f32.xlu0 %v2329
    %v2331 = vpop.xlane.xlu0 %2330
    %v2332 = vsel %vm336, %v2328, 0.0
    %2333 = vadd.xlane.f32.xlu0 %v2332
    %v2334 = vpop.xlane.xlu0 %2333
    %v2335 = vrcp.pop %v2331
    %v2336 = vrcp.pop %v2334
    %v2337 = vmul.f32 %v2326, %v2335
    %v2338 = vmul.f32 %v2328, %v2336
    %2339 = vrot.lane.b32.xlu0 %v1826, 64
    %v2340 = vpop.permute.xlu0 %2339
    %2341 = vrot.lane.b32.xlu0 %v1830, 64
    %v2342 = vpop.permute.xlu0 %2341
    %v2346 = vsel %vm336, %v2337, 0
    %v2349 = vsel %vm336, %v2338, 0
    %2351 = vmatprep.subr.mxu0 0.0
    %2352 = vmatpush1.msra.mxu0 0.0
    %2353 = vmatprep.subr.mxu0 0.0
    %2354 = vmatpush1.msra.mxu0 0.0
    %2355 = vmatprep.subr.mxu0 0.0
    %2356 = vmatpush1.msra.mxu0 0.0
    %2357 = vmatprep.subr.mxu0 0.0
    %2358 = vmatpush1.msra.mxu0 0.0
    %2359 = vmatprep.subr.mxu0 0.0
    %2360 = vmatpush1.msra.mxu0 0.0
    %2361 = vmatprep.subr.mxu0 0.0
    %2362 = vmatpush1.msra.mxu0 0.0
    %2363 = vmatprep.subr.mxu0 0.0
    %2364 = vmatpush1.msra.mxu0 0.0
    %2365 = vmatprep.subr.mxu0 0.0
    %2366 = vmatpush1.msra.mxu0 0.0
    %2367 = vmatprep.subr.mxu0 0.0
    %2368 = vmatpush1.msra.mxu0 0.0
    %2369 = vmatprep.subr.mxu0 0.0
    %2370 = vmatpush1.msra.mxu0 0.0
    %2371 = vmatprep.subr.mxu0 0.0
    %2372 = vmatpush1.msra.mxu0 0.0
    %2373 = vmatprep.subr.mxu0 0.0
    %2374 = vmatpush1.msra.mxu0 0.0
    %2375 = vmatprep.subr.mxu0 0.0
    %2376 = vmatpush1.msra.mxu0 0.0
    %2377 = vmatprep.subr.mxu0 0.0
    %2378 = vmatpush1.msra.mxu0 0.0
    %2379 = vmatprep.subr.mxu0 0.0
    %2380 = vmatpush1.msra.mxu0 %v2342
    %2381 = vmatprep.subr.mxu0 0.0
    %2382 = vmatpush1.msra.mxu0 %v2340
    %2383 = vmatprep.subr.mxu0 0.0
    %2384 = vmatpush2.msra.mxu0 0.0
    %2385 = vmatprep.subr.mxu0 0.0
    %2386 = vmatpush2.msra.mxu0 0.0
    %2387 = vmatprep.subr.mxu0 0.0
    %2388 = vmatpush2.msra.mxu0 0.0
    %2389 = vmatprep.subr.mxu0 0.0
    %2390 = vmatpush2.msra.mxu0 0.0
    %2391 = vmatprep.subr.mxu0 0.0
    %2392 = vmatpush2.msra.mxu0 0.0
    %2393 = vmatprep.subr.mxu0 0.0
    %2394 = vmatpush2.msra.mxu0 0.0
    %2395 = vmatprep.subr.mxu0 0.0
    %2396 = vmatpush2.msra.mxu0 0.0
    %2397 = vmatprep.subr.mxu0 0.0
    %2398 = vmatpush2.msra.mxu0 0.0
    %2399 = vmatprep.subr.mxu0 0.0
    %2400 = vmatpush2.msra.mxu0 0.0
    %2401 = vmatprep.subr.mxu0 0.0
    %2402 = vmatpush2.msra.mxu0 0.0
    %2403 = vmatprep.subr.mxu0 0.0
    %2404 = vmatpush2.msra.mxu0 0.0
    %2405 = vmatprep.subr.mxu0 0.0
    %2406 = vmatpush2.msra.mxu0 0.0
    %2407 = vmatprep.subr.mxu0 0.0
    %2408 = vmatpush2.msra.mxu0 0.0
    %2409 = vmatprep.subr.mxu0 0.0
    %2410 = vmatpush2.msra.mxu0 0.0
    %2411 = vmatprep.subr.mxu0 0.0
    %2412 = vmatpush2.msra.mxu0 0.0
    %2413 = vmatprep.subr.mxu0 0.0
    %2414 = vmatpush2.msra.mxu0 0.0
    %2415 = vmatprep.mubr.f32.mxu0 0.0
    %2416 = vmatmul.mubr.f32.gmra.mxu0 %v2346
    %v2417 = vpop.f32.mrf.mxu0
    %v2418 = vadd.f32 0.0, %v2417
    %v2419 = vpop.f32.mrf.mxu0
    %2420 = vmatprep.mubr.f32.mxu0 0.0
    %2421 = vmatmul.mubr.f32.gmra.mxu0 %v2349
    %v2422 = vpop.f32.mrf.mxu0
    %v2423 = vadd.f32 0.0, %v2422
    %v2424 = vpop.f32.mrf.mxu0
    %2425 = vdwg.mxu0
    %2426 = vrot.lane.b32.xlu0 %v1824, 80
    %v2427 = vpop.permute.xlu0 %2426
    %2428 = vrot.lane.b32.xlu0 %v1828, 80
    %v2429 = vpop.permute.xlu0 %2428
    %2430 = vrot.lane.b32.xlu0 %v1824, 16
    %v2431 = vpop.permute.xlu0 %2430
    %2432 = vrot.lane.b32.xlu0 %v1828, 16
    %v2433 = vpop.permute.xlu0 %2432
    %v2434 = vsel %vm336, %v2427, 0
    %v2436 = vsel %vm336, %v2429, 0
    %v2438 = vsel %vm336, %v2431, 0
    %v2440 = vsel %vm336, %v2433, 0
    %2442 = vmatprep.subr.mxu0 0.0
    %2443 = vmatpush1.xpose.msra.mxu0 0.0
    %2444 = vmatprep.subr.mxu0 0.0
    %2445 = vmatpush1.xpose.msra.mxu0 0.0
    %2446 = vmatprep.subr.mxu0 0.0
    %2447 = vmatpush1.xpose.msra.mxu0 0.0
    %2448 = vmatprep.subr.mxu0 0.0
    %2449 = vmatpush1.xpose.msra.mxu0 0.0
    %2450 = vmatprep.subr.mxu0 0.0
    %2451 = vmatpush1.xpose.msra.mxu0 0.0
    %2452 = vmatprep.subr.mxu0 0.0
    %2453 = vmatpush1.xpose.msra.mxu0 0.0
    %2454 = vmatprep.subr.mxu0 0.0
    %2455 = vmatpush1.xpose.msra.mxu0 0.0
    %2456 = vmatprep.subr.mxu0 0.0
    %2457 = vmatpush1.xpose.msra.mxu0 0.0
    %2458 = vmatprep.subr.mxu0 0.0
    %2459 = vmatpush1.xpose.msra.mxu0 0.0
    %2460 = vmatprep.subr.mxu0 0.0
    %2461 = vmatpush1.xpose.msra.mxu0 0.0
    %2462 = vmatprep.subr.mxu0 0.0
    %2463 = vmatpush1.xpose.msra.mxu0 0.0
    %2464 = vmatprep.subr.mxu0 0.0
    %2465 = vmatpush1.xpose.msra.mxu0 0.0
    %2466 = vmatprep.subr.mxu0 0.0
    %2467 = vmatpush1.xpose.msra.mxu0 0.0
    %2468 = vmatprep.subr.mxu0 0.0
    %2469 = vmatpush1.xpose.msra.mxu0 0.0
    %2470 = vmatprep.subr.mxu0 0.0
    %2471 = vmatpush1.xpose.msra.mxu0 %v2440
    %2472 = vmatprep.subr.mxu0 0.0
    %2473 = vmatpush1.xpose.msra.mxu0 %v2438
    %2474 = vmatprep.subr.mxu0 0.0
    %2475 = vmatpush2.xpose.msra.mxu0 0.0
    %2476 = vmatprep.subr.mxu0 0.0
    %2477 = vmatpush2.xpose.msra.mxu0 0.0
    %2478 = vmatprep.subr.mxu0 0.0
    %2479 = vmatpush2.xpose.msra.mxu0 0.0
    %2480 = vmatprep.subr.mxu0 0.0
    %2481 = vmatpush2.xpose.msra.mxu0 0.0
    %2482 = vmatprep.subr.mxu0 0.0
    %2483 = vmatpush2.xpose.msra.mxu0 0.0
    %2484 = vmatprep.subr.mxu0 0.0
    %2485 = vmatpush2.xpose.msra.mxu0 0.0
    %2486 = vmatprep.subr.mxu0 0.0
    %2487 = vmatpush2.xpose.msra.mxu0 0.0
    %2488 = vmatprep.subr.mxu0 0.0
    %2489 = vmatpush2.xpose.msra.mxu0 0.0
    %2490 = vmatprep.subr.mxu0 0.0
    %2491 = vmatpush2.xpose.msra.mxu0 0.0
    %2492 = vmatprep.subr.mxu0 0.0
    %2493 = vmatpush2.xpose.msra.mxu0 0.0
    %2494 = vmatprep.subr.mxu0 0.0
    %2495 = vmatpush2.xpose.msra.mxu0 0.0
    %2496 = vmatprep.subr.mxu0 0.0
    %2497 = vmatpush2.xpose.msra.mxu0 0.0
    %2498 = vmatprep.subr.mxu0 0.0
    %2499 = vmatpush2.xpose.msra.mxu0 0.0
    %2500 = vmatprep.subr.mxu0 0.0
    %2501 = vmatpush2.xpose.msra.mxu0 0.0
    %2502 = vmatprep.subr.mxu0 0.0
    %2503 = vmatpush2.xpose.msra.mxu0 0.0
    %2504 = vmatprep.subr.mxu0 0.0
    %2505 = vmatpush2.xpose.msra.mxu0 0.0
    %2506 = vmatprep.mubr.f32.mxu0 0.0
    %2507 = vmatmul.mubr.f32.gmra.mxu0 %v2434
    %v2508 = vpop.f32.mrf.mxu0
    %v2509 = vadd.f32 0.0, %v2508
    %v2510 = vpop.f32.mrf.mxu0
    %2511 = vmatprep.mubr.f32.mxu0 0.0
    %2512 = vmatmul.mubr.f32.gmra.mxu0 %v2436
    %v2513 = vpop.f32.mrf.mxu0
    %v2514 = vadd.f32 0.0, %v2513
    %v2515 = vpop.f32.mrf.mxu0
    %2516 = vdwg.mxu0
    %v2517 = vsel %vm336, %v2509, -inf
    %2518 = vmax.xlane.f32.xlu0 %v2517
    %v2519 = vpop.xlane.xlu0 %2518
    %v2520 = vsel %vm336, %v2514, -inf
    %2521 = vmax.xlane.f32.xlu0 %v2520
    %v2522 = vpop.xlane.xlu0 %2521
    %v2523 = vsub.f32 %v2509, %v2519
    %v2524 = vsub.f32 %v2514, %v2522
    %v2525 = vmul.f32 %v2523, 1.442695
    %v2526 = vpow.pop %v2525
    %v2527 = vmul.f32 %v2524, 1.442695
    %v2528 = vpow.pop %v2527
    %v2529 = vsel %vm336, %v2526, 0.0
    %2530 = vadd.xlane.f32.xlu0 %v2529
    %v2531 = vpop.xlane.xlu0 %2530
    %v2532 = vsel %vm336, %v2528, 0.0
    %2533 = vadd.xlane.f32.xlu0 %v2532
    %v2534 = vpop.xlane.xlu0 %2533
    %v2535 = vrcp.pop %v2531
    %v2536 = vrcp.pop %v2534
    %v2537 = vmul.f32 %v2526, %v2535
    %v2538 = vmul.f32 %v2528, %v2536
    %2539 = vrot.lane.b32.xlu0 %v1826, 32
    %v2540 = vpop.permute.xlu0 %2539
    %2541 = vrot.lane.b32.xlu0 %v1830, 32
    %v2542 = vpop.permute.xlu0 %2541
    %v2546 = vsel %vm336, %v2537, 0
    %v2549 = vsel %vm336, %v2538, 0
    %2551 = vmatprep.subr.mxu0 0.0
    %2552 = vmatpush1.msra.mxu0 0.0
    %2553 = vmatprep.subr.mxu0 0.0
    %2554 = vmatpush1.msra.mxu0 0.0
    %2555 = vmatprep.subr.mxu0 0.0
    %2556 = vmatpush1.msra.mxu0 0.0
    %2557 = vmatprep.subr.mxu0 0.0
    %2558 = vmatpush1.msra.mxu0 0.0
    %2559 = vmatprep.subr.mxu0 0.0
    %2560 = vmatpush1.msra.mxu0 0.0
    %2561 = vmatprep.subr.mxu0 0.0
    %2562 = vmatpush1.msra.mxu0 0.0
    %2563 = vmatprep.subr.mxu0 0.0
    %2564 = vmatpush1.msra.mxu0 0.0
    %2565 = vmatprep.subr.mxu0 0.0
    %2566 = vmatpush1.msra.mxu0 0.0
    %2567 = vmatprep.subr.mxu0 0.0
    %2568 = vmatpush1.msra.mxu0 0.0
    %2569 = vmatprep.subr.mxu0 0.0
    %2570 = vmatpush1.msra.mxu0 0.0
    %2571 = vmatprep.subr.mxu0 0.0
    %2572 = vmatpush1.msra.mxu0 0.0
    %2573 = vmatprep.subr.mxu0 0.0
    %2574 = vmatpush1.msra.mxu0 0.0
    %2575 = vmatprep.subr.mxu0 0.0
    %2576 = vmatpush1.msra.mxu0 0.0
    %2577 = vmatprep.subr.mxu0 0.0
    %2578 = vmatpush1.msra.mxu0 0.0
    %2579 = vmatprep.subr.mxu0 0.0
    %2580 = vmatpush1.msra.mxu0 %v2542
    %2581 = vmatprep.subr.mxu0 0.0
    %2582 = vmatpush1.msra.mxu0 %v2540
    %2583 = vmatprep.subr.mxu0 0.0
    %2584 = vmatpush2.msra.mxu0 0.0
    %2585 = vmatprep.subr.mxu0 0.0
    %2586 = vmatpush2.msra.mxu0 0.0
    %2587 = vmatprep.subr.mxu0 0.0
    %2588 = vmatpush2.msra.mxu0 0.0
    %2589 = vmatprep.subr.mxu0 0.0
    %2590 = vmatpush2.msra.mxu0 0.0
    %2591 = vmatprep.subr.mxu0 0.0
    %2592 = vmatpush2.msra.mxu0 0.0
    %2593 = vmatprep.subr.mxu0 0.0
    %2594 = vmatpush2.msra.mxu0 0.0
    %2595 = vmatprep.subr.mxu0 0.0
    %2596 = vmatpush2.msra.mxu0 0.0
    %2597 = vmatprep.subr.mxu0 0.0
    %2598 = vmatpush2.msra.mxu0 0.0
    %2599 = vmatprep.subr.mxu0 0.0
    %2600 = vmatpush2.msra.mxu0 0.0
    %2601 = vmatprep.subr.mxu0 0.0
    %2602 = vmatpush2.msra.mxu0 0.0
    %2603 = vmatprep.subr.mxu0 0.0
    %2604 = vmatpush2.msra.mxu0 0.0
    %2605 = vmatprep.subr.mxu0 0.0
    %2606 = vmatpush2.msra.mxu0 0.0
    %2607 = vmatprep.subr.mxu0 0.0
    %2608 = vmatpush2.msra.mxu0 0.0
    %2609 = vmatprep.subr.mxu0 0.0
    %2610 = vmatpush2.msra.mxu0 0.0
    %2611 = vmatprep.subr.mxu0 0.0
    %2612 = vmatpush2.msra.mxu0 0.0
    %2613 = vmatprep.subr.mxu0 0.0
    %2614 = vmatpush2.msra.mxu0 0.0
    %2615 = vmatprep.mubr.f32.mxu0 0.0
    %2616 = vmatmul.mubr.f32.gmra.mxu0 %v2546
    %v2617 = vpop.f32.mrf.mxu0
    %v2618 = vadd.f32 0.0, %v2617
    %v2619 = vpop.f32.mrf.mxu0
    %2620 = vmatprep.mubr.f32.mxu0 0.0
    %2621 = vmatmul.mubr.f32.gmra.mxu0 %v2549
    %v2622 = vpop.f32.mrf.mxu0
    %v2623 = vadd.f32 0.0, %v2622
    %v2624 = vpop.f32.mrf.mxu0
    %2625 = vdwg.mxu0
    %2628 = vrot.lane.b32.xlu0 %v2218, 32
    %v2629 = vpop.permute.xlu0 %2628
    %2630 = vrot.lane.b32.xlu0 %v2223, 32
    %v2631 = vpop.permute.xlu0 %2630
    %2636 = vrot.lane.b32.xlu0 %v2418, 64
    %v2637 = vpop.permute.xlu0 %2636
    %2638 = vrot.lane.b32.xlu0 %v2423, 64
    %v2639 = vpop.permute.xlu0 %2638
    %2644 = vrot.lane.b32.xlu0 %v2618, 96
    %v2645 = vpop.permute.xlu0 %2644
    %2646 = vrot.lane.b32.xlu0 %v2623, 96
    %v2647 = vpop.permute.xlu0 %2646
    %v2650 = vsel %vm131, %v2016, %v2629
    %v2651 = vsel %vm131, %v2021, %v2631
    %v2652 = vsel %vm1151, %v2650, %v2637
    %v2653 = vsel %vm1151, %v2651, %v2639
    %v2654 = vsel %vm1154, %v2652, %v2645
    %v2655 = vsel %vm1154, %v2653, %v2647
    %v2656 = vpack.c.bf16 %v2655, %v2654
    %s2657 = scalar_lea.vmem [#allocation7], 64
    %v2658 = vld [vmem:[%s2657] sm:$0xf]
    %v2659 = vld [vmem:[%s2657 + $0x4] sm:$0xf]
    %v2660 = vld [vmem:[%s2657 + $0x8] sm:$0xf]
    %v2661 = vld [vmem:[%s2657 + $0xc] sm:$0xf]
    %v2662 = vld [vmem:[%s2657 + $0x10] sm:$0xf]
    %v2663 = vld [vmem:[%s2657 + $0x14] sm:$0xf]
    %v2664 = vld [vmem:[%s2657 + $0x18] sm:$0xf]
    %v2665 = vld [vmem:[%s2657 + $0x1c] sm:$0xf]
    %v2666 = vld [vmem:[%s2657 + $0x20] sm:$0xf]
    %v2667 = vld [vmem:[%s2657 + $0x24] sm:$0xf]
    %v2668 = vld [vmem:[%s2657 + $0x28] sm:$0xf]
    %v2669 = vld [vmem:[%s2657 + $0x2c] sm:$0xf]
    %v2670 = vld [vmem:[%s2657 + $0x30] sm:$0xf]
    %v2671 = vld [vmem:[%s2657 + $0x34] sm:$0xf]
    %v2672 = vld [vmem:[%s2657 + $0x38] sm:$0xf]
    %v2673 = vld [vmem:[%s2657 + $0x3c] sm:$0xf]
    %v2690 = vunpack.c.l.b16 %v2658
    %v2691 = vunpack.c.l.b16 %v2659
    %v2692 = vunpack.c.l.b16 %v2660
    %v2693 = vunpack.c.l.b16 %v2661
    %v2694 = vunpack.c.l.b16 %v2662
    %v2695 = vunpack.c.l.b16 %v2663
    %v2696 = vunpack.c.l.b16 %v2664
    %v2697 = vunpack.c.l.b16 %v2665
    %v2698 = vunpack.c.l.b16 %v2666
    %v2699 = vunpack.c.l.b16 %v2667
    %v2700 = vunpack.c.l.b16 %v2668
    %v2701 = vunpack.c.l.b16 %v2669
    %v2702 = vunpack.c.l.b16 %v2670
    %v2703 = vunpack.c.l.b16 %v2671
    %v2704 = vunpack.c.l.b16 %v2672
    %v2705 = vunpack.c.l.b16 %v2673
    %v2706 = vpack.c.b16 %v2691, %v2690
    %v2707 = vpack.c.b16 %v2693, %v2692
    %v2708 = vpack.c.b16 %v2695, %v2694
    %v2709 = vpack.c.b16 %v2697, %v2696
    %v2710 = vpack.c.b16 %v2699, %v2698
    %v2711 = vpack.c.b16 %v2701, %v2700
    %v2712 = vpack.c.b16 %v2703, %v2702
    %v2713 = vpack.c.b16 %v2705, %v2704
    %2722 = vmatprep.subr.bf16.mxu0 0
    %2723 = vmatpush1.bf16.msra.mxu0 %v2713
    %2724 = vmatprep.subr.bf16.mxu0 0
    %2725 = vmatpush1.bf16.msra.mxu0 %v2712
    %2726 = vmatprep.subr.bf16.mxu0 0
    %2727 = vmatpush1.bf16.msra.mxu0 %v2711
    %2728 = vmatprep.subr.bf16.mxu0 0
    %2729 = vmatpush1.bf16.msra.mxu0 %v2710
    %2730 = vmatprep.subr.bf16.mxu0 0
    %2731 = vmatpush1.bf16.msra.mxu0 %v2709
    %2732 = vmatprep.subr.bf16.mxu0 0
    %2733 = vmatpush1.bf16.msra.mxu0 %v2708
    %2734 = vmatprep.subr.bf16.mxu0 0
    %2735 = vmatpush1.bf16.msra.mxu0 %v2707
    %2736 = vmatprep.subr.bf16.mxu0 0
    %2737 = vmatpush1.bf16.msra.mxu0 %v2706
    %2738 = vmatprep.subr.bf16.mxu0 0
    %2739 = vmatpush2.bf16.msra.mxu0 0
    %2740 = vmatprep.subr.bf16.mxu0 0
    %2741 = vmatpush2.bf16.msra.mxu0 0
    %2742 = vmatprep.subr.bf16.mxu0 0
    %2743 = vmatpush2.bf16.msra.mxu0 0
    %2744 = vmatprep.subr.bf16.mxu0 0
    %2745 = vmatpush2.bf16.msra.mxu0 0
    %2746 = vmatprep.subr.bf16.mxu0 0
    %2747 = vmatpush2.bf16.msra.mxu0 0
    %2748 = vmatprep.subr.bf16.mxu0 0
    %2749 = vmatpush2.bf16.msra.mxu0 0
    %2750 = vmatprep.subr.bf16.mxu0 0
    %2751 = vmatpush2.bf16.msra.mxu0 0
    %2752 = vmatprep.subr.bf16.mxu0 0
    %2753 = vmatpush2.bf16.msra.mxu0 0
    %2754 = vmatprep.mubr.bf16.mxu0 0
    %2755 = vmatmul.mubr.bf16.gmra.mxu0 %v2656
    %v2756 = vpop.f32.mrf.mxu0
    %v2757 = vadd.f32 0.0, %v2756
    %v2758 = vpop.f32.mrf.mxu0
    %v2759 = vpop.f32.mrf.mxu0
    %v2760 = vadd.f32 0.0, %v2759
    %v2761 = vpop.f32.mrf.mxu0
    %2762 = vdwg.mxu0
    %v2763 = vadd.f32 %v1672, %v2757
    %v2764 = vadd.f32 %v1673, %v2760
    %v2765 = vlaneseq
    %v2766 = vshrl.u32 %v2765, 7
    %v2767 = vsub.s32 0, %v2766
    %v2768 = vrot.slane %v1679, %v2767
    %v2769 = vadd.f32 %v2763, %v2768
    %v2770 = vadd.f32 %v2764, %v2768
    %2771 = vadd.xlane.f32.xlu0 %v2769
    %v2772 = vpop.xlane.xlu0 %2771
    %2773 = vadd.xlane.f32.xlu0 %v2770
    %v2774 = vpop.xlane.xlu0 %2773
    %v2775 = vmul.f32 %v2772, %v1275
    %v2776 = vmul.f32 %v2774, %v1275
    %v2777 = vsub.f32 %v2769, %v2775
    %v2778 = vsub.f32 %v2770, %v2776
    %v2779 = vmul.f32 %v2777, %v2777
    %v2780 = vmul.f32 %v2778, %v2778
    %2781 = vadd.xlane.f32.xlu0 %v2779
    %v2782 = vpop.xlane.xlu0 %2781
    %2783 = vadd.xlane.f32.xlu0 %v2780
    %v2784 = vpop.xlane.xlu0 %2783
    %v2785 = vmul.f32 %v2782, %v1275
    %v2786 = vmul.f32 %v2784, %v1275
    %v2787 = vadd.f32 %v2785, 1e-05
    %v2788 = vadd.f32 %v2786, 1e-05
    %v2789 = vrsqrt.pop %v2787
    %v2790 = vrsqrt.pop %v2788
    %v2791 = vmul.f32 %v2777, %v2789
    %v2792 = vmul.f32 %v2778, %v2790
    %v2793 = vlaneseq
    %v2794 = vshrl.u32 %v2793, 7
    %v2795 = vsub.s32 1, %v2794
    %v2796 = vrot.slane %v1679, %v2795
    %v2797 = vmul.f32 %v2791, %v2796
    %v2798 = vmul.f32 %v2792, %v2796
    %v2799 = vlaneseq
    %v2800 = vshrl.u32 %v2799, 7
    %v2801 = vsub.s32 2, %v2800
    %v2802 = vrot.slane %v1679, %v2801
    %v2803 = vadd.f32 %v2797, %v2802
    %v2804 = vadd.f32 %v2798, %v2802
    %v2805 = vpack.c.bf16 %v2804, %v2803
    %s2806 = scalar_lea.vmem [#allocation8], 128
    %v2807 = vld [vmem:[%s2806] sm:$0xff]
    %v2808 = vld [vmem:[%s2806 + $0x8] sm:$0xff]
    %v2809 = vld [vmem:[%s2806 + $0x10] sm:$0xff]
    %v2810 = vld [vmem:[%s2806 + $0x18] sm:$0xff]
    %v2811 = vld [vmem:[%s2806 + $0x20] sm:$0xff]
    %v2812 = vld [vmem:[%s2806 + $0x28] sm:$0xff]
    %v2813 = vld [vmem:[%s2806 + $0x30] sm:$0xff]
    %v2814 = vld [vmem:[%s2806 + $0x38] sm:$0xff]
    %v2815 = vld [vmem:[%s2806 + $0x40] sm:$0xff]
    %v2816 = vld [vmem:[%s2806 + $0x48] sm:$0xff]
    %v2817 = vld [vmem:[%s2806 + $0x50] sm:$0xff]
    %v2818 = vld [vmem:[%s2806 + $0x58] sm:$0xff]
    %v2819 = vld [vmem:[%s2806 + $0x60] sm:$0xff]
    %v2820 = vld [vmem:[%s2806 + $0x68] sm:$0xff]
    %v2821 = vld [vmem:[%s2806 + $0x70] sm:$0xff]
    %v2822 = vld [vmem:[%s2806 + $0x78] sm:$0xff]
    %v2824 = vlaneseq
    %v2825 = vshrl.u32 %v2824, 7
    %v2826 = vsub.s32 0, %v2825
    %v2827 = vrot.slane %v1677, %v2826
    %v2828 = vlaneseq
    %v2829 = vshrl.u32 %v2828, 7
    %v2830 = vsub.s32 1, %v2829
    %v2831 = vrot.slane %v1677, %v2830
    %v2850 = vunpack.c.l.b16 %v2807
    %v2851 = vunpack.c.h.b16 %v2807
    %v2852 = vunpack.c.l.b16 %v2808
    %v2853 = vunpack.c.h.b16 %v2808
    %v2854 = vunpack.c.l.b16 %v2809
    %v2855 = vunpack.c.h.b16 %v2809
    %v2856 = vunpack.c.l.b16 %v2810
    %v2857 = vunpack.c.h.b16 %v2810
    %v2858 = vunpack.c.l.b16 %v2811
    %v2859 = vunpack.c.h.b16 %v2811
    %v2860 = vunpack.c.l.b16 %v2812
    %v2861 = vunpack.c.h.b16 %v2812
    %v2862 = vunpack.c.l.b16 %v2813
    %v2863 = vunpack.c.h.b16 %v2813
    %v2864 = vunpack.c.l.b16 %v2814
    %v2865 = vunpack.c.h.b16 %v2814
    %v2866 = vunpack.c.l.b16 %v2815
    %v2867 = vunpack.c.h.b16 %v2815
    %v2868 = vunpack.c.l.b16 %v2816
    %v2869 = vunpack.c.h.b16 %v2816
    %v2870 = vunpack.c.l.b16 %v2817
    %v2871 = vunpack.c.h.b16 %v2817
    %v2872 = vunpack.c.l.b16 %v2818
    %v2873 = vunpack.c.h.b16 %v2818
    %v2874 = vunpack.c.l.b16 %v2819
    %v2875 = vunpack.c.h.b16 %v2819
    %v2876 = vunpack.c.l.b16 %v2820
    %v2877 = vunpack.c.h.b16 %v2820
    %v2878 = vunpack.c.l.b16 %v2821
    %v2879 = vunpack.c.h.b16 %v2821
    %v2880 = vunpack.c.l.b16 %v2822
    %v2881 = vunpack.c.h.b16 %v2822
    %v2882 = vpack.c.b16 %v2852, %v2850
    %v2883 = vpack.c.b16 %v2853, %v2851
    %v2884 = vpack.c.b16 %v2856, %v2854
    %v2885 = vpack.c.b16 %v2857, %v2855
    %v2886 = vpack.c.b16 %v2860, %v2858
    %v2887 = vpack.c.b16 %v2861, %v2859
    %v2888 = vpack.c.b16 %v2864, %v2862
    %v2889 = vpack.c.b16 %v2865, %v2863
    %v2890 = vpack.c.b16 %v2868, %v2866
    %v2891 = vpack.c.b16 %v2869, %v2867
    %v2892 = vpack.c.b16 %v2872, %v2870
    %v2893 = vpack.c.b16 %v2873, %v2871
    %v2894 = vpack.c.b16 %v2876, %v2874
    %v2895 = vpack.c.b16 %v2877, %v2875
    %v2896 = vpack.c.b16 %v2880, %v2878
    %v2897 = vpack.c.b16 %v2881, %v2879
    %2914 = vmatprep.subr.bf16.mxu0 %v2897
    %2915 = vmatpush1.bf16.msra.mxu0 %v2896
    %2916 = vmatprep.subr.bf16.mxu0 %v2895
    %2917 = vmatpush1.bf16.msra.mxu0 %v2894
    %2918 = vmatprep.subr.bf16.mxu0 %v2893
    %2919 = vmatpush1.bf16.msra.mxu0 %v2892
    %2920 = vmatprep.subr.bf16.mxu0 %v2891
    %2921 = vmatpush1.bf16.msra.mxu0 %v2890
    %2922 = vmatprep.subr.bf16.mxu0 %v2889
    %2923 = vmatpush1.bf16.msra.mxu0 %v2888
    %2924 = vmatprep.subr.bf16.mxu0 %v2887
    %2925 = vmatpush1.bf16.msra.mxu0 %v2886
    %2926 = vmatprep.subr.bf16.mxu0 %v2885
    %2927 = vmatpush1.bf16.msra.mxu0 %v2884
    %2928 = vmatprep.subr.bf16.mxu0 %v2883
    %2929 = vmatpush1.bf16.msra.mxu0 %v2882
    %2930 = vmatprep.subr.bf16.mxu0 0
    %2931 = vmatpush2.bf16.msra.mxu0 0
    %2932 = vmatprep.subr.bf16.mxu0 0
    %2933 = vmatpush2.bf16.msra.mxu0 0
    %2934 = vmatprep.subr.bf16.mxu0 0
    %2935 = vmatpush2.bf16.msra.mxu0 0
    %2936 = vmatprep.subr.bf16.mxu0 0
    %2937 = vmatpush2.bf16.msra.mxu0 0
    %2938 = vmatprep.subr.bf16.mxu0 0
    %2939 = vmatpush2.bf16.msra.mxu0 0
    %2940 = vmatprep.subr.bf16.mxu0 0
    %2941 = vmatpush2.bf16.msra.mxu0 0
    %2942 = vmatprep.subr.bf16.mxu0 0
    %2943 = vmatpush2.bf16.msra.mxu0 0
    %2944 = vmatprep.subr.bf16.mxu0 0
    %2945 = vmatpush2.bf16.msra.mxu0 0
    %2946 = vmatprep.mubr.bf16.mxu0 0
    %2947 = vmatmul.mubr.bf16.gmra.mxu0 %v2805
    %v2948 = vpop.f32.mrf.mxu0
    %v2949 = vadd.f32 %v2827, %v2948
    %v2950 = vpop.f32.mrf.mxu0
    %v2951 = vadd.f32 %v2831, %v2950
    %v2952 = vpop.f32.mrf.mxu0
    %v2953 = vadd.f32 %v2827, %v2952
    %v2954 = vpop.f32.mrf.mxu0
    %v2955 = vadd.f32 %v2831, %v2954
    %2956 = vdwg.mxu0
    %v2957 = vmax.f32 %v2949, 0.0
    %v2958 = vmax.f32 %v2951, 0.0
    %v2959 = vmax.f32 %v2953, 0.0
    %v2960 = vmax.f32 %v2955, 0.0
    %v2961 = vpack.c.bf16 %v2959, %v2957
    %v2962 = vpack.c.bf16 %v2960, %v2958
    %s2963 = scalar_lea.vmem [#allocation10], 128
    %v2964 = vld [vmem:[%s2963] sm:$0xf]
    %v2965 = vld [vmem:[%s2963 + $0x4] sm:$0xf]
    %v2966 = vld [vmem:[%s2963 + $0x8] sm:$0xf]
    %v2967 = vld [vmem:[%s2963 + $0xc] sm:$0xf]
    %v2968 = vld [vmem:[%s2963 + $0x10] sm:$0xf]
    %v2969 = vld [vmem:[%s2963 + $0x14] sm:$0xf]
    %v2970 = vld [vmem:[%s2963 + $0x18] sm:$0xf]
    %v2971 = vld [vmem:[%s2963 + $0x1c] sm:$0xf]
    %v2972 = vld [vmem:[%s2963 + $0x20] sm:$0xf]
    %v2973 = vld [vmem:[%s2963 + $0x24] sm:$0xf]
    %v2974 = vld [vmem:[%s2963 + $0x28] sm:$0xf]
    %v2975 = vld [vmem:[%s2963 + $0x2c] sm:$0xf]
    %v2976 = vld [vmem:[%s2963 + $0x30] sm:$0xf]
    %v2977 = vld [vmem:[%s2963 + $0x34] sm:$0xf]
    %v2978 = vld [vmem:[%s2963 + $0x38] sm:$0xf]
    %v2979 = vld [vmem:[%s2963 + $0x3c] sm:$0xf]
    %v2980 = vld [vmem:[%s2963 + $0x40] sm:$0xf]
    %v2981 = vld [vmem:[%s2963 + $0x44] sm:$0xf]
    %v2982 = vld [vmem:[%s2963 + $0x48] sm:$0xf]
    %v2983 = vld [vmem:[%s2963 + $0x4c] sm:$0xf]
    %v2984 = vld [vmem:[%s2963 + $0x50] sm:$0xf]
    %v2985 = vld [vmem:[%s2963 + $0x54] sm:$0xf]
    %v2986 = vld [vmem:[%s2963 + $0x58] sm:$0xf]
    %v2987 = vld [vmem:[%s2963 + $0x5c] sm:$0xf]
    %v2988 = vld [vmem:[%s2963 + $0x60] sm:$0xf]
    %v2989 = vld [vmem:[%s2963 + $0x64] sm:$0xf]
    %v2990 = vld [vmem:[%s2963 + $0x68] sm:$0xf]
    %v2991 = vld [vmem:[%s2963 + $0x6c] sm:$0xf]
    %v2992 = vld [vmem:[%s2963 + $0x70] sm:$0xf]
    %v2993 = vld [vmem:[%s2963 + $0x74] sm:$0xf]
    %v2994 = vld [vmem:[%s2963 + $0x78] sm:$0xf]
    %v2995 = vld [vmem:[%s2963 + $0x7c] sm:$0xf]
    %v3028 = vunpack.c.l.b16 %v2964
    %v3029 = vunpack.c.l.b16 %v2965
    %v3030 = vunpack.c.l.b16 %v2966
    %v3031 = vunpack.c.l.b16 %v2967
    %v3032 = vunpack.c.l.b16 %v2968
    %v3033 = vunpack.c.l.b16 %v2969
    %v3034 = vunpack.c.l.b16 %v2970
    %v3035 = vunpack.c.l.b16 %v2971
    %v3036 = vunpack.c.l.b16 %v2972
    %v3037 = vunpack.c.l.b16 %v2973
    %v3038 = vunpack.c.l.b16 %v2974
    %v3039 = vunpack.c.l.b16 %v2975
    %v3040 = vunpack.c.l.b16 %v2976
    %v3041 = vunpack.c.l.b16 %v2977
    %v3042 = vunpack.c.l.b16 %v2978
    %v3043 = vunpack.c.l.b16 %v2979
    %v3044 = vunpack.c.l.b16 %v2980
    %v3045 = vunpack.c.l.b16 %v2981
    %v3046 = vunpack.c.l.b16 %v2982
    %v3047 = vunpack.c.l.b16 %v2983
    %v3048 = vunpack.c.l.b16 %v2984
    %v3049 = vunpack.c.l.b16 %v2985
    %v3050 = vunpack.c.l.b16 %v2986
    %v3051 = vunpack.c.l.b16 %v2987
    %v3052 = vunpack.c.l.b16 %v2988
    %v3053 = vunpack.c.l.b16 %v2989
    %v3054 = vunpack.c.l.b16 %v2990
    %v3055 = vunpack.c.l.b16 %v2991
    %v3056 = vunpack.c.l.b16 %v2992
    %v3057 = vunpack.c.l.b16 %v2993
    %v3058 = vunpack.c.l.b16 %v2994
    %v3059 = vunpack.c.l.b16 %v2995
    %v3060 = vpack.c.b16 %v3029, %v3028
    %v3061 = vpack.c.b16 %v3031, %v3030
    %v3062 = vpack.c.b16 %v3033, %v3032
    %v3063 = vpack.c.b16 %v3035, %v3034
    %v3064 = vpack.c.b16 %v3037, %v3036
    %v3065 = vpack.c.b16 %v3039, %v3038
    %v3066 = vpack.c.b16 %v3041, %v3040
    %v3067 = vpack.c.b16 %v3043, %v3042
    %v3068 = vpack.c.b16 %v3045, %v3044
    %v3069 = vpack.c.b16 %v3047, %v3046
    %v3070 = vpack.c.b16 %v3049, %v3048
    %v3071 = vpack.c.b16 %v3051, %v3050
    %v3072 = vpack.c.b16 %v3053, %v3052
    %v3073 = vpack.c.b16 %v3055, %v3054
    %v3074 = vpack.c.b16 %v3057, %v3056
    %v3075 = vpack.c.b16 %v3059, %v3058
    %3092 = vmatprep.subr.bf16.mxu0 0
    %3093 = vmatpush1.bf16.msra.mxu0 %v3067
    %3094 = vmatprep.subr.bf16.mxu0 0
    %3095 = vmatpush1.bf16.msra.mxu0 %v3066
    %3096 = vmatprep.subr.bf16.mxu0 0
    %3097 = vmatpush1.bf16.msra.mxu0 %v3065
    %3098 = vmatprep.subr.bf16.mxu0 0
    %3099 = vmatpush1.bf16.msra.mxu0 %v3064
    %3100 = vmatprep.subr.bf16.mxu0 0
    %3101 = vmatpush1.bf16.msra.mxu0 %v3063
    %3102 = vmatprep.subr.bf16.mxu0 0
    %3103 = vmatpush1.bf16.msra.mxu0 %v3062
    %3104 = vmatprep.subr.bf16.mxu0 0
    %3105 = vmatpush1.bf16.msra.mxu0 %v3061
    %3106 = vmatprep.subr.bf16.mxu0 0
    %3107 = vmatpush1.bf16.msra.mxu0 %v3060
    %3108 = vmatprep.subr.bf16.mxu0 0
    %3109 = vmatpush2.bf16.msra.mxu0 %v3075
    %3110 = vmatprep.subr.bf16.mxu0 0
    %3111 = vmatpush2.bf16.msra.mxu0 %v3074
    %3112 = vmatprep.subr.bf16.mxu0 0
    %3113 = vmatpush2.bf16.msra.mxu0 %v3073
    %3114 = vmatprep.subr.bf16.mxu0 0
    %3115 = vmatpush2.bf16.msra.mxu0 %v3072
    %3116 = vmatprep.subr.bf16.mxu0 0
    %3117 = vmatpush2.bf16.msra.mxu0 %v3071
    %3118 = vmatprep.subr.bf16.mxu0 0
    %3119 = vmatpush2.bf16.msra.mxu0 %v3070
    %3120 = vmatprep.subr.bf16.mxu0 0
    %3121 = vmatpush2.bf16.msra.mxu0 %v3069
    %3122 = vmatprep.subr.bf16.mxu0 0
    %3123 = vmatpush2.bf16.msra.mxu0 %v3068
    %3124 = vmatprep.mubr.bf16.mxu0 %v2962
    %3125 = vmatmul.mubr.bf16.gmra.mxu0 %v2961
    %v3126 = vpop.f32.mrf.mxu0
    %v3127 = vadd.f32 0.0, %v3126
    %v3128 = vpop.f32.mrf.mxu0
    %v3129 = vpop.f32.mrf.mxu0
    %v3130 = vadd.f32 0.0, %v3129
    %v3131 = vpop.f32.mrf.mxu0
    %3132 = vdwg.mxu0
    %v3133 = vadd.f32 %v2803, %v3127
    %v3134 = vadd.f32 %v2804, %v3130
    %v3135 = vlaneseq
    %v3136 = vshrl.u32 %v3135, 7
    %v3137 = vsub.s32 3, %v3136
    %v3138 = vrot.slane %v1679, %v3137
    %v3139 = vadd.f32 %v3133, %v3138
    %v3140 = vadd.f32 %v3134, %v3138
    %3141 = vadd.xlane.f32.xlu0 %v3139
    %v3142 = vpop.xlane.xlu0 %3141
    %3143 = vadd.xlane.f32.xlu0 %v3140
    %v3144 = vpop.xlane.xlu0 %3143
    %v3145 = vmul.f32 %v3142, %v1275
    %v3146 = vmul.f32 %v3144, %v1275
    %v3147 = vsub.f32 %v3139, %v3145
    %v3148 = vsub.f32 %v3140, %v3146
    %v3149 = vmul.f32 %v3147, %v3147
    %v3150 = vmul.f32 %v3148, %v3148
    %3151 = vadd.xlane.f32.xlu0 %v3149
    %v3152 = vpop.xlane.xlu0 %3151
    %3153 = vadd.xlane.f32.xlu0 %v3150
    %v3154 = vpop.xlane.xlu0 %3153
    %v3155 = vmul.f32 %v3152, %v1275
    %v3156 = vmul.f32 %v3154, %v1275
    %v3157 = vadd.f32 %v3155, 1e-05
    %v3158 = vadd.f32 %v3156, 1e-05
    %v3159 = vrsqrt.pop %v3157
    %v3160 = vrsqrt.pop %v3158
    %v3161 = vmul.f32 %v3147, %v3159
    %v3162 = vmul.f32 %v3148, %v3160
    %v3163 = vlaneseq
    %v3164 = vshrl.u32 %v3163, 7
    %v3165 = vsub.s32 4, %v3164
    %v3166 = vrot.slane %v1679, %v3165
    %v3167 = vmul.f32 %v3161, %v3166
    %v3168 = vmul.f32 %v3162, %v3166
    %v3169 = vlaneseq
    %v3170 = vshrl.u32 %v3169, 7
    %v3171 = vsub.s32 5, %v3170
    %v3172 = vrot.slane %v1679, %v3171
    %v3173 = vadd.f32 %v3167, %v3172
    %v3174 = vadd.f32 %v3168, %v3172
    %3175 = vst [vmem:[#allocation11] sm:$0xff] %v3173
    %3176 = vst [vmem:[#allocation11 + $0x8] sm:$0xff] %v3174
    // Predicated region
    $region62: #{tpu_custom_call.1} parent=1 // pred_check
      _
    $region63: #{tpu_custom_call.1} parent=1 // pred_check_branch
      %3178 = sbr.rel (0) target = $region65
    $region64: #{tpu_custom_call.1} parent=1 // pred_region
      %s3180 = ssub.s32 256, 256
      %3181 = vsyncadd [#allocation4], %s3180
      %s3182 = sshll.u32 [#allocation11], 4
      %s3183 = int_to_ptr.vmem [resolvable:$true] %s3182
      %3188 = dma.vmem_to_hbm [thread:$0]  %s3183, 256, %s10, [#allocation4], 128, 128, 8
    $region65: #{tpu_custom_call.1} parent=1 // pred_fallthru
      _
    // Predicated region
    $region66: #{tpu_custom_call.1} parent=1 // pred_check
      _
    $region67: #{tpu_custom_call.1} parent=1 // pred_check_branch
      %3190 = sbr.rel (0) target = $region69
    $region68: #{tpu_custom_call.1} parent=1 // pred_region
      %3191 = dma.done [#allocation4], 256
    $region69: #{tpu_custom_call.1} parent=1 // pred_fallthru
      _
    %3192 = vsyncpa [#allocation3], 1
    %3193 = vsyncpa [#allocation6], 1
    %3194 = vsyncpa [#allocation9], 1
    %3195 = vsyncpa [#allocation4], 1

</llo_original>
